<compile_context>
chip_gen: v7x
topology: tpu7x:2x2x1
jax: 0.10.0
libtpu: 0.0.40
codegen_flags: <defaults>
</compile_context>

<pallas_src>
import math

import jax
import jax.numpy as jnp
import numpy as np
from jax.experimental import pallas as pl
from jax.experimental.pallas import tpu as pltpu

# ----- model dims (small, consistent with the module's forward) -------------
B = 2          # batch
S = 16         # seq_length
H = 128        # hidden_size (emb_size == hidden_size in UER BertEncoder)
NH = 4         # heads_num
DH = H // NH   # per-head dim
FF = 4 * H     # feedforward_size
LAYERS = 2     # layers_num
EPS = 1e-6     # UER LayerNorm eps
S_PAD = max(128, ((S + 127) // 128) * 128)   # lane-dense key-bias padding


# --------------------------- in-kernel helpers -------------------------------
def _layer_norm(x, gamma, beta):
    # UER LayerNorm: gamma * (x - mean) / (std + eps) + beta,
    # std is torch.std (unbiased, divides by H-1).  Exact division (f32) so
    # no approximation error accumulates across layers.
    mean = jnp.mean(x, axis=-1, keepdims=True)
    d = x - mean
    var = jnp.sum(d * d, axis=-1, keepdims=True) * (1.0 / (H - 1))
    return gamma * d / (jnp.sqrt(var) + EPS) + beta


def _gelu_exact(x):
    # UER / torch.nn.GELU default: exact erf-based GELU.  Kept in f32 so the
    # same kernel is correct on v5e (no bf16 VPU/EUP); on v6e/v7x a bf16 erf
    # would be a further (optional) saving.
    return 0.5 * x * (1.0 + jax.lax.erf(x * (1.0 / math.sqrt(2.0))))


# ------------------------------ Pallas kernel --------------------------------
def bert_layers_kernel(emb_ref, bias_ref,
                       wqkv_ref, bqkv_ref, wo_ref, bo_ref,
                       g1_ref, be1_ref, w1_ref, b1_ref, w2_ref, b2_ref,
                       g2_ref, be2_ref,
                       o_ref):
    layer = pl.program_id(0)

    # Layer 0: seed the activation carry.  o_ref has a constant block index
    # over the layer grid, so it stays resident in VMEM across all layers.
    @pl.when(layer == 0)
    def _():
        o_ref[...] = emb_ref[...]

    x = o_ref[...]                                   # (B*S, H) f32 carry
    xb = x.astype(jnp.bfloat16)

    # ---- fused QKV projection: one bf16 MXU matmul, f32 accumulation -------
    qkv = (jnp.dot(xb, wqkv_ref[0], preferred_element_type=jnp.float32)
           + bqkv_ref[0])                            # (B*S, 3H) f32

    # 128-lane-aligned slices (offsets 0 / H / 2H) -> whole-vreg selects;
    # the (B*S, H) -> (B, S, H) reshapes split sublanes at multiples of 8.
    q = qkv[:, :H].reshape(B, S, H)
    k = qkv[:, H:2 * H].reshape(B, S, H)
    v = qkv[:, 2 * H:].reshape(B, S, H)

    # Lane-dense padded additive key bias; only the first S lanes are real.
    bias = bias_ref[...][:, :, :S]                   # (B, 1, S), offset-0 slice
    scale = 1.0 / math.sqrt(DH)

    # Per-head 0/1 lane masks over the 128-lane hidden dim (VPU-only build).
    lane = jax.lax.broadcasted_iota(jnp.int32, (1, 1, H), 2)
    head_masks = [((lane >= h * DH) & (lane < (h + 1) * DH)).astype(jnp.float32)
                  for h in range(NH)]

    # ---- multi-head attention: no sub-128-lane slices, no transposes -------
    ctx = jnp.zeros((B, S, H), jnp.float32)
    for h in range(NH):
        mask_h = head_masks[h]
        # (Q * mask_h) . K over the full feature dim == Q_h . K_h
        scores = (jnp.einsum('bqd,bkd->bqk', q * mask_h, k,
                             preferred_element_type=jnp.float32) * scale
                  + bias)                            # (B, S, S)
        m = jnp.max(scores, axis=-1, keepdims=True)
        e = jnp.exp(scores - m)
        p = e * pl.reciprocal(jnp.sum(e, axis=-1, keepdims=True), approx=True)
        # P_h @ (V * mask_h): lane-dense (S,S)x(S,128); nonzero only in head-h
        # lanes, so summing over heads rebuilds the full context in registers.
        ctx = ctx + jnp.einsum('bqk,bkd->bqd', p, v * mask_h,
                               preferred_element_type=jnp.float32)

    ctx2 = ctx.reshape(B * S, H)                     # free reshape (sublanes)

    # ---- attention output projection + residual + LayerNorm ----------------
    attn = (jnp.dot(ctx2.astype(jnp.bfloat16), wo_ref[0],
                    preferred_element_type=jnp.float32) + bo_ref[0])
    inter = _layer_norm(attn + x, g1_ref[0], be1_ref[0])

    # ---- feed-forward + residual + LayerNorm --------------------------------
    ff = _gelu_exact(jnp.dot(inter.astype(jnp.bfloat16), w1_ref[0],
                             preferred_element_type=jnp.float32) + b1_ref[0])
    ff = (jnp.dot(ff.astype(jnp.bfloat16), w2_ref[0],
                  preferred_element_type=jnp.float32) + b2_ref[0])
    out = _layer_norm(ff + inter, g2_ref[0], be2_ref[0])

    o_ref[...] = out                                 # carry to next layer


# ------------------------------ JAX wrapper ----------------------------------
def bert_encoder_forward(emb, seg, stacked, need_gnn=False):
    """emb: (B, S, H) f32; seg: (B, S) int; stacked: dict of (L, ...) params."""
    b, s, h = emb.shape
    num_layers = stacked['wqkv'].shape[0]

    # Additive key bias from seg: (1 - (seg > 0)) * -10000, broadcast over the
    # query axis in-kernel.  Padded to 128 lanes so the input block is
    # lane-dense (the kernel only reads the first s lanes).
    key_bias = (1.0 - (seg > 0).astype(jnp.float32)) * -10000.0      # (B, S)
    bias = jnp.zeros((b, 1, S_PAD), jnp.float32).at[:, 0, :s].set(key_bias)

    emb2 = emb.reshape(b * s, h)                     # fold batch into M

    # bf16 weights (halve DMA bytes, MXU-native); biases / LN params stay f32.
    weights = [stacked['wqkv'].astype(jnp.bfloat16), stacked['bqkv'],
               stacked['wo'].astype(jnp.bfloat16), stacked['bo'],
               stacked['g1'], stacked['be1'],
               stacked['w1'].astype(jnp.bfloat16), stacked['b1'],
               stacked['w2'].astype(jnp.bfloat16), stacked['b2'],
               stacked['g2'], stacked['be2']]

    in_specs = [pl.BlockSpec((b * s, h), lambda l: (0, 0)),           # emb seed
                pl.BlockSpec((b, 1, S_PAD), lambda l: (0, 0, 0))]     # key bias
    for w in weights:
        # One layer's slice per grid step: streamed + double-buffered by the
        # BlockSpec pipeline.  (For real BERT sizes on v7x's 64 MiB VMEM the
        # FFN weights would be tiled along FF and vmem_limit_bytes set.)
        in_specs.append(pl.BlockSpec((1,) + w.shape[1:], lambda l: (l, 0, 0)))

    out = pl.pallas_call(
        bert_layers_kernel,
        out_shape=jax.ShapeDtypeStruct((b * s, h), jnp.float32),
        grid_spec=pltpu.PrefetchScalarGridSpec(
            num_scalar_prefetch=0,
            grid=(num_layers,),
            in_specs=in_specs,
            out_specs=pl.BlockSpec((b * s, h), lambda l: (0, 0)),
        ),
        # Layer axis carries the activation -> must be sequential.
        # (With large batches one would add a leading "parallel" row-block axis
        #  to use v7x's second TensorCore; at B*S=32 it would be overhead.)
        compiler_params=pltpu.CompilerParams(dimension_semantics=("arbitrary",)),
    )(emb2, bias, *weights)

    # TODO(synk): need_gnn=True branch (GATLayer message passing over
    # dynamically-built concept/entity edge lists with data-dependent shapes)
    # is host-side Python list/tensor surgery with no static Pallas equivalent;
    # eval-mode dropout is identity and is omitted.
    return out.reshape(b, s, h)


# --------------------------- parameter construction --------------------------
def init_layer_params(key):
    ks = jax.random.split(key, 8)

    def lin(k, fi, fo):
        return jax.random.normal(k, (fi, fo), jnp.float32) * 0.02

    def bias(k, fo):
        return jax.random.normal(k, (1, fo), jnp.float32) * 0.02

    return dict(
        wqkv=lin(ks[0], H, 3 * H), bqkv=bias(ks[1], 3 * H),
        wo=lin(ks[2], H, H),       bo=bias(ks[3], H),
        g1=jnp.ones((1, H), jnp.float32),  be1=jnp.zeros((1, H), jnp.float32),
        w1=lin(ks[4], H, FF),      b1=bias(ks[5], FF),
        w2=lin(ks[6], FF, H),      b2=bias(ks[7], H),
        g2=jnp.ones((1, H), jnp.float32),  be2=jnp.zeros((1, H), jnp.float32),
    )


def stack_params(layer_params):
    return {k: jnp.stack([p[k] for p in layer_params], axis=0)
            for k in layer_params[0]}


# --------------------------- pure-JAX reference -------------------------------
def build_mask(seg, seq_length):
    m = (seg > 0).astype(jnp.float32)[:, None, :]
    m = jnp.broadcast_to(m, (seg.shape[0], seq_length, seq_length))
    return (1.0 - m) * -10000.0


def ref_layer(x, mask, p):
    qkv = x @ p['wqkv'] + p['bqkv'][0]
    q, k, v = qkv[..., :H], qkv[..., H:2 * H], qkv[..., 2 * H:]

    def split(t):
        return t.reshape(B, S, NH, DH).transpose(0, 2, 1, 3)  # (B, NH, S, DH)

    qh, kh, vh = split(q), split(k), split(v)
    scores = jnp.einsum('bhqd,bhkd->bhqk', qh, kh) / math.sqrt(DH)
    scores = scores + mask[:, None, :, :]
    probs = jax.nn.softmax(scores, axis=-1)
    ctx = jnp.einsum('bhqk,bhkd->bhqd', probs, vh)
    ctx = ctx.transpose(0, 2, 1, 3).reshape(B, S, H)
    attn = ctx @ p['wo'] + p['bo'][0]

    def ln(t, g, be):
        mean = jnp.mean(t, axis=-1, keepdims=True)
        var = jnp.sum((t - mean) ** 2, axis=-1, keepdims=True) / (H - 1)
        return g[0] * (t - mean) / (jnp.sqrt(var) + EPS) + be[0]

    inter = ln(attn + x, p['g1'], p['be1'])
    ff = _gelu_exact(inter @ p['w1'] + p['b1'][0]) @ p['w2'] + p['b2'][0]
    return ln(ff + inter, p['g2'], p['be2'])


def ref_forward(emb, seg, layer_params):
    mask = build_mask(seg, emb.shape[1])
    hidden = emb
    for p in layer_params:
        hidden = ref_layer(hidden, mask, p)
    return hidden


# ----------------------------------- main -------------------------------------
if __name__ == "__main__":
    root = jax.random.PRNGKey(0)
    k_emb, k_params = jax.random.split(root)

    emb = jax.random.normal(k_emb, (B, S, H), jnp.float32)
    # seg: segment ids; zeros mark padding -> masked out by the attention bias.
    seg = jnp.concatenate(
        [jnp.ones((B, S - 4), jnp.int32), jnp.zeros((B, 4), jnp.int32)], axis=1)

    layer_params = [init_layer_params(k)
                    for k in jax.random.split(k_params, LAYERS)]
    stacked = stack_params(layer_params)

    hidden = bert_encoder_forward(emb, seg, stacked, need_gnn=False)
    hidden = jax.block_until_ready(hidden)

    ref = jax.block_until_ready(ref_forward(emb, seg, layer_params))
    np.testing.assert_allclose(np.asarray(hidden), np.asarray(ref),
                               rtol=2e-2, atol=2e-2)

    assert hidden.shape == (B, S, H)
    print("KERNEL_OK")
</pallas_src>

<mosaic_0001>
module attributes {stable_mosaic.version = 11 : i64} {
  func.func @bert_layers_kernel(%arg0: i32, %arg1: memref<32x128xf32, #tpu.memory_space<vmem>>, %arg2: memref<2x1x128xf32, #tpu.memory_space<vmem>>, %arg3: memref<1x128x384xbf16, #tpu.memory_space<vmem>>, %arg4: memref<1x1x384xf32, #tpu.memory_space<vmem>>, %arg5: memref<1x128x128xbf16, #tpu.memory_space<vmem>>, %arg6: memref<1x1x128xf32, #tpu.memory_space<vmem>>, %arg7: memref<1x1x128xf32, #tpu.memory_space<vmem>>, %arg8: memref<1x1x128xf32, #tpu.memory_space<vmem>>, %arg9: memref<1x128x512xbf16, #tpu.memory_space<vmem>>, %arg10: memref<1x1x512xf32, #tpu.memory_space<vmem>>, %arg11: memref<1x512x128xbf16, #tpu.memory_space<vmem>>, %arg12: memref<1x1x128xf32, #tpu.memory_space<vmem>>, %arg13: memref<1x1x128xf32, #tpu.memory_space<vmem>>, %arg14: memref<1x1x128xf32, #tpu.memory_space<vmem>>, %arg15: memref<32x128xf32, #tpu.memory_space<vmem>>) attributes {dimension_semantics = [#tpu.dimension_semantics<arbitrary>], iteration_bounds = array<i64: 2>, scalar_prefetch = 0 : i64, scratch_operands = 0 : i64, tpu.core_type = #tpu.core_type<tc>, window_params = [{pipeline_mode = #tpu.pipeline_mode<synchronous>, transform_indices = @transform_0, window_bounds = array<i64: 32, 128>}, {pipeline_mode = #tpu.pipeline_mode<synchronous>, transform_indices = @transform_1, window_bounds = array<i64: 2, 1, 128>}, {transform_indices = @transform_2, window_bounds = array<i64: 1, 128, 384>}, {transform_indices = @transform_3, window_bounds = array<i64: 1, 1, 384>}, {transform_indices = @transform_4, window_bounds = array<i64: 1, 128, 128>}, {transform_indices = @transform_5, window_bounds = array<i64: 1, 1, 128>}, {transform_indices = @transform_6, window_bounds = array<i64: 1, 1, 128>}, {transform_indices = @transform_7, window_bounds = array<i64: 1, 1, 128>}, {transform_indices = @transform_8, window_bounds = array<i64: 1, 128, 512>}, {transform_indices = @transform_9, window_bounds = array<i64: 1, 1, 512>}, {transform_indices = @transform_10, window_bounds = array<i64: 1, 512, 128>}, {transform_indices = @transform_11, window_bounds = array<i64: 1, 1, 128>}, {transform_indices = @transform_12, window_bounds = array<i64: 1, 1, 128>}, {transform_indices = @transform_13, window_bounds = array<i64: 1, 1, 128>}, {pipeline_mode = #tpu.pipeline_mode<synchronous>, transform_indices = @transform_14, window_bounds = array<i64: 32, 128>}]} {
    %c0_i32 = arith.constant 0 : i32
    %0 = arith.cmpi eq, %arg0, %c0_i32 : i32
    %1 = arith.extui %0 : i1 to i32
    %c0_i32_0 = arith.constant 0 : i32
    %2 = arith.cmpi ne, %1, %c0_i32_0 : i32
    scf.if %2 {
      %c0_84 = arith.constant 0 : index
      %c0_85 = arith.constant 0 : index
      %218 = vector.load %arg1[%c0_84, %c0_85] : memref<32x128xf32, #tpu.memory_space<vmem>>, vector<32x128xf32>
      %c0_86 = arith.constant 0 : index
      %c0_87 = arith.constant 0 : index
      %219 = vector.load %arg15[%c0_86, %c0_87] : memref<32x128xf32, #tpu.memory_space<vmem>>, vector<32x128xf32>
      tpu.vector_store %arg15[%c0_86, %c0_87], %218 {strides = array<i32>} : memref<32x128xf32, #tpu.memory_space<vmem>>, vector<32x128xf32>,
    } else {
    }
    %c0 = arith.constant 0 : index
    %c0_1 = arith.constant 0 : index
    %3 = vector.load %arg15[%c0, %c0_1] : memref<32x128xf32, #tpu.memory_space<vmem>>, vector<32x128xf32>
    %4 = arith.truncf %3 : vector<32x128xf32> to vector<32x128xbf16>
    %c0_2 = arith.constant 0 : index
    %c0_3 = arith.constant 0 : index
    %c0_4 = arith.constant 0 : index
    %5 = vector.load %arg3[%c0_2, %c0_3, %c0_4] : memref<1x128x384xbf16, #tpu.memory_space<vmem>>, vector<1x128x384xbf16>
    %6 = vector.shape_cast %5 : vector<1x128x384xbf16> to vector<128x384xbf16>
    %cst = arith.constant dense<0.000000e+00> : vector<32x384xf32>
    %7 = tpu.matmul %4, %6, %cst {dimension_numbers = #tpu.dot_dimension_numbers<[1], [0], [0], [1], [0, 0, 1, 1], [], []>} : vector<32x128xbf16>, vector<128x384xbf16>, vector<32x384xf32> -> vector<32x384xf32>
    %c0_5 = arith.constant 0 : index
    %c0_6 = arith.constant 0 : index
    %c0_7 = arith.constant 0 : index
    %8 = vector.load %arg4[%c0_5, %c0_6, %c0_7] : memref<1x1x384xf32, #tpu.memory_space<vmem>>, vector<1x1x384xf32>
    %9 = vector.shape_cast %8 : vector<1x1x384xf32> to vector<1x384xf32>
    %10 = vector.broadcast %9 : vector<1x384xf32> to vector<32x384xf32>
    %11 = arith.addf %7, %10 : vector<32x384xf32>
    %12 = vector.extract_strided_slice %11 {offsets = [0, 0], sizes = [32, 128], strides = [1, 1]} : vector<32x384xf32> to vector<32x128xf32>
    %13 = vector.shape_cast %12 : vector<32x128xf32> to vector<2x16x128xf32>
    %14 = vector.extract_strided_slice %11 {offsets = [0, 128], sizes = [32, 128], strides = [1, 1]} : vector<32x384xf32> to vector<32x128xf32>
    %15 = vector.shape_cast %14 : vector<32x128xf32> to vector<2x16x128xf32>
    %16 = vector.extract_strided_slice %11 {offsets = [0, 256], sizes = [32, 128], strides = [1, 1]} : vector<32x384xf32> to vector<32x128xf32>
    %17 = vector.shape_cast %16 : vector<32x128xf32> to vector<2x16x128xf32>
    %c0_8 = arith.constant 0 : index
    %c0_9 = arith.constant 0 : index
    %c0_10 = arith.constant 0 : index
    %18 = vector.load %arg2[%c0_8, %c0_9, %c0_10] : memref<2x1x128xf32, #tpu.memory_space<vmem>>, vector<2x1x128xf32>
    %19 = vector.extract_strided_slice %18 {offsets = [0, 0, 0], sizes = [2, 1, 16], strides = [1, 1, 1]} : vector<2x1x128xf32> to vector<2x1x16xf32>
    %20 = tpu.iota {dimensions = array<i32: 2>} : vector<1x1x128xi32>
    %c0_i32_11 = arith.constant 0 : i32
    %21 = vector.broadcast %c0_i32_11 : i32 to vector<1x1x128xi32>
    %22 = arith.cmpi sge, %20, %21 : vector<1x1x128xi32>
    %c32_i32 = arith.constant 32 : i32
    %23 = vector.broadcast %c32_i32 : i32 to vector<1x1x128xi32>
    %24 = arith.cmpi slt, %20, %23 : vector<1x1x128xi32>
    %25 = arith.andi %22, %24 : vector<1x1x128xi1>
    %26 = arith.extui %25 : vector<1x1x128xi1> to vector<1x1x128xi32>
    %27 = arith.sitofp %26 : vector<1x1x128xi32> to vector<1x1x128xf32>
    %c32_i32_12 = arith.constant 32 : i32
    %28 = vector.broadcast %c32_i32_12 : i32 to vector<1x1x128xi32>
    %29 = arith.cmpi sge, %20, %28 : vector<1x1x128xi32>
    %c64_i32 = arith.constant 64 : i32
    %30 = vector.broadcast %c64_i32 : i32 to vector<1x1x128xi32>
    %31 = arith.cmpi slt, %20, %30 : vector<1x1x128xi32>
    %32 = arith.andi %29, %31 : vector<1x1x128xi1>
    %33 = arith.extui %32 : vector<1x1x128xi1> to vector<1x1x128xi32>
    %34 = arith.sitofp %33 : vector<1x1x128xi32> to vector<1x1x128xf32>
    %c64_i32_13 = arith.constant 64 : i32
    %35 = vector.broadcast %c64_i32_13 : i32 to vector<1x1x128xi32>
    %36 = arith.cmpi sge, %20, %35 : vector<1x1x128xi32>
    %c96_i32 = arith.constant 96 : i32
    %37 = vector.broadcast %c96_i32 : i32 to vector<1x1x128xi32>
    %38 = arith.cmpi slt, %20, %37 : vector<1x1x128xi32>
    %39 = arith.andi %36, %38 : vector<1x1x128xi1>
    %40 = arith.extui %39 : vector<1x1x128xi1> to vector<1x1x128xi32>
    %41 = arith.sitofp %40 : vector<1x1x128xi32> to vector<1x1x128xf32>
    %c96_i32_14 = arith.constant 96 : i32
    %42 = vector.broadcast %c96_i32_14 : i32 to vector<1x1x128xi32>
    %43 = arith.cmpi sge, %20, %42 : vector<1x1x128xi32>
    %c128_i32 = arith.constant 128 : i32
    %44 = vector.broadcast %c128_i32 : i32 to vector<1x1x128xi32>
    %45 = arith.cmpi slt, %20, %44 : vector<1x1x128xi32>
    %46 = arith.andi %43, %45 : vector<1x1x128xi1>
    %47 = arith.extui %46 : vector<1x1x128xi1> to vector<1x1x128xi32>
    %48 = arith.sitofp %47 : vector<1x1x128xi32> to vector<1x1x128xf32>
    %cst_15 = arith.constant 0.000000e+00 : f32
    %49 = vector.broadcast %cst_15 : f32 to vector<2x16x128xf32>
    %50 = vector.broadcast %27 : vector<1x1x128xf32> to vector<2x16x128xf32>
    %51 = arith.mulf %13, %50 : vector<2x16x128xf32>
    "tpu.trace_start"() <{level = 10 : i32, message = "bqd,bkd->bqk"}> : () -> ()
    %cst_16 = arith.constant dense<0.000000e+00> : vector<2x16x16xf32>
    %52 = tpu.matmul %51, %15, %cst_16 {dimension_numbers = #tpu.dot_dimension_numbers<[2], [2], [1], [1], [0, 0, 0, 1, 1, 1], [0], [0]>} : vector<2x16x128xf32>, vector<2x16x128xf32>, vector<2x16x16xf32> -> vector<2x16x16xf32>
    "tpu.trace_stop"() : () -> ()
    %cst_17 = arith.constant 0.176776692 : f32
    %53 = vector.broadcast %cst_17 : f32 to vector<2x16x16xf32>
    %54 = arith.mulf %52, %53 : vector<2x16x16xf32>
    %55 = vector.broadcast %19 : vector<2x1x16xf32> to vector<2x16x16xf32>
    %56 = arith.addf %54, %55 : vector<2x16x16xf32>
    %cst_18 = arith.constant dense<0xFF800000> : vector<2x16xf32>
    %57 = vector.multi_reduction <maximumf>, %56, %cst_18 [2] : vector<2x16x16xf32> to vector<2x16xf32>
    %58 = vector.shape_cast %57 : vector<2x16xf32> to vector<2x16x1xf32>
    %59 = vector.broadcast %58 : vector<2x16x1xf32> to vector<2x16x16xf32>
    %60 = arith.subf %56, %59 : vector<2x16x16xf32>
    %61 = math.exp %60 : vector<2x16x16xf32>
    %cst_19 = arith.constant dense<0.000000e+00> : vector<2x16xf32>
    %62 = vector.multi_reduction <add>, %61, %cst_19 [2] : vector<2x16x16xf32> to vector<2x16xf32>
    %63 = vector.shape_cast %62 : vector<2x16xf32> to vector<2x16x1xf32>
    %64 = tpu.reciprocal %63 {approx = true} : vector<2x16x1xf32> -> vector<2x16x1xf32>
    %65 = vector.broadcast %64 : vector<2x16x1xf32> to vector<2x16x16xf32>
    %66 = arith.mulf %61, %65 : vector<2x16x16xf32>
    %67 = vector.broadcast %27 : vector<1x1x128xf32> to vector<2x16x128xf32>
    %68 = arith.mulf %17, %67 : vector<2x16x128xf32>
    "tpu.trace_start"() <{level = 10 : i32, message = "bqk,bkd->bqd"}> : () -> ()
    %cst_20 = arith.constant dense<0.000000e+00> : vector<2x16x128xf32>
    %69 = tpu.matmul %66, %68, %cst_20 {dimension_numbers = #tpu.dot_dimension_numbers<[2], [1], [1], [2], [0, 0, 0, 1, 1, 2], [0], [0]>} : vector<2x16x16xf32>, vector<2x16x128xf32>, vector<2x16x128xf32> -> vector<2x16x128xf32>
    "tpu.trace_stop"() : () -> ()
    %70 = arith.addf %49, %69 : vector<2x16x128xf32>
    %71 = vector.broadcast %34 : vector<1x1x128xf32> to vector<2x16x128xf32>
    %72 = arith.mulf %13, %71 : vector<2x16x128xf32>
    "tpu.trace_start"() <{level = 10 : i32, message = "bqd,bkd->bqk"}> : () -> ()
    %cst_21 = arith.constant dense<0.000000e+00> : vector<2x16x16xf32>
    %73 = tpu.matmul %72, %15, %cst_21 {dimension_numbers = #tpu.dot_dimension_numbers<[2], [2], [1], [1], [0, 0, 0, 1, 1, 1], [0], [0]>} : vector<2x16x128xf32>, vector<2x16x128xf32>, vector<2x16x16xf32> -> vector<2x16x16xf32>
    "tpu.trace_stop"() : () -> ()
    %cst_22 = arith.constant 0.176776692 : f32
    %74 = vector.broadcast %cst_22 : f32 to vector<2x16x16xf32>
    %75 = arith.mulf %73, %74 : vector<2x16x16xf32>
    %76 = vector.broadcast %19 : vector<2x1x16xf32> to vector<2x16x16xf32>
    %77 = arith.addf %75, %76 : vector<2x16x16xf32>
    %cst_23 = arith.constant dense<0xFF800000> : vector<2x16xf32>
    %78 = vector.multi_reduction <maximumf>, %77, %cst_23 [2] : vector<2x16x16xf32> to vector<2x16xf32>
    %79 = vector.shape_cast %78 : vector<2x16xf32> to vector<2x16x1xf32>
    %80 = vector.broadcast %79 : vector<2x16x1xf32> to vector<2x16x16xf32>
    %81 = arith.subf %77, %80 : vector<2x16x16xf32>
    %82 = math.exp %81 : vector<2x16x16xf32>
    %cst_24 = arith.constant dense<0.000000e+00> : vector<2x16xf32>
    %83 = vector.multi_reduction <add>, %82, %cst_24 [2] : vector<2x16x16xf32> to vector<2x16xf32>
    %84 = vector.shape_cast %83 : vector<2x16xf32> to vector<2x16x1xf32>
    %85 = tpu.reciprocal %84 {approx = true} : vector<2x16x1xf32> -> vector<2x16x1xf32>
    %86 = vector.broadcast %85 : vector<2x16x1xf32> to vector<2x16x16xf32>
    %87 = arith.mulf %82, %86 : vector<2x16x16xf32>
    %88 = vector.broadcast %34 : vector<1x1x128xf32> to vector<2x16x128xf32>
    %89 = arith.mulf %17, %88 : vector<2x16x128xf32>
    "tpu.trace_start"() <{level = 10 : i32, message = "bqk,bkd->bqd"}> : () -> ()
    %cst_25 = arith.constant dense<0.000000e+00> : vector<2x16x128xf32>
    %90 = tpu.matmul %87, %89, %cst_25 {dimension_numbers = #tpu.dot_dimension_numbers<[2], [1], [1], [2], [0, 0, 0, 1, 1, 2], [0], [0]>} : vector<2x16x16xf32>, vector<2x16x128xf32>, vector<2x16x128xf32> -> vector<2x16x128xf32>
    "tpu.trace_stop"() : () -> ()
    %91 = arith.addf %70, %90 : vector<2x16x128xf32>
    %92 = vector.broadcast %41 : vector<1x1x128xf32> to vector<2x16x128xf32>
    %93 = arith.mulf %13, %92 : vector<2x16x128xf32>
    "tpu.trace_start"() <{level = 10 : i32, message = "bqd,bkd->bqk"}> : () -> ()
    %cst_26 = arith.constant dense<0.000000e+00> : vector<2x16x16xf32>
    %94 = tpu.matmul %93, %15, %cst_26 {dimension_numbers = #tpu.dot_dimension_numbers<[2], [2], [1], [1], [0, 0, 0, 1, 1, 1], [0], [0]>} : vector<2x16x128xf32>, vector<2x16x128xf32>, vector<2x16x16xf32> -> vector<2x16x16xf32>
    "tpu.trace_stop"() : () -> ()
    %cst_27 = arith.constant 0.176776692 : f32
    %95 = vector.broadcast %cst_27 : f32 to vector<2x16x16xf32>
    %96 = arith.mulf %94, %95 : vector<2x16x16xf32>
    %97 = vector.broadcast %19 : vector<2x1x16xf32> to vector<2x16x16xf32>
    %98 = arith.addf %96, %97 : vector<2x16x16xf32>
    %cst_28 = arith.constant dense<0xFF800000> : vector<2x16xf32>
    %99 = vector.multi_reduction <maximumf>, %98, %cst_28 [2] : vector<2x16x16xf32> to vector<2x16xf32>
    %100 = vector.shape_cast %99 : vector<2x16xf32> to vector<2x16x1xf32>
    %101 = vector.broadcast %100 : vector<2x16x1xf32> to vector<2x16x16xf32>
    %102 = arith.subf %98, %101 : vector<2x16x16xf32>
    %103 = math.exp %102 : vector<2x16x16xf32>
    %cst_29 = arith.constant dense<0.000000e+00> : vector<2x16xf32>
    %104 = vector.multi_reduction <add>, %103, %cst_29 [2] : vector<2x16x16xf32> to vector<2x16xf32>
    %105 = vector.shape_cast %104 : vector<2x16xf32> to vector<2x16x1xf32>
    %106 = tpu.reciprocal %105 {approx = true} : vector<2x16x1xf32> -> vector<2x16x1xf32>
    %107 = vector.broadcast %106 : vector<2x16x1xf32> to vector<2x16x16xf32>
    %108 = arith.mulf %103, %107 : vector<2x16x16xf32>
    %109 = vector.broadcast %41 : vector<1x1x128xf32> to vector<2x16x128xf32>
    %110 = arith.mulf %17, %109 : vector<2x16x128xf32>
    "tpu.trace_start"() <{level = 10 : i32, message = "bqk,bkd->bqd"}> : () -> ()
    %cst_30 = arith.constant dense<0.000000e+00> : vector<2x16x128xf32>
    %111 = tpu.matmul %108, %110, %cst_30 {dimension_numbers = #tpu.dot_dimension_numbers<[2], [1], [1], [2], [0, 0, 0, 1, 1, 2], [0], [0]>} : vector<2x16x16xf32>, vector<2x16x128xf32>, vector<2x16x128xf32> -> vector<2x16x128xf32>
    "tpu.trace_stop"() : () -> ()
    %112 = arith.addf %91, %111 : vector<2x16x128xf32>
    %113 = vector.broadcast %48 : vector<1x1x128xf32> to vector<2x16x128xf32>
    %114 = arith.mulf %13, %113 : vector<2x16x128xf32>
    "tpu.trace_start"() <{level = 10 : i32, message = "bqd,bkd->bqk"}> : () -> ()
    %cst_31 = arith.constant dense<0.000000e+00> : vector<2x16x16xf32>
    %115 = tpu.matmul %114, %15, %cst_31 {dimension_numbers = #tpu.dot_dimension_numbers<[2], [2], [1], [1], [0, 0, 0, 1, 1, 1], [0], [0]>} : vector<2x16x128xf32>, vector<2x16x128xf32>, vector<2x16x16xf32> -> vector<2x16x16xf32>
    "tpu.trace_stop"() : () -> ()
    %cst_32 = arith.constant 0.176776692 : f32
    %116 = vector.broadcast %cst_32 : f32 to vector<2x16x16xf32>
    %117 = arith.mulf %115, %116 : vector<2x16x16xf32>
    %118 = vector.broadcast %19 : vector<2x1x16xf32> to vector<2x16x16xf32>
    %119 = arith.addf %117, %118 : vector<2x16x16xf32>
    %cst_33 = arith.constant dense<0xFF800000> : vector<2x16xf32>
    %120 = vector.multi_reduction <maximumf>, %119, %cst_33 [2] : vector<2x16x16xf32> to vector<2x16xf32>
    %121 = vector.shape_cast %120 : vector<2x16xf32> to vector<2x16x1xf32>
    %122 = vector.broadcast %121 : vector<2x16x1xf32> to vector<2x16x16xf32>
    %123 = arith.subf %119, %122 : vector<2x16x16xf32>
    %124 = math.exp %123 : vector<2x16x16xf32>
    %cst_34 = arith.constant dense<0.000000e+00> : vector<2x16xf32>
    %125 = vector.multi_reduction <add>, %124, %cst_34 [2] : vector<2x16x16xf32> to vector<2x16xf32>
    %126 = vector.shape_cast %125 : vector<2x16xf32> to vector<2x16x1xf32>
    %127 = tpu.reciprocal %126 {approx = true} : vector<2x16x1xf32> -> vector<2x16x1xf32>
    %128 = vector.broadcast %127 : vector<2x16x1xf32> to vector<2x16x16xf32>
    %129 = arith.mulf %124, %128 : vector<2x16x16xf32>
    %130 = vector.broadcast %48 : vector<1x1x128xf32> to vector<2x16x128xf32>
    %131 = arith.mulf %17, %130 : vector<2x16x128xf32>
    "tpu.trace_start"() <{level = 10 : i32, message = "bqk,bkd->bqd"}> : () -> ()
    %cst_35 = arith.constant dense<0.000000e+00> : vector<2x16x128xf32>
    %132 = tpu.matmul %129, %131, %cst_35 {dimension_numbers = #tpu.dot_dimension_numbers<[2], [1], [1], [2], [0, 0, 0, 1, 1, 2], [0], [0]>} : vector<2x16x16xf32>, vector<2x16x128xf32>, vector<2x16x128xf32> -> vector<2x16x128xf32>
    "tpu.trace_stop"() : () -> ()
    %133 = arith.addf %112, %132 : vector<2x16x128xf32>
    %134 = vector.shape_cast %133 : vector<2x16x128xf32> to vector<32x128xf32>
    %135 = arith.truncf %134 : vector<32x128xf32> to vector<32x128xbf16>
    %c0_36 = arith.constant 0 : index
    %c0_37 = arith.constant 0 : index
    %c0_38 = arith.constant 0 : index
    %136 = vector.load %arg5[%c0_36, %c0_37, %c0_38] : memref<1x128x128xbf16, #tpu.memory_space<vmem>>, vector<1x128x128xbf16>
    %137 = vector.shape_cast %136 : vector<1x128x128xbf16> to vector<128x128xbf16>
    %cst_39 = arith.constant dense<0.000000e+00> : vector<32x128xf32>
    %138 = tpu.matmul %135, %137, %cst_39 {dimension_numbers = #tpu.dot_dimension_numbers<[1], [0], [0], [1], [0, 0, 1, 1], [], []>} : vector<32x128xbf16>, vector<128x128xbf16>, vector<32x128xf32> -> vector<32x128xf32>
    %c0_40 = arith.constant 0 : index
    %c0_41 = arith.constant 0 : index
    %c0_42 = arith.constant 0 : index
    %139 = vector.load %arg6[%c0_40, %c0_41, %c0_42] : memref<1x1x128xf32, #tpu.memory_space<vmem>>, vector<1x1x128xf32>
    %140 = vector.shape_cast %139 : vector<1x1x128xf32> to vector<1x128xf32>
    %141 = vector.broadcast %140 : vector<1x128xf32> to vector<32x128xf32>
    %142 = arith.addf %138, %141 : vector<32x128xf32>
    %143 = arith.addf %142, %3 : vector<32x128xf32>
    %c0_43 = arith.constant 0 : index
    %c0_44 = arith.constant 0 : index
    %c0_45 = arith.constant 0 : index
    %144 = vector.load %arg7[%c0_43, %c0_44, %c0_45] : memref<1x1x128xf32, #tpu.memory_space<vmem>>, vector<1x1x128xf32>
    %145 = vector.shape_cast %144 : vector<1x1x128xf32> to vector<1x128xf32>
    %c0_46 = arith.constant 0 : index
    %c0_47 = arith.constant 0 : index
    %c0_48 = arith.constant 0 : index
    %146 = vector.load %arg8[%c0_46, %c0_47, %c0_48] : memref<1x1x128xf32, #tpu.memory_space<vmem>>, vector<1x1x128xf32>
    %147 = vector.shape_cast %146 : vector<1x1x128xf32> to vector<1x128xf32>
    %cst_49 = arith.constant dense<0.000000e+00> : vector<32xf32>
    %148 = vector.multi_reduction <add>, %143, %cst_49 [1] : vector<32x128xf32> to vector<32xf32>
    %149 = vector.shape_cast %148 : vector<32xf32> to vector<32x1xf32>
    %cst_50 = arith.constant 1.280000e+02 : f32
    %150 = vector.broadcast %cst_50 : f32 to vector<32x1xf32>
    %151 = arith.divf %149, %150 : vector<32x1xf32>
    %152 = vector.broadcast %151 : vector<32x1xf32> to vector<32x128xf32>
    %153 = arith.subf %143, %152 : vector<32x128xf32>
    %154 = arith.mulf %153, %153 : vector<32x128xf32>
    %cst_51 = arith.constant dense<0.000000e+00> : vector<32xf32>
    %155 = vector.multi_reduction <add>, %154, %cst_51 [1] : vector<32x128xf32> to vector<32xf32>
    %156 = vector.shape_cast %155 : vector<32xf32> to vector<32x1xf32>
    %cst_52 = arith.constant 0.00787401571 : f32
    %157 = vector.broadcast %cst_52 : f32 to vector<32x1xf32>
    %158 = arith.mulf %156, %157 : vector<32x1xf32>
    %159 = vector.broadcast %145 : vector<1x128xf32> to vector<32x128xf32>
    %160 = arith.mulf %159, %153 : vector<32x128xf32>
    %161 = math.sqrt %158 : vector<32x1xf32>
    %cst_53 = arith.constant 9.99999997E-7 : f32
    %162 = vector.broadcast %cst_53 : f32 to vector<32x1xf32>
    %163 = arith.addf %161, %162 : vector<32x1xf32>
    %164 = vector.broadcast %163 : vector<32x1xf32> to vector<32x128xf32>
    %165 = arith.divf %160, %164 : vector<32x128xf32>
    %166 = vector.broadcast %147 : vector<1x128xf32> to vector<32x128xf32>
    %167 = arith.addf %165, %166 : vector<32x128xf32>
    %168 = arith.truncf %167 : vector<32x128xf32> to vector<32x128xbf16>
    %c0_54 = arith.constant 0 : index
    %c0_55 = arith.constant 0 : index
    %c0_56 = arith.constant 0 : index
    %169 = vector.load %arg9[%c0_54, %c0_55, %c0_56] : memref<1x128x512xbf16, #tpu.memory_space<vmem>>, vector<1x128x512xbf16>
    %170 = vector.shape_cast %169 : vector<1x128x512xbf16> to vector<128x512xbf16>
    %cst_57 = arith.constant dense<0.000000e+00> : vector<32x512xf32>
    %171 = tpu.matmul %168, %170, %cst_57 {dimension_numbers = #tpu.dot_dimension_numbers<[1], [0], [0], [1], [0, 0, 1, 1], [], []>} : vector<32x128xbf16>, vector<128x512xbf16>, vector<32x512xf32> -> vector<32x512xf32>
    %c0_58 = arith.constant 0 : index
    %c0_59 = arith.constant 0 : index
    %c0_60 = arith.constant 0 : index
    %172 = vector.load %arg10[%c0_58, %c0_59, %c0_60] : memref<1x1x512xf32, #tpu.memory_space<vmem>>, vector<1x1x512xf32>
    %173 = vector.shape_cast %172 : vector<1x1x512xf32> to vector<1x512xf32>
    %174 = vector.broadcast %173 : vector<1x512xf32> to vector<32x512xf32>
    %175 = arith.addf %171, %174 : vector<32x512xf32>
    %cst_61 = arith.constant 5.000000e-01 : f32
    %176 = vector.broadcast %cst_61 : f32 to vector<32x512xf32>
    %177 = arith.mulf %176, %175 : vector<32x512xf32>
    %cst_62 = arith.constant 0.707106769 : f32
    %178 = vector.broadcast %cst_62 : f32 to vector<32x512xf32>
    %179 = arith.mulf %175, %178 : vector<32x512xf32>
    %180 = math.erf %179 : vector<32x512xf32>
    %cst_63 = arith.constant 1.000000e+00 : f32
    %181 = vector.broadcast %cst_63 : f32 to vector<32x512xf32>
    %182 = arith.addf %181, %180 : vector<32x512xf32>
    %183 = arith.mulf %177, %182 : vector<32x512xf32>
    %184 = arith.truncf %183 : vector<32x512xf32> to vector<32x512xbf16>
    %c0_64 = arith.constant 0 : index
    %c0_65 = arith.constant 0 : index
    %c0_66 = arith.constant 0 : index
    %185 = vector.load %arg11[%c0_64, %c0_65, %c0_66] : memref<1x512x128xbf16, #tpu.memory_space<vmem>>, vector<1x512x128xbf16>
    %186 = vector.shape_cast %185 : vector<1x512x128xbf16> to vector<512x128xbf16>
    %cst_67 = arith.constant dense<0.000000e+00> : vector<32x128xf32>
    %187 = tpu.matmul %184, %186, %cst_67 {dimension_numbers = #tpu.dot_dimension_numbers<[1], [0], [0], [1], [0, 0, 1, 1], [], []>} : vector<32x512xbf16>, vector<512x128xbf16>, vector<32x128xf32> -> vector<32x128xf32>
    %c0_68 = arith.constant 0 : index
    %c0_69 = arith.constant 0 : index
    %c0_70 = arith.constant 0 : index
    %188 = vector.load %arg12[%c0_68, %c0_69, %c0_70] : memref<1x1x128xf32, #tpu.memory_space<vmem>>, vector<1x1x128xf32>
    %189 = vector.shape_cast %188 : vector<1x1x128xf32> to vector<1x128xf32>
    %190 = vector.broadcast %189 : vector<1x128xf32> to vector<32x128xf32>
    %191 = arith.addf %187, %190 : vector<32x128xf32>
    %192 = arith.addf %191, %167 : vector<32x128xf32>
    %c0_71 = arith.constant 0 : index
    %c0_72 = arith.constant 0 : index
    %c0_73 = arith.constant 0 : index
    %193 = vector.load %arg13[%c0_71, %c0_72, %c0_73] : memref<1x1x128xf32, #tpu.memory_space<vmem>>, vector<1x1x128xf32>
    %194 = vector.shape_cast %193 : vector<1x1x128xf32> to vector<1x128xf32>
    %c0_74 = arith.constant 0 : index
    %c0_75 = arith.constant 0 : index
    %c0_76 = arith.constant 0 : index
    %195 = vector.load %arg14[%c0_74, %c0_75, %c0_76] : memref<1x1x128xf32, #tpu.memory_space<vmem>>, vector<1x1x128xf32>
    %196 = vector.shape_cast %195 : vector<1x1x128xf32> to vector<1x128xf32>
    %cst_77 = arith.constant dense<0.000000e+00> : vector<32xf32>
    %197 = vector.multi_reduction <add>, %192, %cst_77 [1] : vector<32x128xf32> to vector<32xf32>
    %198 = vector.shape_cast %197 : vector<32xf32> to vector<32x1xf32>
    %cst_78 = arith.constant 1.280000e+02 : f32
    %199 = vector.broadcast %cst_78 : f32 to vector<32x1xf32>
    %200 = arith.divf %198, %199 : vector<32x1xf32>
    %201 = vector.broadcast %200 : vector<32x1xf32> to vector<32x128xf32>
    %202 = arith.subf %192, %201 : vector<32x128xf32>
    %203 = arith.mulf %202, %202 : vector<32x128xf32>
    %cst_79 = arith.constant dense<0.000000e+00> : vector<32xf32>
    %204 = vector.multi_reduction <add>, %203, %cst_79 [1] : vector<32x128xf32> to vector<32xf32>
    %205 = vector.shape_cast %204 : vector<32xf32> to vector<32x1xf32>
    %cst_80 = arith.constant 0.00787401571 : f32
    %206 = vector.broadcast %cst_80 : f32 to vector<32x1xf32>
    %207 = arith.mulf %205, %206 : vector<32x1xf32>
    %208 = vector.broadcast %194 : vector<1x128xf32> to vector<32x128xf32>
    %209 = arith.mulf %208, %202 : vector<32x128xf32>
    %210 = math.sqrt %207 : vector<32x1xf32>
    %cst_81 = arith.constant 9.99999997E-7 : f32
    %211 = vector.broadcast %cst_81 : f32 to vector<32x1xf32>
    %212 = arith.addf %210, %211 : vector<32x1xf32>
    %213 = vector.broadcast %212 : vector<32x1xf32> to vector<32x128xf32>
    %214 = arith.divf %209, %213 : vector<32x128xf32>
    %215 = vector.broadcast %196 : vector<1x128xf32> to vector<32x128xf32>
    %216 = arith.addf %214, %215 : vector<32x128xf32>
    %c0_82 = arith.constant 0 : index
    %c0_83 = arith.constant 0 : index
    %217 = vector.load %arg15[%c0_82, %c0_83] : memref<32x128xf32, #tpu.memory_space<vmem>>, vector<32x128xf32>
    tpu.vector_store %arg15[%c0_82, %c0_83], %216 {strides = array<i32>} : memref<32x128xf32, #tpu.memory_space<vmem>>, vector<32x128xf32>,
    return
  }
  func.func @transform_0(%arg0: i32) -> (i32, i32) {
    %c0_i32 = arith.constant 0 : i32
    %c0_i32_0 = arith.constant 0 : i32
    %c0_i32_1 = arith.constant 0 : i32
    return %c0_i32, %c0_i32_0 : i32, i32
  }
  func.func @transform_1(%arg0: i32) -> (i32, i32, i32) {
    %c0_i32 = arith.constant 0 : i32
    %c0_i32_0 = arith.constant 0 : i32
    %c0_i32_1 = arith.constant 0 : i32
    %c0_i32_2 = arith.constant 0 : i32
    return %c0_i32, %c0_i32_0, %c0_i32_1 : i32, i32, i32
  }
  func.func @transform_2(%arg0: i32) -> (i32, i32, i32) {
    %c0_i32 = arith.constant 0 : i32
    %c0_i32_0 = arith.constant 0 : i32
    %c0_i32_1 = arith.constant 0 : i32
    return %arg0, %c0_i32, %c0_i32_0 : i32, i32, i32
  }
  func.func @transform_3(%arg0: i32) -> (i32, i32, i32) {
    %c0_i32 = arith.constant 0 : i32
    %c0_i32_0 = arith.constant 0 : i32
    %c0_i32_1 = arith.constant 0 : i32
    return %arg0, %c0_i32, %c0_i32_0 : i32, i32, i32
  }
  func.func @transform_4(%arg0: i32) -> (i32, i32, i32) {
    %c0_i32 = arith.constant 0 : i32
    %c0_i32_0 = arith.constant 0 : i32
    %c0_i32_1 = arith.constant 0 : i32
    return %arg0, %c0_i32, %c0_i32_0 : i32, i32, i32
  }
  func.func @transform_5(%arg0: i32) -> (i32, i32, i32) {
    %c0_i32 = arith.constant 0 : i32
    %c0_i32_0 = arith.constant 0 : i32
    %c0_i32_1 = arith.constant 0 : i32
    return %arg0, %c0_i32, %c0_i32_0 : i32, i32, i32
  }
  func.func @transform_6(%arg0: i32) -> (i32, i32, i32) {
    %c0_i32 = arith.constant 0 : i32
    %c0_i32_0 = arith.constant 0 : i32
    %c0_i32_1 = arith.constant 0 : i32
    return %arg0, %c0_i32, %c0_i32_0 : i32, i32, i32
  }
  func.func @transform_7(%arg0: i32) -> (i32, i32, i32) {
    %c0_i32 = arith.constant 0 : i32
    %c0_i32_0 = arith.constant 0 : i32
    %c0_i32_1 = arith.constant 0 : i32
    return %arg0, %c0_i32, %c0_i32_0 : i32, i32, i32
  }
  func.func @transform_8(%arg0: i32) -> (i32, i32, i32) {
    %c0_i32 = arith.constant 0 : i32
    %c0_i32_0 = arith.constant 0 : i32
    %c0_i32_1 = arith.constant 0 : i32
    return %arg0, %c0_i32, %c0_i32_0 : i32, i32, i32
  }
  func.func @transform_9(%arg0: i32) -> (i32, i32, i32) {
    %c0_i32 = arith.constant 0 : i32
    %c0_i32_0 = arith.constant 0 : i32
    %c0_i32_1 = arith.constant 0 : i32
    return %arg0, %c0_i32, %c0_i32_0 : i32, i32, i32
  }
  func.func @transform_10(%arg0: i32) -> (i32, i32, i32) {
    %c0_i32 = arith.constant 0 : i32
    %c0_i32_0 = arith.constant 0 : i32
    %c0_i32_1 = arith.constant 0 : i32
    return %arg0, %c0_i32, %c0_i32_0 : i32, i32, i32
  }
  func.func @transform_11(%arg0: i32) -> (i32, i32, i32) {
    %c0_i32 = arith.constant 0 : i32
    %c0_i32_0 = arith.constant 0 : i32
    %c0_i32_1 = arith.constant 0 : i32
    return %arg0, %c0_i32, %c0_i32_0 : i32, i32, i32
  }
  func.func @transform_12(%arg0: i32) -> (i32, i32, i32) {
    %c0_i32 = arith.constant 0 : i32
    %c0_i32_0 = arith.constant 0 : i32
    %c0_i32_1 = arith.constant 0 : i32
    return %arg0, %c0_i32, %c0_i32_0 : i32, i32, i32
  }
  func.func @transform_13(%arg0: i32) -> (i32, i32, i32) {
    %c0_i32 = arith.constant 0 : i32
    %c0_i32_0 = arith.constant 0 : i32
    %c0_i32_1 = arith.constant 0 : i32
    return %arg0, %c0_i32, %c0_i32_0 : i32, i32, i32
  }
  func.func @transform_14(%arg0: i32) -> (i32, i32) {
    %c0_i32 = arith.constant 0 : i32
    %c0_i32_0 = arith.constant 0 : i32
    %c0_i32_1 = arith.constant 0 : i32
    return %c0_i32, %c0_i32_0 : i32, i32
  }
}

</mosaic_0001>

<llo_original>
// kernel: tpu_custom_call.1
$region0: #{tpu_custom_call.1}
  #allocation0 [shape = 'u32[]', space=smem, size = 0x4, offset = 0x4, fixed_abs, tag = 'smem constant byte address 0x4 - core index']
  #allocation1 [shape = 'u32[144,128]{1,0:T(1,128)}', space=vmem, size = 0x12000, scoped, tag = 'internal scratch']
  %s0 = inlined_call_operand.hbm [shape: f32[32,128], index: 0, kind: input, shape index: {}]
  %s1 = inlined_call_operand.hbm [shape: f32[2,1,128], index: 1, kind: input, shape index: {}]
  %s2 = inlined_call_operand.hbm [shape: bf16[2,128,384], index: 2, kind: input, shape index: {}]
  %s3 = inlined_call_operand.vmem [shape: f32[2,1,384], index: 3, kind: input, shape index: {}]
  %s4 = inlined_call_operand.hbm [shape: bf16[2,128,128], index: 4, kind: input, shape index: {}]
  %s5 = inlined_call_operand.vmem [shape: f32[2,1,128], index: 5, kind: input, shape index: {}]
  %s6 = inlined_call_operand.vmem [shape: f32[2,1,128], index: 6, kind: input, shape index: {}]
  %s7 = inlined_call_operand.vmem [shape: f32[2,1,128], index: 7, kind: input, shape index: {}]
  %s8 = inlined_call_operand.hbm [shape: bf16[2,128,512], index: 8, kind: input, shape index: {}]
  %s9 = inlined_call_operand.vmem [shape: f32[2,1,512], index: 9, kind: input, shape index: {}]
  %s10 = inlined_call_operand.hbm [shape: bf16[2,512,128], index: 10, kind: input, shape index: {}]
  %s11 = inlined_call_operand.vmem [shape: f32[2,1,128], index: 11, kind: input, shape index: {}]
  %s12 = inlined_call_operand.vmem [shape: f32[2,1,128], index: 12, kind: input, shape index: {}]
  %s13 = inlined_call_operand.vmem [shape: f32[2,1,128], index: 13, kind: input, shape index: {}]
  %s14 = inlined_call_operand.hbm [shape: f32[32,128], index: 14, kind: output, shape index: {}]
  %s15 = sld [smem:[#allocation0]]
  $region117: #{tpu_custom_call.1} parent=0
    _
  %s17 = ssub.s32 1, %s15
  %s18 = scalar_select 0, %s17, %s15
  $region1: #{tpu_custom_call.1} parent=0
    #allocation2 [shape = 'u8[16384]{0}', space=vmem, size = 0x4000, scoped, tag = 'input window, operand 0, single buffered']
    #allocation3 [shape = 's32[2]{0}', space=sflag, size = 0x8, scoped, tag = 'scoped memory for tpu_custom_call.1']
    #allocation4 [shape = 's32[2]{0}', space=sflag, size = 0x8, scoped, tag = 'scoped memory for tpu_custom_call.1']
    #allocation5 [shape = 'u8[1024]{0}', space=vmem, size = 0x400, scoped, tag = 'input window, operand 1, single buffered']
    #allocation6 [shape = 's32[1]{0}', space=sflag, size = 0x4, scoped, tag = 'scoped memory for tpu_custom_call.1']
    #allocation7 [shape = 'u8[196608]{0}', space=vmem, size = 0x30000, scoped, tag = 'input window, operand 2']
    #allocation8 [shape = 'u8[65536]{0}', space=vmem, size = 0x10000, scoped, tag = 'input window, operand 4']
    #allocation9 [shape = 'u8[262144]{0}', space=vmem, size = 0x40000, scoped, tag = 'input window, operand 8']
    #allocation10 [shape = 'u8[262144]{0}', space=vmem, size = 0x40000, scoped, tag = 'input window, operand 10']
    #allocation11 [shape = 'u8[16384]{0}', space=vmem, size = 0x4000, scoped, tag = 'output window, operand 0, single buffered']
    %19 = vsyncpa [#allocation3], 0
    %20 = vsyncpa [#allocation6], 0
    %21 = vsyncpa [#allocation4], 0
    loop: start=0, step=1, limit=4
    $region2: #{tpu_custom_call.1} parent=1 // loop_pre_header
      _
    $region3: #{tpu_custom_call.1} parent=1 // loop_header
      %s23 = sphi 0, %s27
      %p24 = scmp.ge.s32.totalorder %s23, 4
      %s31 = sphi 0, %s31
      %s33 = sphi 0, %s31
      %s34 = sphi 0, %s33
      %s48 = sphi 0, %s34
      %s52 = sphi 0, %s52
      %s54 = sphi 0, %s52
      %s55 = sphi 0, %s54
      %s69 = sphi 0, %s55
      %s75 = sphi 0, %s77
      %s78 = sphi 0, %s75
      %s79 = sphi 0, %s78
      %s95 = sphi 0, %s79
      %s101 = sphi 0, %s103
      %s104 = sphi 0, %s101
      %s105 = sphi 0, %s104
      %s121 = sphi 0, %s105
      %s127 = sphi 0, %s129
      %s130 = sphi 0, %s127
      %s131 = sphi 0, %s130
      %s147 = sphi 0, %s131
      %s153 = sphi 0, %s155
      %s156 = sphi 0, %s153
      %s157 = sphi 0, %s156
      %s173 = sphi 0, %s157
      %s179 = sphi 0, %s181
      %s182 = sphi 0, %s179
      %s183 = sphi 0, %s182
      %s199 = sphi 0, %s183
      %s205 = sphi 0, %s207
      %s208 = sphi 0, %s205
      %s209 = sphi 0, %s208
      %s225 = sphi 0, %s209
      %s231 = sphi 0, %s233
      %s234 = sphi 0, %s231
      %s235 = sphi 0, %s234
      %s251 = sphi 0, %s235
      %s257 = sphi 0, %s259
      %s260 = sphi 0, %s257
      %s261 = sphi 0, %s260
      %s277 = sphi 0, %s261
      %s283 = sphi 0, %s285
      %s286 = sphi 0, %s283
      %s287 = sphi 0, %s286
      %s303 = sphi 0, %s287
      %s309 = sphi 0, %s311
      %s312 = sphi 0, %s309
      %s313 = sphi 0, %s312
      %s329 = sphi 0, %s313
      %s335 = sphi 0, %s337
      %s338 = sphi 0, %s335
      %s339 = sphi 0, %s338
      %s355 = sphi 0, %s339
      %s361 = sphi 0, %s363
      %s364 = sphi 0, %s361
      %s365 = sphi 0, %s364
      %s381 = sphi 0, %s365
      %s385 = sphi 0, %s385
      %s387 = sphi 0, %s385
      %s388 = sphi 0, %s387
      %s402 = sphi 0, %s388
    $region4: #{tpu_custom_call.1} parent=1 // loop_header_branch
      %26 = sbr.rel (%p24) target = $region8
    $region5: #{tpu_custom_call.1} parent=1 // loop_body
      %s28 = ssub.s32 %s23, 1
      %s29 = ssub.s32 %s23, 2
      %s30 = sadd.s32 %s23, 1
      %s32 = sadd.s32 %s31, 1
      %p35 = scmp.eq.s32.totalorder %s23, 1
      %p36 = scmp.ne.s32.totalorder %s31, %s33
      %p37 = scmp.eq.s32.totalorder %s23, 0
      %p38 = por %p36, %p37
      %p39 = scmp.ne.s32.totalorder %s31, %s33
      %p40 = scmp.eq.s32.totalorder %s28, 1
      %p41 = por %p39, %p40
      %p42 = scmp.ne.s32.totalorder %s33, %s34
      %p43 = scmp.eq.s32.totalorder %s28, 0
      %p44 = por %p42, %p43
      %p45 = scmp.ne.s32.totalorder %s33, %s34
      %p46 = scmp.eq.s32.totalorder %s29, 1
      %p47 = por %p45, %p46
      %p49 = scmp.ne.s32.totalorder %s34, %s48
      %p50 = scmp.eq.s32.totalorder %s29, 0
      %p51 = por %p49, %p50
      %s53 = sadd.s32 %s52, 1
      %p56 = scmp.eq.s32.totalorder %s23, 1
      %p57 = scmp.ne.s32.totalorder %s52, %s54
      %p58 = scmp.eq.s32.totalorder %s23, 0
      %p59 = por %p57, %p58
      %p60 = scmp.ne.s32.totalorder %s52, %s54
      %p61 = scmp.eq.s32.totalorder %s28, 1
      %p62 = por %p60, %p61
      %p63 = scmp.ne.s32.totalorder %s54, %s55
      %p64 = scmp.eq.s32.totalorder %s28, 0
      %p65 = por %p63, %p64
      %p66 = scmp.ne.s32.totalorder %s54, %s55
      %p67 = scmp.eq.s32.totalorder %s29, 1
      %p68 = por %p66, %p67
      %p70 = scmp.ne.s32.totalorder %s55, %s69
      %p71 = scmp.eq.s32.totalorder %s29, 0
      %p72 = por %p70, %p71
      %s73 = ssub.s32 %s23, %s30
      %p74 = scmp.eq.s32.totalorder %s73, 0
      %s76 = sadd.s32 %s75, 1
      %s77 = scalar_select %p74, %s75, %s76
      %p80 = pneg %p74
      %p81 = scmp.eq.s32.totalorder %s23, 1
      %p82 = por %p80, %p81
      %p83 = scmp.ne.s32.totalorder %s75, %s78
      %p84 = scmp.eq.s32.totalorder %s23, 0
      %p85 = por %p83, %p84
      %p86 = scmp.ne.s32.totalorder %s75, %s78
      %p87 = scmp.eq.s32.totalorder %s28, 1
      %p88 = por %p86, %p87
      %p89 = scmp.ne.s32.totalorder %s78, %s79
      %p90 = scmp.eq.s32.totalorder %s28, 0
      %p91 = por %p89, %p90
      %p92 = scmp.ne.s32.totalorder %s78, %s79
      %p93 = scmp.eq.s32.totalorder %s29, 1
      %p94 = por %p92, %p93
      %p96 = scmp.ne.s32.totalorder %s79, %s95
      %p97 = scmp.eq.s32.totalorder %s29, 0
      %p98 = por %p96, %p97
      %s99 = ssub.s32 %s23, %s30
      %p100 = scmp.eq.s32.totalorder %s99, 0
      %s102 = sadd.s32 %s101, 1
      %s103 = scalar_select %p100, %s101, %s102
      %p106 = pneg %p100
      %p107 = scmp.eq.s32.totalorder %s23, 1
      %p108 = por %p106, %p107
      %p109 = scmp.ne.s32.totalorder %s101, %s104
      %p110 = scmp.eq.s32.totalorder %s23, 0
      %p111 = por %p109, %p110
      %p112 = scmp.ne.s32.totalorder %s101, %s104
      %p113 = scmp.eq.s32.totalorder %s28, 1
      %p114 = por %p112, %p113
      %p115 = scmp.ne.s32.totalorder %s104, %s105
      %p116 = scmp.eq.s32.totalorder %s28, 0
      %p117 = por %p115, %p116
      %p118 = scmp.ne.s32.totalorder %s104, %s105
      %p119 = scmp.eq.s32.totalorder %s29, 1
      %p120 = por %p118, %p119
      %p122 = scmp.ne.s32.totalorder %s105, %s121
      %p123 = scmp.eq.s32.totalorder %s29, 0
      %p124 = por %p122, %p123
      %s125 = ssub.s32 %s23, %s30
      %p126 = scmp.eq.s32.totalorder %s125, 0
      %s128 = sadd.s32 %s127, 1
      %s129 = scalar_select %p126, %s127, %s128
      %p132 = pneg %p126
      %p133 = scmp.eq.s32.totalorder %s23, 1
      %p134 = por %p132, %p133
      %p135 = scmp.ne.s32.totalorder %s127, %s130
      %p136 = scmp.eq.s32.totalorder %s23, 0
      %p137 = por %p135, %p136
      %p138 = scmp.ne.s32.totalorder %s127, %s130
      %p139 = scmp.eq.s32.totalorder %s28, 1
      %p140 = por %p138, %p139
      %p141 = scmp.ne.s32.totalorder %s130, %s131
      %p142 = scmp.eq.s32.totalorder %s28, 0
      %p143 = por %p141, %p142
      %p144 = scmp.ne.s32.totalorder %s130, %s131
      %p145 = scmp.eq.s32.totalorder %s29, 1
      %p146 = por %p144, %p145
      %p148 = scmp.ne.s32.totalorder %s131, %s147
      %p149 = scmp.eq.s32.totalorder %s29, 0
      %p150 = por %p148, %p149
      %s151 = ssub.s32 %s23, %s30
      %p152 = scmp.eq.s32.totalorder %s151, 0
      %s154 = sadd.s32 %s153, 1
      %s155 = scalar_select %p152, %s153, %s154
      %p158 = pneg %p152
      %p159 = scmp.eq.s32.totalorder %s23, 1
      %p160 = por %p158, %p159
      %p161 = scmp.ne.s32.totalorder %s153, %s156
      %p162 = scmp.eq.s32.totalorder %s23, 0
      %p163 = por %p161, %p162
      %p164 = scmp.ne.s32.totalorder %s153, %s156
      %p165 = scmp.eq.s32.totalorder %s28, 1
      %p166 = por %p164, %p165
      %p167 = scmp.ne.s32.totalorder %s156, %s157
      %p168 = scmp.eq.s32.totalorder %s28, 0
      %p169 = por %p167, %p168
      %p170 = scmp.ne.s32.totalorder %s156, %s157
      %p171 = scmp.eq.s32.totalorder %s29, 1
      %p172 = por %p170, %p171
      %p174 = scmp.ne.s32.totalorder %s157, %s173
      %p175 = scmp.eq.s32.totalorder %s29, 0
      %p176 = por %p174, %p175
      %s177 = ssub.s32 %s23, %s30
      %p178 = scmp.eq.s32.totalorder %s177, 0
      %s180 = sadd.s32 %s179, 1
      %s181 = scalar_select %p178, %s179, %s180
      %p184 = pneg %p178
      %p185 = scmp.eq.s32.totalorder %s23, 1
      %p186 = por %p184, %p185
      %p187 = scmp.ne.s32.totalorder %s179, %s182
      %p188 = scmp.eq.s32.totalorder %s23, 0
      %p189 = por %p187, %p188
      %p190 = scmp.ne.s32.totalorder %s179, %s182
      %p191 = scmp.eq.s32.totalorder %s28, 1
      %p192 = por %p190, %p191
      %p193 = scmp.ne.s32.totalorder %s182, %s183
      %p194 = scmp.eq.s32.totalorder %s28, 0
      %p195 = por %p193, %p194
      %p196 = scmp.ne.s32.totalorder %s182, %s183
      %p197 = scmp.eq.s32.totalorder %s29, 1
      %p198 = por %p196, %p197
      %p200 = scmp.ne.s32.totalorder %s183, %s199
      %p201 = scmp.eq.s32.totalorder %s29, 0
      %p202 = por %p200, %p201
      %s203 = ssub.s32 %s23, %s30
      %p204 = scmp.eq.s32.totalorder %s203, 0
      %s206 = sadd.s32 %s205, 1
      %s207 = scalar_select %p204, %s205, %s206
      %p210 = pneg %p204
      %p211 = scmp.eq.s32.totalorder %s23, 1
      %p212 = por %p210, %p211
      %p213 = scmp.ne.s32.totalorder %s205, %s208
      %p214 = scmp.eq.s32.totalorder %s23, 0
      %p215 = por %p213, %p214
      %p216 = scmp.ne.s32.totalorder %s205, %s208
      %p217 = scmp.eq.s32.totalorder %s28, 1
      %p218 = por %p216, %p217
      %p219 = scmp.ne.s32.totalorder %s208, %s209
      %p220 = scmp.eq.s32.totalorder %s28, 0
      %p221 = por %p219, %p220
      %p222 = scmp.ne.s32.totalorder %s208, %s209
      %p223 = scmp.eq.s32.totalorder %s29, 1
      %p224 = por %p222, %p223
      %p226 = scmp.ne.s32.totalorder %s209, %s225
      %p227 = scmp.eq.s32.totalorder %s29, 0
      %p228 = por %p226, %p227
      %s229 = ssub.s32 %s23, %s30
      %p230 = scmp.eq.s32.totalorder %s229, 0
      %s232 = sadd.s32 %s231, 1
      %s233 = scalar_select %p230, %s231, %s232
      %p236 = pneg %p230
      %p237 = scmp.eq.s32.totalorder %s23, 1
      %p238 = por %p236, %p237
      %p239 = scmp.ne.s32.totalorder %s231, %s234
      %p240 = scmp.eq.s32.totalorder %s23, 0
      %p241 = por %p239, %p240
      %p242 = scmp.ne.s32.totalorder %s231, %s234
      %p243 = scmp.eq.s32.totalorder %s28, 1
      %p244 = por %p242, %p243
      %p245 = scmp.ne.s32.totalorder %s234, %s235
      %p246 = scmp.eq.s32.totalorder %s28, 0
      %p247 = por %p245, %p246
      %p248 = scmp.ne.s32.totalorder %s234, %s235
      %p249 = scmp.eq.s32.totalorder %s29, 1
      %p250 = por %p248, %p249
      %p252 = scmp.ne.s32.totalorder %s235, %s251
      %p253 = scmp.eq.s32.totalorder %s29, 0
      %p254 = por %p252, %p253
      %s255 = ssub.s32 %s23, %s30
      %p256 = scmp.eq.s32.totalorder %s255, 0
      %s258 = sadd.s32 %s257, 1
      %s259 = scalar_select %p256, %s257, %s258
      %p262 = pneg %p256
      %p263 = scmp.eq.s32.totalorder %s23, 1
      %p264 = por %p262, %p263
      %p265 = scmp.ne.s32.totalorder %s257, %s260
      %p266 = scmp.eq.s32.totalorder %s23, 0
      %p267 = por %p265, %p266
      %p268 = scmp.ne.s32.totalorder %s257, %s260
      %p269 = scmp.eq.s32.totalorder %s28, 1
      %p270 = por %p268, %p269
      %p271 = scmp.ne.s32.totalorder %s260, %s261
      %p272 = scmp.eq.s32.totalorder %s28, 0
      %p273 = por %p271, %p272
      %p274 = scmp.ne.s32.totalorder %s260, %s261
      %p275 = scmp.eq.s32.totalorder %s29, 1
      %p276 = por %p274, %p275
      %p278 = scmp.ne.s32.totalorder %s261, %s277
      %p279 = scmp.eq.s32.totalorder %s29, 0
      %p280 = por %p278, %p279
      %s281 = ssub.s32 %s23, %s30
      %p282 = scmp.eq.s32.totalorder %s281, 0
      %s284 = sadd.s32 %s283, 1
      %s285 = scalar_select %p282, %s283, %s284
      %p288 = pneg %p282
      %p289 = scmp.eq.s32.totalorder %s23, 1
      %p290 = por %p288, %p289
      %p291 = scmp.ne.s32.totalorder %s283, %s286
      %p292 = scmp.eq.s32.totalorder %s23, 0
      %p293 = por %p291, %p292
      %p294 = scmp.ne.s32.totalorder %s283, %s286
      %p295 = scmp.eq.s32.totalorder %s28, 1
      %p296 = por %p294, %p295
      %p297 = scmp.ne.s32.totalorder %s286, %s287
      %p298 = scmp.eq.s32.totalorder %s28, 0
      %p299 = por %p297, %p298
      %p300 = scmp.ne.s32.totalorder %s286, %s287
      %p301 = scmp.eq.s32.totalorder %s29, 1
      %p302 = por %p300, %p301
      %p304 = scmp.ne.s32.totalorder %s287, %s303
      %p305 = scmp.eq.s32.totalorder %s29, 0
      %p306 = por %p304, %p305
      %s307 = ssub.s32 %s23, %s30
      %p308 = scmp.eq.s32.totalorder %s307, 0
      %s310 = sadd.s32 %s309, 1
      %s311 = scalar_select %p308, %s309, %s310
      %p314 = pneg %p308
      %p315 = scmp.eq.s32.totalorder %s23, 1
      %p316 = por %p314, %p315
      %p317 = scmp.ne.s32.totalorder %s309, %s312
      %p318 = scmp.eq.s32.totalorder %s23, 0
      %p319 = por %p317, %p318
      %p320 = scmp.ne.s32.totalorder %s309, %s312
      %p321 = scmp.eq.s32.totalorder %s28, 1
      %p322 = por %p320, %p321
      %p323 = scmp.ne.s32.totalorder %s312, %s313
      %p324 = scmp.eq.s32.totalorder %s28, 0
      %p325 = por %p323, %p324
      %p326 = scmp.ne.s32.totalorder %s312, %s313
      %p327 = scmp.eq.s32.totalorder %s29, 1
      %p328 = por %p326, %p327
      %p330 = scmp.ne.s32.totalorder %s313, %s329
      %p331 = scmp.eq.s32.totalorder %s29, 0
      %p332 = por %p330, %p331
      %s333 = ssub.s32 %s23, %s30
      %p334 = scmp.eq.s32.totalorder %s333, 0
      %s336 = sadd.s32 %s335, 1
      %s337 = scalar_select %p334, %s335, %s336
      %p340 = pneg %p334
      %p341 = scmp.eq.s32.totalorder %s23, 1
      %p342 = por %p340, %p341
      %p343 = scmp.ne.s32.totalorder %s335, %s338
      %p344 = scmp.eq.s32.totalorder %s23, 0
      %p345 = por %p343, %p344
      %p346 = scmp.ne.s32.totalorder %s335, %s338
      %p347 = scmp.eq.s32.totalorder %s28, 1
      %p348 = por %p346, %p347
      %p349 = scmp.ne.s32.totalorder %s338, %s339
      %p350 = scmp.eq.s32.totalorder %s28, 0
      %p351 = por %p349, %p350
      %p352 = scmp.ne.s32.totalorder %s338, %s339
      %p353 = scmp.eq.s32.totalorder %s29, 1
      %p354 = por %p352, %p353
      %p356 = scmp.ne.s32.totalorder %s339, %s355
      %p357 = scmp.eq.s32.totalorder %s29, 0
      %p358 = por %p356, %p357
      %s359 = ssub.s32 %s23, %s30
      %p360 = scmp.eq.s32.totalorder %s359, 0
      %s362 = sadd.s32 %s361, 1
      %s363 = scalar_select %p360, %s361, %s362
      %p366 = pneg %p360
      %p367 = scmp.eq.s32.totalorder %s23, 1
      %p368 = por %p366, %p367
      %p369 = scmp.ne.s32.totalorder %s361, %s364
      %p370 = scmp.eq.s32.totalorder %s23, 0
      %p371 = por %p369, %p370
      %p372 = scmp.ne.s32.totalorder %s361, %s364
      %p373 = scmp.eq.s32.totalorder %s28, 1
      %p374 = por %p372, %p373
      %p375 = scmp.ne.s32.totalorder %s364, %s365
      %p376 = scmp.eq.s32.totalorder %s28, 0
      %p377 = por %p375, %p376
      %p378 = scmp.ne.s32.totalorder %s364, %s365
      %p379 = scmp.eq.s32.totalorder %s29, 1
      %p380 = por %p378, %p379
      %p382 = scmp.ne.s32.totalorder %s365, %s381
      %p383 = scmp.eq.s32.totalorder %s29, 0
      %p384 = por %p382, %p383
      %s386 = sadd.s32 %s385, 1
      %p389 = scmp.eq.s32.totalorder %s23, 1
      %p390 = scmp.ne.s32.totalorder %s385, %s387
      %p391 = scmp.eq.s32.totalorder %s23, 0
      %p392 = por %p390, %p391
      %p393 = scmp.ne.s32.totalorder %s385, %s387
      %p394 = scmp.eq.s32.totalorder %s28, 1
      %p395 = por %p393, %p394
      %p396 = scmp.ne.s32.totalorder %s387, %s388
      %p397 = scmp.eq.s32.totalorder %s28, 0
      %p398 = por %p396, %p397
      %p399 = scmp.ne.s32.totalorder %s387, %s388
      %p400 = scmp.eq.s32.totalorder %s29, 1
      %p401 = por %p399, %p400
      %p403 = scmp.ne.s32.totalorder %s388, %s402
      %p404 = scmp.eq.s32.totalorder %s29, 0
      %p405 = por %p403, %p404
      %p406 = scmp.le.s32.totalorder 1, %s23
      %p407 = scmp.lt.s32.totalorder %s23, 3
      %p408 = pnand %p406, %p407
      %p409 = pneg %p408
      // Predicated region
      $region9: #{tpu_custom_call.1} parent=5 // pred_check
        _
      $region10: #{tpu_custom_call.1} parent=5 // pred_check_branch
        %411 = sbr.rel (%p408) target = $region12
      $region11: #{tpu_custom_call.1} parent=5 // pred_region
        %s412 = ssub.s32 %s23, 1
        // Predicated region
        $region13: #{tpu_custom_call.1} parent=11 // pred_check
          %p413 = pneg %p44
        $region14: #{tpu_custom_call.1} parent=11 // pred_check_branch
          %415 = sbr.rel (%p413) target = $region16
        $region15: #{tpu_custom_call.1} parent=11 // pred_region
          %s417 = ssub.s32 512, 512
          %418 = vsyncadd [#allocation3], %s417
          %s419 = sshll.u32 [#allocation2], 4
          %s420 = int_to_ptr.vmem [resolvable:$true] %s419
          %425 = dma.hbm_to_vmem [thread:$0]  %s0, 512, %s420, [#allocation3], 128, 128, 8
        $region16: #{tpu_custom_call.1} parent=11 // pred_fallthru
          _
        // Predicated region
        $region17: #{tpu_custom_call.1} parent=11 // pred_check
          %p426 = pneg %p65
        $region18: #{tpu_custom_call.1} parent=11 // pred_check_branch
          %428 = sbr.rel (%p426) target = $region20
        $region19: #{tpu_custom_call.1} parent=11 // pred_region
          %s430 = ssub.s32 32, 32
          %431 = vsyncadd [#allocation6], %s430
          %s432 = sshll.u32 [#allocation5], 4
          %s433 = int_to_ptr.vmem [resolvable:$true] %s432
          %438 = dma.hbm_to_vmem [thread:$0]  %s1, 32, %s433, [#allocation6], 16, 16, 1
        $region20: #{tpu_custom_call.1} parent=11 // pred_fallthru
          _
      $region12: #{tpu_custom_call.1} parent=5 // pred_fallthru
        _
      %p439 = scmp.lt.s32.totalorder %s23, 2
      // Predicated region
      $region21: #{tpu_custom_call.1} parent=5 // pred_check
        %p440 = pneg %p439
      $region22: #{tpu_custom_call.1} parent=5 // pred_check_branch
        %442 = sbr.rel (%p440) target = $region24
      $region23: #{tpu_custom_call.1} parent=5 // pred_region
        // Predicated region
        $region25: #{tpu_custom_call.1} parent=23 // pred_check
          %p443 = pneg %p85
        $region26: #{tpu_custom_call.1} parent=23 // pred_check_branch
          %445 = sbr.rel (%p443) target = $region28
        $region27: #{tpu_custom_call.1} parent=23 // pred_region
          %s446 = sand.u32 %s23, 1
          %s447 = scalar_lea.sflag [#allocation3], %s446
          %s448 = sand.u32 %s75, 1
          %s449 = smul.addr %s448, 192
          %s450 = scalar_lea.vmem [#allocation7], %s449
          %s452 = ssub.s32 3072, 3072
          %453 = vsyncadd %s447, %s452
          %s454 = smul.addr %s23, 48
          %s455 = smul.addr %s454, 64
          %s456 = scalar_lea.hbm %s2, %s455
          %s457 = sshll.u32 %s450, 4
          %s458 = int_to_ptr.vmem [resolvable:$true] %s457
          %463 = dma.hbm_to_vmem [thread:$0]  %s456, 3072, %s458, %s447, 192, 192, 12
        $region28: #{tpu_custom_call.1} parent=23 // pred_fallthru
          _
        // Predicated region
        $region29: #{tpu_custom_call.1} parent=23 // pred_check
          %p464 = pneg %p111
        $region30: #{tpu_custom_call.1} parent=23 // pred_check_branch
          %466 = sbr.rel (%p464) target = $region32
        $region31: #{tpu_custom_call.1} parent=23 // pred_region
          %p467 = scmp.lt.s32.totalorder %s23, 1
          %s468 = scalar_select %p467, %s23, 1
          %s469 = smul.addr %s468, 3
          %s470 = scalar_lea.vmem %s3, %s469
        $region32: #{tpu_custom_call.1} parent=23 // pred_fallthru
          _
        // Predicated region
        $region33: #{tpu_custom_call.1} parent=23 // pred_check
          %p471 = pneg %p137
        $region34: #{tpu_custom_call.1} parent=23 // pred_check_branch
          %473 = sbr.rel (%p471) target = $region36
        $region35: #{tpu_custom_call.1} parent=23 // pred_region
          %s474 = sand.u32 %s23, 1
          %s475 = scalar_lea.sflag [#allocation3], %s474
          %s476 = sand.u32 %s127, 1
          %s477 = smul.addr %s476, 64
          %s478 = scalar_lea.vmem [#allocation8], %s477
          %s480 = ssub.s32 1024, 1024
          %481 = vsyncadd %s475, %s480
          %s482 = smul.addr %s23, 16
          %s483 = smul.addr %s482, 64
          %s484 = scalar_lea.hbm %s4, %s483
          %s485 = sshll.u32 %s478, 4
          %s486 = int_to_ptr.vmem [resolvable:$true] %s485
          %491 = dma.hbm_to_vmem [thread:$0]  %s484, 1024, %s486, %s475, 64, 64, 4
        $region36: #{tpu_custom_call.1} parent=23 // pred_fallthru
          _
        // Predicated region
        $region37: #{tpu_custom_call.1} parent=23 // pred_check
          %p492 = pneg %p163
        $region38: #{tpu_custom_call.1} parent=23 // pred_check_branch
          %494 = sbr.rel (%p492) target = $region40
        $region39: #{tpu_custom_call.1} parent=23 // pred_region
          %p495 = scmp.lt.s32.totalorder %s23, 1
          %s496 = scalar_select %p495, %s23, 1
          %s497 = scalar_lea.vmem %s5, %s496
        $region40: #{tpu_custom_call.1} parent=23 // pred_fallthru
          _
        // Predicated region
        $region41: #{tpu_custom_call.1} parent=23 // pred_check
          %p498 = pneg %p189
        $region42: #{tpu_custom_call.1} parent=23 // pred_check_branch
          %500 = sbr.rel (%p498) target = $region44
        $region43: #{tpu_custom_call.1} parent=23 // pred_region
          %p501 = scmp.lt.s32.totalorder %s23, 1
          %s502 = scalar_select %p501, %s23, 1
          %s503 = scalar_lea.vmem %s6, %s502
        $region44: #{tpu_custom_call.1} parent=23 // pred_fallthru
          _
        // Predicated region
        $region45: #{tpu_custom_call.1} parent=23 // pred_check
          %p504 = pneg %p215
        $region46: #{tpu_custom_call.1} parent=23 // pred_check_branch
          %506 = sbr.rel (%p504) target = $region48
        $region47: #{tpu_custom_call.1} parent=23 // pred_region
          %p507 = scmp.lt.s32.totalorder %s23, 1
          %s508 = scalar_select %p507, %s23, 1
          %s509 = scalar_lea.vmem %s7, %s508
        $region48: #{tpu_custom_call.1} parent=23 // pred_fallthru
          _
        // Predicated region
        $region49: #{tpu_custom_call.1} parent=23 // pred_check
          %p510 = pneg %p241
        $region50: #{tpu_custom_call.1} parent=23 // pred_check_branch
          %512 = sbr.rel (%p510) target = $region52
        $region51: #{tpu_custom_call.1} parent=23 // pred_region
          %s513 = sand.u32 %s23, 1
          %s514 = scalar_lea.sflag [#allocation3], %s513
          %s515 = sand.u32 %s231, 1
          %s516 = smul.addr %s515, 256
          %s517 = scalar_lea.vmem [#allocation9], %s516
          %s519 = ssub.s32 4096, 4096
          %520 = vsyncadd %s514, %s519
          %s521 = smul.addr %s23, 64
          %s522 = smul.addr %s521, 64
          %s523 = scalar_lea.hbm %s8, %s522
          %s524 = sshll.u32 %s517, 4
          %s525 = int_to_ptr.vmem [resolvable:$true] %s524
          %530 = dma.hbm_to_vmem [thread:$0]  %s523, 4096, %s525, %s514, 256, 256, 16
        $region52: #{tpu_custom_call.1} parent=23 // pred_fallthru
          _
        // Predicated region
        $region53: #{tpu_custom_call.1} parent=23 // pred_check
          %p531 = pneg %p267
        $region54: #{tpu_custom_call.1} parent=23 // pred_check_branch
          %533 = sbr.rel (%p531) target = $region56
        $region55: #{tpu_custom_call.1} parent=23 // pred_region
          %p534 = scmp.lt.s32.totalorder %s23, 1
          %s535 = scalar_select %p534, %s23, 1
          %s536 = smul.addr %s535, 4
          %s537 = scalar_lea.vmem %s9, %s536
        $region56: #{tpu_custom_call.1} parent=23 // pred_fallthru
          _
        // Predicated region
        $region57: #{tpu_custom_call.1} parent=23 // pred_check
          %p538 = pneg %p293
        $region58: #{tpu_custom_call.1} parent=23 // pred_check_branch
          %540 = sbr.rel (%p538) target = $region60
        $region59: #{tpu_custom_call.1} parent=23 // pred_region
          %s541 = sand.u32 %s23, 1
          %s542 = scalar_lea.sflag [#allocation3], %s541
          %s543 = sand.u32 %s283, 1
          %s544 = smul.addr %s543, 256
          %s545 = scalar_lea.vmem [#allocation10], %s544
          %s547 = ssub.s32 4096, 4096
          %548 = vsyncadd %s542, %s547
          %s549 = smul.addr %s23, 64
          %s550 = smul.addr %s549, 64
          %s551 = scalar_lea.hbm %s10, %s550
          %s552 = sshll.u32 %s545, 4
          %s553 = int_to_ptr.vmem [resolvable:$true] %s552
          %558 = dma.hbm_to_vmem [thread:$0]  %s551, 4096, %s553, %s542, 64, 64, 4
        $region60: #{tpu_custom_call.1} parent=23 // pred_fallthru
          _
        // Predicated region
        $region61: #{tpu_custom_call.1} parent=23 // pred_check
          %p559 = pneg %p319
        $region62: #{tpu_custom_call.1} parent=23 // pred_check_branch
          %561 = sbr.rel (%p559) target = $region64
        $region63: #{tpu_custom_call.1} parent=23 // pred_region
          %p562 = scmp.lt.s32.totalorder %s23, 1
          %s563 = scalar_select %p562, %s23, 1
          %s564 = scalar_lea.vmem %s11, %s563
        $region64: #{tpu_custom_call.1} parent=23 // pred_fallthru
          _
        // Predicated region
        $region65: #{tpu_custom_call.1} parent=23 // pred_check
          %p565 = pneg %p345
        $region66: #{tpu_custom_call.1} parent=23 // pred_check_branch
          %567 = sbr.rel (%p565) target = $region68
        $region67: #{tpu_custom_call.1} parent=23 // pred_region
          %p568 = scmp.lt.s32.totalorder %s23, 1
          %s569 = scalar_select %p568, %s23, 1
          %s570 = scalar_lea.vmem %s12, %s569
        $region68: #{tpu_custom_call.1} parent=23 // pred_fallthru
          _
        // Predicated region
        $region69: #{tpu_custom_call.1} parent=23 // pred_check
          %p571 = pneg %p371
        $region70: #{tpu_custom_call.1} parent=23 // pred_check_branch
          %573 = sbr.rel (%p571) target = $region72
        $region71: #{tpu_custom_call.1} parent=23 // pred_region
          %p574 = scmp.lt.s32.totalorder %s23, 1
          %s575 = scalar_select %p574, %s23, 1
          %s576 = scalar_lea.vmem %s13, %s575
        $region72: #{tpu_custom_call.1} parent=23 // pred_fallthru
          _
      $region24: #{tpu_custom_call.1} parent=5 // pred_fallthru
        _
      %p577 = scmp.le.s32.totalorder 1, %s23
      %p578 = scmp.lt.s32.totalorder %s23, 3
      %p579 = pnand %p577, %p578
      %p580 = pneg %p579
      // Predicated region
      $region73: #{tpu_custom_call.1} parent=5 // pred_check
        _
      $region74: #{tpu_custom_call.1} parent=5 // pred_check_branch
        %582 = sbr.rel (%p579) target = $region76
      $region75: #{tpu_custom_call.1} parent=5 // pred_region
        %s583 = ssub.s32 %s23, 1
        // Predicated region
        $region77: #{tpu_custom_call.1} parent=75 // pred_check
          %p584 = pneg %p44
        $region78: #{tpu_custom_call.1} parent=75 // pred_check_branch
          %586 = sbr.rel (%p584) target = $region80
        $region79: #{tpu_custom_call.1} parent=75 // pred_region
          %587 = dma.done [#allocation3], 512
        $region80: #{tpu_custom_call.1} parent=75 // pred_fallthru
          _
        // Predicated region
        $region81: #{tpu_custom_call.1} parent=75 // pred_check
          %p588 = pneg %p65
        $region82: #{tpu_custom_call.1} parent=75 // pred_check_branch
          %590 = sbr.rel (%p588) target = $region84
        $region83: #{tpu_custom_call.1} parent=75 // pred_region
          %591 = dma.done [#allocation6], 32
        $region84: #{tpu_custom_call.1} parent=75 // pred_fallthru
          _
        %s592 = sand.u32 %s28, 1
        %s593 = scalar_lea.sflag [#allocation3], %s592
        %s594 = sand.u32 %s78, 1
        %s595 = smul.addr %s594, 192
        %s596 = scalar_lea.vmem [#allocation7], %s595
        // Predicated region
        $region85: #{tpu_custom_call.1} parent=75 // pred_check
          %p597 = pneg %p91
        $region86: #{tpu_custom_call.1} parent=75 // pred_check_branch
          %599 = sbr.rel (%p597) target = $region88
        $region87: #{tpu_custom_call.1} parent=75 // pred_region
          %600 = dma.done %s593, 3072
        $region88: #{tpu_custom_call.1} parent=75 // pred_fallthru
          _
        %s601 = sand.u32 %s28, 1
        %s602 = scalar_lea.sflag [#allocation3], %s601
        %s603 = sand.u32 %s130, 1
        %s604 = smul.addr %s603, 64
        %s605 = scalar_lea.vmem [#allocation8], %s604
        // Predicated region
        $region89: #{tpu_custom_call.1} parent=75 // pred_check
          %p606 = pneg %p143
        $region90: #{tpu_custom_call.1} parent=75 // pred_check_branch
          %608 = sbr.rel (%p606) target = $region92
        $region91: #{tpu_custom_call.1} parent=75 // pred_region
          %609 = dma.done %s602, 1024
        $region92: #{tpu_custom_call.1} parent=75 // pred_fallthru
          _
        %s610 = sand.u32 %s28, 1
        %s611 = scalar_lea.sflag [#allocation3], %s610
        %s612 = sand.u32 %s234, 1
        %s613 = smul.addr %s612, 256
        %s614 = scalar_lea.vmem [#allocation9], %s613
        // Predicated region
        $region93: #{tpu_custom_call.1} parent=75 // pred_check
          %p615 = pneg %p247
        $region94: #{tpu_custom_call.1} parent=75 // pred_check_branch
          %617 = sbr.rel (%p615) target = $region96
        $region95: #{tpu_custom_call.1} parent=75 // pred_region
          %618 = dma.done %s611, 4096
        $region96: #{tpu_custom_call.1} parent=75 // pred_fallthru
          _
        %s619 = sand.u32 %s28, 1
        %s620 = scalar_lea.sflag [#allocation3], %s619
        %s621 = sand.u32 %s286, 1
        %s622 = smul.addr %s621, 256
        %s623 = scalar_lea.vmem [#allocation10], %s622
        // Predicated region
        $region97: #{tpu_custom_call.1} parent=75 // pred_check
          %p624 = pneg %p299
        $region98: #{tpu_custom_call.1} parent=75 // pred_check_branch
          %626 = sbr.rel (%p624) target = $region100
        $region99: #{tpu_custom_call.1} parent=75 // pred_region
          %627 = dma.done %s620, 4096
        $region100: #{tpu_custom_call.1} parent=75 // pred_fallthru
          _
        %p628 = pneg %p44
        %p629 = pneg %p41
        %p630 = pneg %p65
        %p631 = pneg %p62
        %s632 = sand.u32 %s28, 1
        %s633 = scalar_lea.sflag [#allocation3], %s632
        %s634 = sand.u32 %s78, 1
        %s635 = smul.addr %s634, 192
        %s636 = scalar_lea.vmem [#allocation7], %s635
        %p637 = pneg %p91
        %p638 = pneg %p88
        %p639 = scmp.lt.s32.totalorder %s28, 1
        %s640 = scalar_select %p639, %s28, 1
        %s641 = smul.addr %s640, 3
        %s642 = scalar_lea.vmem %s3, %s641
        %p643 = pneg %p117
        %p644 = pneg %p114
        %s645 = sand.u32 %s28, 1
        %s646 = scalar_lea.sflag [#allocation3], %s645
        %s647 = sand.u32 %s130, 1
        %s648 = smul.addr %s647, 64
        %s649 = scalar_lea.vmem [#allocation8], %s648
        %p650 = pneg %p143
        %p651 = pneg %p140
        %p652 = scmp.lt.s32.totalorder %s28, 1
        %s653 = scalar_select %p652, %s28, 1
        %s654 = scalar_lea.vmem %s5, %s653
        %p655 = pneg %p169
        %p656 = pneg %p166
        %p657 = scmp.lt.s32.totalorder %s28, 1
        %s658 = scalar_select %p657, %s28, 1
        %s659 = scalar_lea.vmem %s6, %s658
        %p660 = pneg %p195
        %p661 = pneg %p192
        %p662 = scmp.lt.s32.totalorder %s28, 1
        %s663 = scalar_select %p662, %s28, 1
        %s664 = scalar_lea.vmem %s7, %s663
        %p665 = pneg %p221
        %p666 = pneg %p218
        %s667 = sand.u32 %s28, 1
        %s668 = scalar_lea.sflag [#allocation3], %s667
        %s669 = sand.u32 %s234, 1
        %s670 = smul.addr %s669, 256
        %s671 = scalar_lea.vmem [#allocation9], %s670
        %p672 = pneg %p247
        %p673 = pneg %p244
        %p674 = scmp.lt.s32.totalorder %s28, 1
        %s675 = scalar_select %p674, %s28, 1
        %s676 = smul.addr %s675, 4
        %s677 = scalar_lea.vmem %s9, %s676
        %p678 = pneg %p273
        %p679 = pneg %p270
        %s680 = sand.u32 %s28, 1
        %s681 = scalar_lea.sflag [#allocation3], %s680
        %s682 = sand.u32 %s286, 1
        %s683 = smul.addr %s682, 256
        %s684 = scalar_lea.vmem [#allocation10], %s683
        %p685 = pneg %p299
        %p686 = pneg %p296
        %p687 = scmp.lt.s32.totalorder %s28, 1
        %s688 = scalar_select %p687, %s28, 1
        %s689 = scalar_lea.vmem %s11, %s688
        %p690 = pneg %p325
        %p691 = pneg %p322
        %p692 = scmp.lt.s32.totalorder %s28, 1
        %s693 = scalar_select %p692, %s28, 1
        %s694 = scalar_lea.vmem %s12, %s693
        %p695 = pneg %p351
        %p696 = pneg %p348
        %p697 = scmp.lt.s32.totalorder %s28, 1
        %s698 = scalar_select %p697, %s28, 1
        %s699 = scalar_lea.vmem %s13, %s698
        %p700 = pneg %p377
        %p701 = pneg %p374
        %p702 = pneg %p398
        %p703 = pneg %p395
        %p704 = scmp.lt.s32.totalorder %s28, 1
        %s705 = scalar_select %p704, %s28, 1
        %s706 = smul.addr %s705, 3
        %s707 = scalar_lea.vmem %s3, %s706
        %p708 = scmp.lt.s32.totalorder %s28, 1
        %s709 = scalar_select %p708, %s28, 1
        %s710 = scalar_lea.vmem %s5, %s709
        %p711 = scmp.lt.s32.totalorder %s28, 1
        %s712 = scalar_select %p711, %s28, 1
        %s713 = scalar_lea.vmem %s6, %s712
        %p714 = scmp.lt.s32.totalorder %s28, 1
        %s715 = scalar_select %p714, %s28, 1
        %s716 = scalar_lea.vmem %s7, %s715
        %p717 = scmp.lt.s32.totalorder %s28, 1
        %s718 = scalar_select %p717, %s28, 1
        %s719 = smul.addr %s718, 4
        %s720 = scalar_lea.vmem %s9, %s719
        %p721 = scmp.lt.s32.totalorder %s28, 1
        %s722 = scalar_select %p721, %s28, 1
        %s723 = scalar_lea.vmem %s11, %s722
        %p724 = scmp.lt.s32.totalorder %s28, 1
        %s725 = scalar_select %p724, %s28, 1
        %s726 = scalar_lea.vmem %s12, %s725
        %p727 = scmp.lt.s32.totalorder %s28, 1
        %s728 = scalar_select %p727, %s28, 1
        %s729 = scalar_lea.vmem %s13, %s728
        %p731 = scmp.eq.s32.totalorder %s28, 0
        // Predicated region
        $region101: #{tpu_custom_call.1} parent=75 // pred_check
          %p732 = pneg %p731
        $region102: #{tpu_custom_call.1} parent=75 // pred_check_branch
          %734 = sbr.rel (%p732) target = $region104
        $region103: #{tpu_custom_call.1} parent=75 // pred_region
          %v735 = vld [vmem:[#allocation2] sm:$0xff]
          %v736 = vld [vmem:[#allocation2 + $0x8] sm:$0xff]
          %v737 = vld [vmem:[#allocation2 + $0x10] sm:$0xff]
          %v738 = vld [vmem:[#allocation2 + $0x18] sm:$0xff]
          %739 = vst [vmem:[#allocation11] sm:$0xff] %v735
          %740 = vst [vmem:[#allocation11 + $0x8] sm:$0xff] %v736
          %741 = vst [vmem:[#allocation11 + $0x10] sm:$0xff] %v737
          %742 = vst [vmem:[#allocation11 + $0x18] sm:$0xff] %v738
        $region104: #{tpu_custom_call.1} parent=75 // pred_fallthru
          _
        %v743 = vld [vmem:[#allocation11] sm:$0xff]
        %v744 = vld [vmem:[#allocation11 + $0x8] sm:$0xff]
        %v745 = vld [vmem:[#allocation11 + $0x10] sm:$0xff]
        %v746 = vld [vmem:[#allocation11 + $0x18] sm:$0xff]
        %v747 = vpack.c.bf16 %v744, %v743
        %v748 = vpack.c.bf16 %v746, %v745
        %v749 = vld [vmem:[%s596] sm:$0xff]
        %v750 = vld [vmem:[%s596 + $0x8] sm:$0xf]
        %v751 = vld [vmem:[%s596 + $0xc] sm:$0xff]
        %v752 = vld [vmem:[%s596 + $0x14] sm:$0xf]
        %v753 = vld [vmem:[%s596 + $0x18] sm:$0xff]
        %v754 = vld [vmem:[%s596 + $0x20] sm:$0xf]
        %v755 = vld [vmem:[%s596 + $0x24] sm:$0xff]
        %v756 = vld [vmem:[%s596 + $0x2c] sm:$0xf]
        %v757 = vld [vmem:[%s596 + $0x30] sm:$0xff]
        %v758 = vld [vmem:[%s596 + $0x38] sm:$0xf]
        %v759 = vld [vmem:[%s596 + $0x3c] sm:$0xff]
        %v760 = vld [vmem:[%s596 + $0x44] sm:$0xf]
        %v761 = vld [vmem:[%s596 + $0x48] sm:$0xff]
        %v762 = vld [vmem:[%s596 + $0x50] sm:$0xf]
        %v763 = vld [vmem:[%s596 + $0x54] sm:$0xff]
        %v764 = vld [vmem:[%s596 + $0x5c] sm:$0xf]
        %v765 = vld [vmem:[%s596 + $0x60] sm:$0xff]
        %v766 = vld [vmem:[%s596 + $0x68] sm:$0xf]
        %v767 = vld [vmem:[%s596 + $0x6c] sm:$0xff]
        %v768 = vld [vmem:[%s596 + $0x74] sm:$0xf]
        %v769 = vld [vmem:[%s596 + $0x78] sm:$0xff]
        %v770 = vld [vmem:[%s596 + $0x80] sm:$0xf]
        %v771 = vld [vmem:[%s596 + $0x84] sm:$0xff]
        %v772 = vld [vmem:[%s596 + $0x8c] sm:$0xf]
        %v773 = vld [vmem:[%s596 + $0x90] sm:$0xff]
        %v774 = vld [vmem:[%s596 + $0x98] sm:$0xf]
        %v775 = vld [vmem:[%s596 + $0x9c] sm:$0xff]
        %v776 = vld [vmem:[%s596 + $0xa4] sm:$0xf]
        %v777 = vld [vmem:[%s596 + $0xa8] sm:$0xff]
        %v778 = vld [vmem:[%s596 + $0xb0] sm:$0xf]
        %v779 = vld [vmem:[%s596 + $0xb4] sm:$0xff]
        %v780 = vld [vmem:[%s596 + $0xbc] sm:$0xf]
        %v781 = vld [vmem:[%s707] sm:$0x7]
        %v783 = vlaneseq
        %v784 = vshrl.u32 %v783, 7
        %v785 = vsub.s32 0, %v784
        %v786 = vrot.slane %v781, %v785
        %v787 = vlaneseq
        %v788 = vshrl.u32 %v787, 7
        %v789 = vsub.s32 1, %v788
        %v790 = vrot.slane %v781, %v789
        %v791 = vlaneseq
        %v792 = vshrl.u32 %v791, 7
        %v793 = vsub.s32 2, %v792
        %v794 = vrot.slane %v781, %v793
        %v830 = vunpack.c.l.b16 %v749
        %v831 = vunpack.c.h.b16 %v749
        %v832 = vunpack.c.l.b16 %v750
        %v833 = vunpack.c.l.b16 %v751
        %v834 = vunpack.c.h.b16 %v751
        %v835 = vunpack.c.l.b16 %v752
        %v836 = vunpack.c.l.b16 %v753
        %v837 = vunpack.c.h.b16 %v753
        %v838 = vunpack.c.l.b16 %v754
        %v839 = vunpack.c.l.b16 %v755
        %v840 = vunpack.c.h.b16 %v755
        %v841 = vunpack.c.l.b16 %v756
        %v842 = vunpack.c.l.b16 %v757
        %v843 = vunpack.c.h.b16 %v757
        %v844 = vunpack.c.l.b16 %v758
        %v845 = vunpack.c.l.b16 %v759
        %v846 = vunpack.c.h.b16 %v759
        %v847 = vunpack.c.l.b16 %v760
        %v848 = vunpack.c.l.b16 %v761
        %v849 = vunpack.c.h.b16 %v761
        %v850 = vunpack.c.l.b16 %v762
        %v851 = vunpack.c.l.b16 %v763
        %v852 = vunpack.c.h.b16 %v763
        %v853 = vunpack.c.l.b16 %v764
        %v854 = vunpack.c.l.b16 %v765
        %v855 = vunpack.c.h.b16 %v765
        %v856 = vunpack.c.l.b16 %v766
        %v857 = vunpack.c.l.b16 %v767
        %v858 = vunpack.c.h.b16 %v767
        %v859 = vunpack.c.l.b16 %v768
        %v860 = vunpack.c.l.b16 %v769
        %v861 = vunpack.c.h.b16 %v769
        %v862 = vunpack.c.l.b16 %v770
        %v863 = vunpack.c.l.b16 %v771
        %v864 = vunpack.c.h.b16 %v771
        %v865 = vunpack.c.l.b16 %v772
        %v866 = vunpack.c.l.b16 %v773
        %v867 = vunpack.c.h.b16 %v773
        %v868 = vunpack.c.l.b16 %v774
        %v869 = vunpack.c.l.b16 %v775
        %v870 = vunpack.c.h.b16 %v775
        %v871 = vunpack.c.l.b16 %v776
        %v872 = vunpack.c.l.b16 %v777
        %v873 = vunpack.c.h.b16 %v777
        %v874 = vunpack.c.l.b16 %v778
        %v875 = vunpack.c.l.b16 %v779
        %v876 = vunpack.c.h.b16 %v779
        %v877 = vunpack.c.l.b16 %v780
        %v878 = vpack.c.b16 %v833, %v830
        %v879 = vpack.c.b16 %v834, %v831
        %v880 = vpack.c.b16 %v835, %v832
        %v881 = vpack.c.b16 %v839, %v836
        %v882 = vpack.c.b16 %v840, %v837
        %v883 = vpack.c.b16 %v841, %v838
        %v884 = vpack.c.b16 %v845, %v842
        %v885 = vpack.c.b16 %v846, %v843
        %v886 = vpack.c.b16 %v847, %v844
        %v887 = vpack.c.b16 %v851, %v848
        %v888 = vpack.c.b16 %v852, %v849
        %v889 = vpack.c.b16 %v853, %v850
        %v890 = vpack.c.b16 %v857, %v854
        %v891 = vpack.c.b16 %v858, %v855
        %v892 = vpack.c.b16 %v859, %v856
        %v893 = vpack.c.b16 %v863, %v860
        %v894 = vpack.c.b16 %v864, %v861
        %v895 = vpack.c.b16 %v865, %v862
        %v896 = vpack.c.b16 %v869, %v866
        %v897 = vpack.c.b16 %v870, %v867
        %v898 = vpack.c.b16 %v871, %v868
        %v899 = vpack.c.b16 %v875, %v872
        %v900 = vpack.c.b16 %v876, %v873
        %v901 = vpack.c.b16 %v877, %v874
        %926 = vmatprep.subr.bf16.mxu0 %v879
        %927 = vmatpush1.bf16.msra.mxu0 %v878
        %928 = vmatprep.subr.bf16.mxu0 %v882
        %929 = vmatpush1.bf16.msra.mxu0 %v881
        %930 = vmatprep.subr.bf16.mxu0 %v885
        %931 = vmatpush1.bf16.msra.mxu0 %v884
        %932 = vmatprep.subr.bf16.mxu0 %v888
        %933 = vmatpush1.bf16.msra.mxu0 %v887
        %934 = vmatprep.subr.bf16.mxu0 %v891
        %935 = vmatpush1.bf16.msra.mxu0 %v890
        %936 = vmatprep.subr.bf16.mxu0 %v894
        %937 = vmatpush1.bf16.msra.mxu0 %v893
        %938 = vmatprep.subr.bf16.mxu0 %v897
        %939 = vmatpush1.bf16.msra.mxu0 %v896
        %940 = vmatprep.subr.bf16.mxu0 %v900
        %941 = vmatpush1.bf16.msra.mxu0 %v899
        %942 = vmatprep.subr.bf16.mxu0 0
        %943 = vmatpush1.bf16.msra.mxu0 0
        %944 = vmatprep.subr.bf16.mxu0 0
        %945 = vmatpush1.bf16.msra.mxu0 0
        %946 = vmatprep.subr.bf16.mxu0 0
        %947 = vmatpush1.bf16.msra.mxu0 0
        %948 = vmatprep.subr.bf16.mxu0 0
        %949 = vmatpush1.bf16.msra.mxu0 0
        %950 = vmatprep.subr.bf16.mxu0 0
        %951 = vmatpush1.bf16.msra.mxu0 0
        %952 = vmatprep.subr.bf16.mxu0 0
        %953 = vmatpush1.bf16.msra.mxu0 0
        %954 = vmatprep.subr.bf16.mxu0 0
        %955 = vmatpush1.bf16.msra.mxu0 0
        %956 = vmatprep.subr.bf16.mxu0 0
        %957 = vmatpush1.bf16.msra.mxu0 0
        %958 = vmatprep.mubr.bf16.mxu0 0
        %959 = vmatmul.mubr.bf16.gmra.mrb[0].mxu0 %v747
        %v960 = vpop.f32.mrb[0].mxu0
        %v961 = vadd.f32 %v786, %v960
        %v962 = vpop.f32.mrb[0].mxu0
        %v963 = vadd.f32 %v790, %v962
        %v964 = vpop.f32.mrb[0].mxu0
        %v965 = vadd.f32 %v786, %v964
        %v966 = vpop.f32.mrb[0].mxu0
        %v967 = vadd.f32 %v790, %v966
        %968 = vmatprep.mubr.bf16.mxu0 0
        %969 = vmatmul.mubr.bf16.gmra.mrb[0].mxu0 %v748
        %v970 = vpop.f32.mrb[0].mxu0
        %v971 = vadd.f32 %v786, %v970
        %v972 = vpop.f32.mrb[0].mxu0
        %v973 = vadd.f32 %v790, %v972
        %v974 = vpop.f32.mrb[0].mxu0
        %v975 = vadd.f32 %v786, %v974
        %v976 = vpop.f32.mrb[0].mxu0
        %v977 = vadd.f32 %v790, %v976
        %978 = vdwg.mxu0
        %979 = vmatprep.subr.bf16.mxu0 0
        %980 = vmatpush1.bf16.msra.mxu0 %v880
        %981 = vmatprep.subr.bf16.mxu0 0
        %982 = vmatpush1.bf16.msra.mxu0 %v883
        %983 = vmatprep.subr.bf16.mxu0 0
        %984 = vmatpush1.bf16.msra.mxu0 %v886
        %985 = vmatprep.subr.bf16.mxu0 0
        %986 = vmatpush1.bf16.msra.mxu0 %v889
        %987 = vmatprep.subr.bf16.mxu0 0
        %988 = vmatpush1.bf16.msra.mxu0 %v892
        %989 = vmatprep.subr.bf16.mxu0 0
        %990 = vmatpush1.bf16.msra.mxu0 %v895
        %991 = vmatprep.subr.bf16.mxu0 0
        %992 = vmatpush1.bf16.msra.mxu0 %v898
        %993 = vmatprep.subr.bf16.mxu0 0
        %994 = vmatpush1.bf16.msra.mxu0 %v901
        %995 = vmatprep.subr.bf16.mxu0 0
        %996 = vmatpush1.bf16.msra.mxu0 0
        %997 = vmatprep.subr.bf16.mxu0 0
        %998 = vmatpush1.bf16.msra.mxu0 0
        %999 = vmatprep.subr.bf16.mxu0 0
        %1000 = vmatpush1.bf16.msra.mxu0 0
        %1001 = vmatprep.subr.bf16.mxu0 0
        %1002 = vmatpush1.bf16.msra.mxu0 0
        %1003 = vmatprep.subr.bf16.mxu0 0
        %1004 = vmatpush1.bf16.msra.mxu0 0
        %1005 = vmatprep.subr.bf16.mxu0 0
        %1006 = vmatpush1.bf16.msra.mxu0 0
        %1007 = vmatprep.subr.bf16.mxu0 0
        %1008 = vmatpush1.bf16.msra.mxu0 0
        %1009 = vmatprep.subr.bf16.mxu0 0
        %1010 = vmatpush1.bf16.msra.mxu0 0
        %1011 = vmatprep.mubr.bf16.mxu0 0
        %1012 = vmatmul.mubr.bf16.gmra.mrb[0].mxu0 %v747
        %v1013 = vpop.f32.mrb[0].mxu0
        %v1014 = vadd.f32 %v794, %v1013
        %v1015 = vpop.f32.mrb[0].mxu0
        %v1016 = vpop.f32.mrb[0].mxu0
        %v1017 = vadd.f32 %v794, %v1016
        %v1018 = vpop.f32.mrb[0].mxu0
        %1019 = vmatprep.mubr.bf16.mxu0 0
        %1020 = vmatmul.mubr.bf16.gmra.mrb[0].mxu0 %v748
        %v1021 = vpop.f32.mrb[0].mxu0
        %v1022 = vadd.f32 %v794, %v1021
        %v1023 = vpop.f32.mrb[0].mxu0
        %v1024 = vpop.f32.mrb[0].mxu0
        %v1025 = vadd.f32 %v794, %v1024
        %v1026 = vpop.f32.mrb[0].mxu0
        %1027 = vdwg.mxu0
        %v1028 = vld [vmem:[#allocation5] sm:$0x1]
        %v1029 = vld [vmem:[#allocation5 + $0x1] sm:$0x1]
        %v1030 = vlaneseq
        %v1031 = vand.u32 %v1030, 127
        %vm1032 = vcmp.ge.s32.totalorder %v1031, 0
        %vm1033 = vcmp.lt.s32.totalorder %v1031, 32
        %vm1034 = vmand %vm1032, %vm1033
        %v1035 = vsel %vm1034, 1, 0
        %v1036 = vcvt.s32.f32 %v1035
        %vm1037 = vcmp.ge.s32.totalorder %v1031, 32
        %vm1038 = vcmp.lt.s32.totalorder %v1031, 64
        %vm1039 = vmand %vm1037, %vm1038
        %v1040 = vsel %vm1039, 1, 0
        %v1041 = vcvt.s32.f32 %v1040
        %vm1042 = vcmp.ge.s32.totalorder %v1031, 64
        %vm1043 = vcmp.lt.s32.totalorder %v1031, 96
        %vm1044 = vmand %vm1042, %vm1043
        %v1045 = vsel %vm1044, 1, 0
        %v1046 = vcvt.s32.f32 %v1045
        %vm1047 = vcmp.ge.s32.totalorder %v1031, 96
        %vm1048 = vcmp.lt.s32.totalorder %v1031, 128
        %vm1049 = vmand %vm1047, %vm1048
        %v1050 = vsel %vm1049, 1, 0
        %v1051 = vcvt.s32.f32 %v1050
        %v1052 = vmul.f32 %v961, %v1036
        %v1053 = vmul.f32 %v965, %v1036
        %v1054 = vmul.f32 %v971, %v1036
        %v1055 = vmul.f32 %v975, %v1036
        %1056 = vmatprep.subr.mxu0 0.0
        %1057 = vmatpush1.xpose.msra.mxu0 %v963
        %1058 = vmatprep.subr.mxu0 0.0
        %1059 = vmatpush1.xpose.msra.mxu0 %v967
        %1060 = vmatprep.subr.mxu0 0.0
        %1061 = vmatpush1.xpose.msra.mxu0 0.0
        %1062 = vmatprep.subr.mxu0 0.0
        %1063 = vmatpush1.xpose.msra.mxu0 0.0
        %1064 = vmatprep.subr.mxu0 0.0
        %1065 = vmatpush1.xpose.msra.mxu0 0.0
        %1066 = vmatprep.subr.mxu0 0.0
        %1067 = vmatpush1.xpose.msra.mxu0 0.0
        %1068 = vmatprep.subr.mxu0 0.0
        %1069 = vmatpush1.xpose.msra.mxu0 0.0
        %1070 = vmatprep.subr.mxu0 0.0
        %1071 = vmatpush1.xpose.msra.mxu0 0.0
        %1072 = vmatprep.subr.mxu0 0.0
        %1073 = vmatpush1.xpose.msra.mxu0 0.0
        %1074 = vmatprep.subr.mxu0 0.0
        %1075 = vmatpush1.xpose.msra.mxu0 0.0
        %1076 = vmatprep.subr.mxu0 0.0
        %1077 = vmatpush1.xpose.msra.mxu0 0.0
        %1078 = vmatprep.subr.mxu0 0.0
        %1079 = vmatpush1.xpose.msra.mxu0 0.0
        %1080 = vmatprep.subr.mxu0 0.0
        %1081 = vmatpush1.xpose.msra.mxu0 0.0
        %1082 = vmatprep.subr.mxu0 0.0
        %1083 = vmatpush1.xpose.msra.mxu0 0.0
        %1084 = vmatprep.subr.mxu0 0.0
        %1085 = vmatpush1.xpose.msra.mxu0 0.0
        %1086 = vmatprep.subr.mxu0 0.0
        %1087 = vmatpush1.xpose.msra.mxu0 0.0
        %1088 = vmatprep.subr.mxu0 0.0
        %1089 = vmatpush1.xpose.msra.mxu0 0.0
        %1090 = vmatprep.subr.mxu0 0.0
        %1091 = vmatpush1.xpose.msra.mxu0 0.0
        %1092 = vmatprep.subr.mxu0 0.0
        %1093 = vmatpush1.xpose.msra.mxu0 0.0
        %1094 = vmatprep.subr.mxu0 0.0
        %1095 = vmatpush1.xpose.msra.mxu0 0.0
        %1096 = vmatprep.subr.mxu0 0.0
        %1097 = vmatpush1.xpose.msra.mxu0 0.0
        %1098 = vmatprep.subr.mxu0 0.0
        %1099 = vmatpush1.xpose.msra.mxu0 0.0
        %1100 = vmatprep.subr.mxu0 0.0
        %1101 = vmatpush1.xpose.msra.mxu0 0.0
        %1102 = vmatprep.subr.mxu0 0.0
        %1103 = vmatpush1.xpose.msra.mxu0 0.0
        %1104 = vmatprep.subr.mxu0 0.0
        %1105 = vmatpush1.xpose.msra.mxu0 0.0
        %1106 = vmatprep.subr.mxu0 0.0
        %1107 = vmatpush1.xpose.msra.mxu0 0.0
        %1108 = vmatprep.subr.mxu0 0.0
        %1109 = vmatpush1.xpose.msra.mxu0 0.0
        %1110 = vmatprep.subr.mxu0 0.0
        %1111 = vmatpush1.xpose.msra.mxu0 0.0
        %1112 = vmatprep.subr.mxu0 0.0
        %1113 = vmatpush1.xpose.msra.mxu0 0.0
        %1114 = vmatprep.subr.mxu0 0.0
        %1115 = vmatpush1.xpose.msra.mxu0 0.0
        %1116 = vmatprep.subr.mxu0 0.0
        %1117 = vmatpush1.xpose.msra.mxu0 0.0
        %1118 = vmatprep.subr.mxu0 0.0
        %1119 = vmatpush1.xpose.msra.mxu0 0.0
        %1120 = vmatprep.mubr.f32.mxu0 0.0
        %1121 = vmatmul.mubr.f32.gmra.mrb[0].mxu0 %v1052
        %v1122 = vpop.f32.mrb[0].mxu0
        %v1123 = vadd.f32 0.0, %v1122
        %v1124 = vpop.f32.mrb[0].mxu0
        %1125 = vmatprep.mubr.f32.mxu0 0.0
        %1126 = vmatmul.mubr.f32.gmra.mrb[0].mxu0 %v1053
        %v1127 = vpop.f32.mrb[0].mxu0
        %v1128 = vadd.f32 0.0, %v1127
        %v1129 = vpop.f32.mrb[0].mxu0
        %1130 = vdwg.mxu0
        %1131 = vmatprep.subr.mxu0 0.0
        %1132 = vmatpush1.xpose.msra.mxu0 %v973
        %1133 = vmatprep.subr.mxu0 0.0
        %1134 = vmatpush1.xpose.msra.mxu0 %v977
        %1135 = vmatprep.subr.mxu0 0.0
        %1136 = vmatpush1.xpose.msra.mxu0 0.0
        %1137 = vmatprep.subr.mxu0 0.0
        %1138 = vmatpush1.xpose.msra.mxu0 0.0
        %1139 = vmatprep.subr.mxu0 0.0
        %1140 = vmatpush1.xpose.msra.mxu0 0.0
        %1141 = vmatprep.subr.mxu0 0.0
        %1142 = vmatpush1.xpose.msra.mxu0 0.0
        %1143 = vmatprep.subr.mxu0 0.0
        %1144 = vmatpush1.xpose.msra.mxu0 0.0
        %1145 = vmatprep.subr.mxu0 0.0
        %1146 = vmatpush1.xpose.msra.mxu0 0.0
        %1147 = vmatprep.subr.mxu0 0.0
        %1148 = vmatpush1.xpose.msra.mxu0 0.0
        %1149 = vmatprep.subr.mxu0 0.0
        %1150 = vmatpush1.xpose.msra.mxu0 0.0
        %1151 = vmatprep.subr.mxu0 0.0
        %1152 = vmatpush1.xpose.msra.mxu0 0.0
        %1153 = vmatprep.subr.mxu0 0.0
        %1154 = vmatpush1.xpose.msra.mxu0 0.0
        %1155 = vmatprep.subr.mxu0 0.0
        %1156 = vmatpush1.xpose.msra.mxu0 0.0
        %1157 = vmatprep.subr.mxu0 0.0
        %1158 = vmatpush1.xpose.msra.mxu0 0.0
        %1159 = vmatprep.subr.mxu0 0.0
        %1160 = vmatpush1.xpose.msra.mxu0 0.0
        %1161 = vmatprep.subr.mxu0 0.0
        %1162 = vmatpush1.xpose.msra.mxu0 0.0
        %1163 = vmatprep.subr.mxu0 0.0
        %1164 = vmatpush1.xpose.msra.mxu0 0.0
        %1165 = vmatprep.subr.mxu0 0.0
        %1166 = vmatpush1.xpose.msra.mxu0 0.0
        %1167 = vmatprep.subr.mxu0 0.0
        %1168 = vmatpush1.xpose.msra.mxu0 0.0
        %1169 = vmatprep.subr.mxu0 0.0
        %1170 = vmatpush1.xpose.msra.mxu0 0.0
        %1171 = vmatprep.subr.mxu0 0.0
        %1172 = vmatpush1.xpose.msra.mxu0 0.0
        %1173 = vmatprep.subr.mxu0 0.0
        %1174 = vmatpush1.xpose.msra.mxu0 0.0
        %1175 = vmatprep.subr.mxu0 0.0
        %1176 = vmatpush1.xpose.msra.mxu0 0.0
        %1177 = vmatprep.subr.mxu0 0.0
        %1178 = vmatpush1.xpose.msra.mxu0 0.0
        %1179 = vmatprep.subr.mxu0 0.0
        %1180 = vmatpush1.xpose.msra.mxu0 0.0
        %1181 = vmatprep.subr.mxu0 0.0
        %1182 = vmatpush1.xpose.msra.mxu0 0.0
        %1183 = vmatprep.subr.mxu0 0.0
        %1184 = vmatpush1.xpose.msra.mxu0 0.0
        %1185 = vmatprep.subr.mxu0 0.0
        %1186 = vmatpush1.xpose.msra.mxu0 0.0
        %1187 = vmatprep.subr.mxu0 0.0
        %1188 = vmatpush1.xpose.msra.mxu0 0.0
        %1189 = vmatprep.subr.mxu0 0.0
        %1190 = vmatpush1.xpose.msra.mxu0 0.0
        %1191 = vmatprep.subr.mxu0 0.0
        %1192 = vmatpush1.xpose.msra.mxu0 0.0
        %1193 = vmatprep.subr.mxu0 0.0
        %1194 = vmatpush1.xpose.msra.mxu0 0.0
        %1195 = vmatprep.mubr.f32.mxu0 0.0
        %1196 = vmatmul.mubr.f32.gmra.mrb[0].mxu0 %v1054
        %v1197 = vpop.f32.mrb[0].mxu0
        %v1198 = vadd.f32 0.0, %v1197
        %v1199 = vpop.f32.mrb[0].mxu0
        %1200 = vmatprep.mubr.f32.mxu0 0.0
        %1201 = vmatmul.mubr.f32.gmra.mrb[0].mxu0 %v1055
        %v1202 = vpop.f32.mrb[0].mxu0
        %v1203 = vadd.f32 0.0, %v1202
        %v1204 = vpop.f32.mrb[0].mxu0
        %1205 = vdwg.mxu0
        %v1206 = vmul.f32 %v1123, 0.17677669
        %v1207 = vmul.f32 %v1128, 0.17677669
        %v1208 = vmul.f32 %v1198, 0.17677669
        %v1209 = vmul.f32 %v1203, 0.17677669
        %v1212 = vlaneseq
        %v1213 = vshrl.u32 %v1212, 7
        %v1214 = vsub.s32 0, %v1213
        %v1215 = vrot.slane %v1028, %v1214
        %v1216 = vlaneseq
        %v1217 = vshrl.u32 %v1216, 7
        %v1218 = vsub.s32 0, %v1217
        %v1219 = vrot.slane %v1029, %v1218
        %v1222 = vadd.f32 %v1206, %v1215
        %v1223 = vadd.f32 %v1207, %v1215
        %v1224 = vadd.f32 %v1208, %v1219
        %v1225 = vadd.f32 %v1209, %v1219
        %vm1226 = vcmask 130048
        %v1227 = vsel %vm1226, %v1222, -inf
        %1228 = vmax.xlane.f32.xlu0 %v1227
        %v1229 = vpop.xlane.xlu0 %1228
        %v1230 = vsel %vm1226, %v1223, -inf
        %1231 = vmax.xlane.f32.xlu0 %v1230
        %v1232 = vpop.xlane.xlu0 %1231
        %v1233 = vsel %vm1226, %v1224, -inf
        %1234 = vmax.xlane.f32.xlu0 %v1233
        %v1235 = vpop.xlane.xlu0 %1234
        %v1236 = vsel %vm1226, %v1225, -inf
        %1237 = vmax.xlane.f32.xlu0 %v1236
        %v1238 = vpop.xlane.xlu0 %1237
        %v1239 = vsub.f32 %v1222, %v1229
        %v1240 = vsub.f32 %v1223, %v1232
        %v1241 = vsub.f32 %v1224, %v1235
        %v1242 = vsub.f32 %v1225, %v1238
        %v1243 = vmul.f32 %v1239, 1.442695
        %v1244 = vpow.pop %v1243
        %v1245 = vmul.f32 %v1240, 1.442695
        %v1246 = vpow.pop %v1245
        %v1247 = vmul.f32 %v1241, 1.442695
        %v1248 = vpow.pop %v1247
        %v1249 = vmul.f32 %v1242, 1.442695
        %v1250 = vpow.pop %v1249
        %v1251 = vsel %vm1226, %v1244, 0.0
        %1252 = vadd.xlane.f32.xlu0 %v1251
        %v1253 = vpop.xlane.xlu0 %1252
        %v1254 = vsel %vm1226, %v1246, 0.0
        %1255 = vadd.xlane.f32.xlu0 %v1254
        %v1256 = vpop.xlane.xlu0 %1255
        %v1257 = vsel %vm1226, %v1248, 0.0
        %1258 = vadd.xlane.f32.xlu0 %v1257
        %v1259 = vpop.xlane.xlu0 %1258
        %v1260 = vsel %vm1226, %v1250, 0.0
        %1261 = vadd.xlane.f32.xlu0 %v1260
        %v1262 = vpop.xlane.xlu0 %1261
        %v1263 = vrcp.pop %v1253
        %v1264 = vrcp.pop %v1256
        %v1265 = vrcp.pop %v1259
        %v1266 = vrcp.pop %v1262
        %v1267 = vmul.f32 %v1244, %v1263
        %v1268 = vmul.f32 %v1246, %v1264
        %v1269 = vmul.f32 %v1248, %v1265
        %v1270 = vmul.f32 %v1250, %v1266
        %v1271 = vmul.f32 %v1014, %v1036
        %v1272 = vmul.f32 %v1017, %v1036
        %v1273 = vmul.f32 %v1022, %v1036
        %v1274 = vmul.f32 %v1025, %v1036
        %v1275 = vmul.f32 %v961, %v1041
        %v1276 = vmul.f32 %v965, %v1041
        %v1277 = vmul.f32 %v971, %v1041
        %v1278 = vmul.f32 %v975, %v1041
        %1279 = vmatprep.subr.mxu0 0.0
        %1280 = vmatpush1.xpose.msra.mxu0 %v963
        %1281 = vmatprep.subr.mxu0 0.0
        %1282 = vmatpush1.xpose.msra.mxu0 %v967
        %1283 = vmatprep.subr.mxu0 0.0
        %1284 = vmatpush1.xpose.msra.mxu0 0.0
        %1285 = vmatprep.subr.mxu0 0.0
        %1286 = vmatpush1.xpose.msra.mxu0 0.0
        %1287 = vmatprep.subr.mxu0 0.0
        %1288 = vmatpush1.xpose.msra.mxu0 0.0
        %1289 = vmatprep.subr.mxu0 0.0
        %1290 = vmatpush1.xpose.msra.mxu0 0.0
        %1291 = vmatprep.subr.mxu0 0.0
        %1292 = vmatpush1.xpose.msra.mxu0 0.0
        %1293 = vmatprep.subr.mxu0 0.0
        %1294 = vmatpush1.xpose.msra.mxu0 0.0
        %1295 = vmatprep.subr.mxu0 0.0
        %1296 = vmatpush1.xpose.msra.mxu0 0.0
        %1297 = vmatprep.subr.mxu0 0.0
        %1298 = vmatpush1.xpose.msra.mxu0 0.0
        %1299 = vmatprep.subr.mxu0 0.0
        %1300 = vmatpush1.xpose.msra.mxu0 0.0
        %1301 = vmatprep.subr.mxu0 0.0
        %1302 = vmatpush1.xpose.msra.mxu0 0.0
        %1303 = vmatprep.subr.mxu0 0.0
        %1304 = vmatpush1.xpose.msra.mxu0 0.0
        %1305 = vmatprep.subr.mxu0 0.0
        %1306 = vmatpush1.xpose.msra.mxu0 0.0
        %1307 = vmatprep.subr.mxu0 0.0
        %1308 = vmatpush1.xpose.msra.mxu0 0.0
        %1309 = vmatprep.subr.mxu0 0.0
        %1310 = vmatpush1.xpose.msra.mxu0 0.0
        %1311 = vmatprep.subr.mxu0 0.0
        %1312 = vmatpush1.xpose.msra.mxu0 0.0
        %1313 = vmatprep.subr.mxu0 0.0
        %1314 = vmatpush1.xpose.msra.mxu0 0.0
        %1315 = vmatprep.subr.mxu0 0.0
        %1316 = vmatpush1.xpose.msra.mxu0 0.0
        %1317 = vmatprep.subr.mxu0 0.0
        %1318 = vmatpush1.xpose.msra.mxu0 0.0
        %1319 = vmatprep.subr.mxu0 0.0
        %1320 = vmatpush1.xpose.msra.mxu0 0.0
        %1321 = vmatprep.subr.mxu0 0.0
        %1322 = vmatpush1.xpose.msra.mxu0 0.0
        %1323 = vmatprep.subr.mxu0 0.0
        %1324 = vmatpush1.xpose.msra.mxu0 0.0
        %1325 = vmatprep.subr.mxu0 0.0
        %1326 = vmatpush1.xpose.msra.mxu0 0.0
        %1327 = vmatprep.subr.mxu0 0.0
        %1328 = vmatpush1.xpose.msra.mxu0 0.0
        %1329 = vmatprep.subr.mxu0 0.0
        %1330 = vmatpush1.xpose.msra.mxu0 0.0
        %1331 = vmatprep.subr.mxu0 0.0
        %1332 = vmatpush1.xpose.msra.mxu0 0.0
        %1333 = vmatprep.subr.mxu0 0.0
        %1334 = vmatpush1.xpose.msra.mxu0 0.0
        %1335 = vmatprep.subr.mxu0 0.0
        %1336 = vmatpush1.xpose.msra.mxu0 0.0
        %1337 = vmatprep.subr.mxu0 0.0
        %1338 = vmatpush1.xpose.msra.mxu0 0.0
        %1339 = vmatprep.subr.mxu0 0.0
        %1340 = vmatpush1.xpose.msra.mxu0 0.0
        %1341 = vmatprep.subr.mxu0 0.0
        %1342 = vmatpush1.xpose.msra.mxu0 0.0
        %1343 = vmatprep.mubr.f32.mxu0 0.0
        %1344 = vmatmul.mubr.f32.gmra.mrb[0].mxu0 %v1275
        %v1345 = vpop.f32.mrb[0].mxu0
        %v1346 = vadd.f32 0.0, %v1345
        %v1347 = vpop.f32.mrb[0].mxu0
        %1348 = vmatprep.mubr.f32.mxu0 0.0
        %1349 = vmatmul.mubr.f32.gmra.mrb[0].mxu0 %v1276
        %v1350 = vpop.f32.mrb[0].mxu0
        %v1351 = vadd.f32 0.0, %v1350
        %v1352 = vpop.f32.mrb[0].mxu0
        %1353 = vdwg.mxu0
        %1354 = vmatprep.subr.mxu0 0.0
        %1355 = vmatpush1.xpose.msra.mxu0 %v973
        %1356 = vmatprep.subr.mxu0 0.0
        %1357 = vmatpush1.xpose.msra.mxu0 %v977
        %1358 = vmatprep.subr.mxu0 0.0
        %1359 = vmatpush1.xpose.msra.mxu0 0.0
        %1360 = vmatprep.subr.mxu0 0.0
        %1361 = vmatpush1.xpose.msra.mxu0 0.0
        %1362 = vmatprep.subr.mxu0 0.0
        %1363 = vmatpush1.xpose.msra.mxu0 0.0
        %1364 = vmatprep.subr.mxu0 0.0
        %1365 = vmatpush1.xpose.msra.mxu0 0.0
        %1366 = vmatprep.subr.mxu0 0.0
        %1367 = vmatpush1.xpose.msra.mxu0 0.0
        %1368 = vmatprep.subr.mxu0 0.0
        %1369 = vmatpush1.xpose.msra.mxu0 0.0
        %1370 = vmatprep.subr.mxu0 0.0
        %1371 = vmatpush1.xpose.msra.mxu0 0.0
        %1372 = vmatprep.subr.mxu0 0.0
        %1373 = vmatpush1.xpose.msra.mxu0 0.0
        %1374 = vmatprep.subr.mxu0 0.0
        %1375 = vmatpush1.xpose.msra.mxu0 0.0
        %1376 = vmatprep.subr.mxu0 0.0
        %1377 = vmatpush1.xpose.msra.mxu0 0.0
        %1378 = vmatprep.subr.mxu0 0.0
        %1379 = vmatpush1.xpose.msra.mxu0 0.0
        %1380 = vmatprep.subr.mxu0 0.0
        %1381 = vmatpush1.xpose.msra.mxu0 0.0
        %1382 = vmatprep.subr.mxu0 0.0
        %1383 = vmatpush1.xpose.msra.mxu0 0.0
        %1384 = vmatprep.subr.mxu0 0.0
        %1385 = vmatpush1.xpose.msra.mxu0 0.0
        %1386 = vmatprep.subr.mxu0 0.0
        %1387 = vmatpush1.xpose.msra.mxu0 0.0
        %1388 = vmatprep.subr.mxu0 0.0
        %1389 = vmatpush1.xpose.msra.mxu0 0.0
        %1390 = vmatprep.subr.mxu0 0.0
        %1391 = vmatpush1.xpose.msra.mxu0 0.0
        %1392 = vmatprep.subr.mxu0 0.0
        %1393 = vmatpush1.xpose.msra.mxu0 0.0
        %1394 = vmatprep.subr.mxu0 0.0
        %1395 = vmatpush1.xpose.msra.mxu0 0.0
        %1396 = vmatprep.subr.mxu0 0.0
        %1397 = vmatpush1.xpose.msra.mxu0 0.0
        %1398 = vmatprep.subr.mxu0 0.0
        %1399 = vmatpush1.xpose.msra.mxu0 0.0
        %1400 = vmatprep.subr.mxu0 0.0
        %1401 = vmatpush1.xpose.msra.mxu0 0.0
        %1402 = vmatprep.subr.mxu0 0.0
        %1403 = vmatpush1.xpose.msra.mxu0 0.0
        %1404 = vmatprep.subr.mxu0 0.0
        %1405 = vmatpush1.xpose.msra.mxu0 0.0
        %1406 = vmatprep.subr.mxu0 0.0
        %1407 = vmatpush1.xpose.msra.mxu0 0.0
        %1408 = vmatprep.subr.mxu0 0.0
        %1409 = vmatpush1.xpose.msra.mxu0 0.0
        %1410 = vmatprep.subr.mxu0 0.0
        %1411 = vmatpush1.xpose.msra.mxu0 0.0
        %1412 = vmatprep.subr.mxu0 0.0
        %1413 = vmatpush1.xpose.msra.mxu0 0.0
        %1414 = vmatprep.subr.mxu0 0.0
        %1415 = vmatpush1.xpose.msra.mxu0 0.0
        %1416 = vmatprep.subr.mxu0 0.0
        %1417 = vmatpush1.xpose.msra.mxu0 0.0
        %1418 = vmatprep.mubr.f32.mxu0 0.0
        %1419 = vmatmul.mubr.f32.gmra.mrb[0].mxu0 %v1277
        %v1420 = vpop.f32.mrb[0].mxu0
        %v1421 = vadd.f32 0.0, %v1420
        %v1422 = vpop.f32.mrb[0].mxu0
        %1423 = vmatprep.mubr.f32.mxu0 0.0
        %1424 = vmatmul.mubr.f32.gmra.mrb[0].mxu0 %v1278
        %v1425 = vpop.f32.mrb[0].mxu0
        %v1426 = vadd.f32 0.0, %v1425
        %v1427 = vpop.f32.mrb[0].mxu0
        %1428 = vdwg.mxu0
        %v1429 = vmul.f32 %v1346, 0.17677669
        %v1430 = vmul.f32 %v1351, 0.17677669
        %v1431 = vmul.f32 %v1421, 0.17677669
        %v1432 = vmul.f32 %v1426, 0.17677669
        %v1433 = vadd.f32 %v1429, %v1215
        %v1434 = vadd.f32 %v1430, %v1215
        %v1435 = vadd.f32 %v1431, %v1219
        %v1436 = vadd.f32 %v1432, %v1219
        %v1437 = vsel %vm1226, %v1433, -inf
        %1438 = vmax.xlane.f32.xlu0 %v1437
        %v1439 = vpop.xlane.xlu0 %1438
        %v1440 = vsel %vm1226, %v1434, -inf
        %1441 = vmax.xlane.f32.xlu0 %v1440
        %v1442 = vpop.xlane.xlu0 %1441
        %v1443 = vsel %vm1226, %v1435, -inf
        %1444 = vmax.xlane.f32.xlu0 %v1443
        %v1445 = vpop.xlane.xlu0 %1444
        %v1446 = vsel %vm1226, %v1436, -inf
        %1447 = vmax.xlane.f32.xlu0 %v1446
        %v1448 = vpop.xlane.xlu0 %1447
        %v1449 = vsub.f32 %v1433, %v1439
        %v1450 = vsub.f32 %v1434, %v1442
        %v1451 = vsub.f32 %v1435, %v1445
        %v1452 = vsub.f32 %v1436, %v1448
        %v1453 = vmul.f32 %v1449, 1.442695
        %v1454 = vpow.pop %v1453
        %v1455 = vmul.f32 %v1450, 1.442695
        %v1456 = vpow.pop %v1455
        %v1457 = vmul.f32 %v1451, 1.442695
        %v1458 = vpow.pop %v1457
        %v1459 = vmul.f32 %v1452, 1.442695
        %v1460 = vpow.pop %v1459
        %v1461 = vsel %vm1226, %v1454, 0.0
        %1462 = vadd.xlane.f32.xlu0 %v1461
        %v1463 = vpop.xlane.xlu0 %1462
        %v1464 = vsel %vm1226, %v1456, 0.0
        %1465 = vadd.xlane.f32.xlu0 %v1464
        %v1466 = vpop.xlane.xlu0 %1465
        %v1467 = vsel %vm1226, %v1458, 0.0
        %1468 = vadd.xlane.f32.xlu0 %v1467
        %v1469 = vpop.xlane.xlu0 %1468
        %v1470 = vsel %vm1226, %v1460, 0.0
        %1471 = vadd.xlane.f32.xlu0 %v1470
        %v1472 = vpop.xlane.xlu0 %1471
        %v1473 = vrcp.pop %v1463
        %v1474 = vrcp.pop %v1466
        %v1475 = vrcp.pop %v1469
        %v1476 = vrcp.pop %v1472
        %v1477 = vmul.f32 %v1454, %v1473
        %v1478 = vmul.f32 %v1456, %v1474
        %v1479 = vmul.f32 %v1458, %v1475
        %v1480 = vmul.f32 %v1460, %v1476
        %v1481 = vmul.f32 %v1014, %v1041
        %v1482 = vmul.f32 %v1017, %v1041
        %v1483 = vmul.f32 %v1022, %v1041
        %v1484 = vmul.f32 %v1025, %v1041
        %v1486 = vsel %vm1226, %v1477, 0
        %v1489 = vsel %vm1226, %v1478, 0
        %1491 = vmatprep.subr.mxu0 0.0
        %1492 = vmatpush1.msra.mxu0 %v1481
        %1493 = vmatprep.subr.mxu0 0.0
        %1494 = vmatpush1.msra.mxu0 %v1482
        %1495 = vmatprep.subr.mxu0 0.0
        %1496 = vmatpush1.msra.mxu0 0.0
        %1497 = vmatprep.subr.mxu0 0.0
        %1498 = vmatpush1.msra.mxu0 0.0
        %1499 = vmatprep.subr.mxu0 0.0
        %1500 = vmatpush1.msra.mxu0 0.0
        %1501 = vmatprep.subr.mxu0 0.0
        %1502 = vmatpush1.msra.mxu0 0.0
        %1503 = vmatprep.subr.mxu0 0.0
        %1504 = vmatpush1.msra.mxu0 0.0
        %1505 = vmatprep.subr.mxu0 0.0
        %1506 = vmatpush1.msra.mxu0 0.0
        %1507 = vmatprep.subr.mxu0 0.0
        %1508 = vmatpush1.msra.mxu0 0.0
        %1509 = vmatprep.subr.mxu0 0.0
        %1510 = vmatpush1.msra.mxu0 0.0
        %1511 = vmatprep.subr.mxu0 0.0
        %1512 = vmatpush1.msra.mxu0 0.0
        %1513 = vmatprep.subr.mxu0 0.0
        %1514 = vmatpush1.msra.mxu0 0.0
        %1515 = vmatprep.subr.mxu0 0.0
        %1516 = vmatpush1.msra.mxu0 0.0
        %1517 = vmatprep.subr.mxu0 0.0
        %1518 = vmatpush1.msra.mxu0 0.0
        %1519 = vmatprep.subr.mxu0 0.0
        %1520 = vmatpush1.msra.mxu0 0.0
        %1521 = vmatprep.subr.mxu0 0.0
        %1522 = vmatpush1.msra.mxu0 0.0
        %1523 = vmatprep.subr.mxu0 0.0
        %1524 = vmatpush1.msra.mxu0 0.0
        %1525 = vmatprep.subr.mxu0 0.0
        %1526 = vmatpush1.msra.mxu0 0.0
        %1527 = vmatprep.subr.mxu0 0.0
        %1528 = vmatpush1.msra.mxu0 0.0
        %1529 = vmatprep.subr.mxu0 0.0
        %1530 = vmatpush1.msra.mxu0 0.0
        %1531 = vmatprep.subr.mxu0 0.0
        %1532 = vmatpush1.msra.mxu0 0.0
        %1533 = vmatprep.subr.mxu0 0.0
        %1534 = vmatpush1.msra.mxu0 0.0
        %1535 = vmatprep.subr.mxu0 0.0
        %1536 = vmatpush1.msra.mxu0 0.0
        %1537 = vmatprep.subr.mxu0 0.0
        %1538 = vmatpush1.msra.mxu0 0.0
        %1539 = vmatprep.subr.mxu0 0.0
        %1540 = vmatpush1.msra.mxu0 0.0
        %1541 = vmatprep.subr.mxu0 0.0
        %1542 = vmatpush1.msra.mxu0 0.0
        %1543 = vmatprep.subr.mxu0 0.0
        %1544 = vmatpush1.msra.mxu0 0.0
        %1545 = vmatprep.subr.mxu0 0.0
        %1546 = vmatpush1.msra.mxu0 0.0
        %1547 = vmatprep.subr.mxu0 0.0
        %1548 = vmatpush1.msra.mxu0 0.0
        %1549 = vmatprep.subr.mxu0 0.0
        %1550 = vmatpush1.msra.mxu0 0.0
        %1551 = vmatprep.subr.mxu0 0.0
        %1552 = vmatpush1.msra.mxu0 0.0
        %1553 = vmatprep.subr.mxu0 0.0
        %1554 = vmatpush1.msra.mxu0 0.0
        %1555 = vmatprep.mubr.f32.mxu0 0.0
        %1556 = vmatmul.mubr.f32.gmra.mrb[0].mxu0 %v1486
        %v1557 = vpop.f32.mrb[0].mxu0
        %v1558 = vadd.f32 0.0, %v1557
        %v1559 = vpop.f32.mrb[0].mxu0
        %1560 = vmatprep.mubr.f32.mxu0 0.0
        %1561 = vmatmul.mubr.f32.gmra.mrb[0].mxu0 %v1489
        %v1562 = vpop.f32.mrb[0].mxu0
        %v1563 = vadd.f32 0.0, %v1562
        %v1564 = vpop.f32.mrb[0].mxu0
        %1565 = vdwg.mxu0
        %v1567 = vsel %vm1226, %v1479, 0
        %v1570 = vsel %vm1226, %v1480, 0
        %1572 = vmatprep.subr.mxu0 0.0
        %1573 = vmatpush1.msra.mxu0 %v1483
        %1574 = vmatprep.subr.mxu0 0.0
        %1575 = vmatpush1.msra.mxu0 %v1484
        %1576 = vmatprep.subr.mxu0 0.0
        %1577 = vmatpush1.msra.mxu0 0.0
        %1578 = vmatprep.subr.mxu0 0.0
        %1579 = vmatpush1.msra.mxu0 0.0
        %1580 = vmatprep.subr.mxu0 0.0
        %1581 = vmatpush1.msra.mxu0 0.0
        %1582 = vmatprep.subr.mxu0 0.0
        %1583 = vmatpush1.msra.mxu0 0.0
        %1584 = vmatprep.subr.mxu0 0.0
        %1585 = vmatpush1.msra.mxu0 0.0
        %1586 = vmatprep.subr.mxu0 0.0
        %1587 = vmatpush1.msra.mxu0 0.0
        %1588 = vmatprep.subr.mxu0 0.0
        %1589 = vmatpush1.msra.mxu0 0.0
        %1590 = vmatprep.subr.mxu0 0.0
        %1591 = vmatpush1.msra.mxu0 0.0
        %1592 = vmatprep.subr.mxu0 0.0
        %1593 = vmatpush1.msra.mxu0 0.0
        %1594 = vmatprep.subr.mxu0 0.0
        %1595 = vmatpush1.msra.mxu0 0.0
        %1596 = vmatprep.subr.mxu0 0.0
        %1597 = vmatpush1.msra.mxu0 0.0
        %1598 = vmatprep.subr.mxu0 0.0
        %1599 = vmatpush1.msra.mxu0 0.0
        %1600 = vmatprep.subr.mxu0 0.0
        %1601 = vmatpush1.msra.mxu0 0.0
        %1602 = vmatprep.subr.mxu0 0.0
        %1603 = vmatpush1.msra.mxu0 0.0
        %1604 = vmatprep.subr.mxu0 0.0
        %1605 = vmatpush1.msra.mxu0 0.0
        %1606 = vmatprep.subr.mxu0 0.0
        %1607 = vmatpush1.msra.mxu0 0.0
        %1608 = vmatprep.subr.mxu0 0.0
        %1609 = vmatpush1.msra.mxu0 0.0
        %1610 = vmatprep.subr.mxu0 0.0
        %1611 = vmatpush1.msra.mxu0 0.0
        %1612 = vmatprep.subr.mxu0 0.0
        %1613 = vmatpush1.msra.mxu0 0.0
        %1614 = vmatprep.subr.mxu0 0.0
        %1615 = vmatpush1.msra.mxu0 0.0
        %1616 = vmatprep.subr.mxu0 0.0
        %1617 = vmatpush1.msra.mxu0 0.0
        %1618 = vmatprep.subr.mxu0 0.0
        %1619 = vmatpush1.msra.mxu0 0.0
        %1620 = vmatprep.subr.mxu0 0.0
        %1621 = vmatpush1.msra.mxu0 0.0
        %1622 = vmatprep.subr.mxu0 0.0
        %1623 = vmatpush1.msra.mxu0 0.0
        %1624 = vmatprep.subr.mxu0 0.0
        %1625 = vmatpush1.msra.mxu0 0.0
        %1626 = vmatprep.subr.mxu0 0.0
        %1627 = vmatpush1.msra.mxu0 0.0
        %1628 = vmatprep.subr.mxu0 0.0
        %1629 = vmatpush1.msra.mxu0 0.0
        %1630 = vmatprep.subr.mxu0 0.0
        %1631 = vmatpush1.msra.mxu0 0.0
        %1632 = vmatprep.subr.mxu0 0.0
        %1633 = vmatpush1.msra.mxu0 0.0
        %1634 = vmatprep.subr.mxu0 0.0
        %1635 = vmatpush1.msra.mxu0 0.0
        %1636 = vmatprep.mubr.f32.mxu0 0.0
        %1637 = vmatmul.mubr.f32.gmra.mrb[0].mxu0 %v1567
        %v1638 = vpop.f32.mrb[0].mxu0
        %v1639 = vadd.f32 0.0, %v1638
        %v1640 = vpop.f32.mrb[0].mxu0
        %1641 = vmatprep.mubr.f32.mxu0 0.0
        %1642 = vmatmul.mubr.f32.gmra.mrb[0].mxu0 %v1570
        %v1643 = vpop.f32.mrb[0].mxu0
        %v1644 = vadd.f32 0.0, %v1643
        %v1645 = vpop.f32.mrb[0].mxu0
        %1646 = vdwg.mxu0
        %v1648 = vsel %vm1226, %v1267, 0
        %v1651 = vsel %vm1226, %v1268, 0
        %1653 = vmatprep.subr.mxu0 0.0
        %1654 = vmatpush1.msra.mxu0 %v1271
        %1655 = vmatprep.subr.mxu0 0.0
        %1656 = vmatpush1.msra.mxu0 %v1272
        %1657 = vmatprep.subr.mxu0 0.0
        %1658 = vmatpush1.msra.mxu0 0.0
        %1659 = vmatprep.subr.mxu0 0.0
        %1660 = vmatpush1.msra.mxu0 0.0
        %1661 = vmatprep.subr.mxu0 0.0
        %1662 = vmatpush1.msra.mxu0 0.0
        %1663 = vmatprep.subr.mxu0 0.0
        %1664 = vmatpush1.msra.mxu0 0.0
        %1665 = vmatprep.subr.mxu0 0.0
        %1666 = vmatpush1.msra.mxu0 0.0
        %1667 = vmatprep.subr.mxu0 0.0
        %1668 = vmatpush1.msra.mxu0 0.0
        %1669 = vmatprep.subr.mxu0 0.0
        %1670 = vmatpush1.msra.mxu0 0.0
        %1671 = vmatprep.subr.mxu0 0.0
        %1672 = vmatpush1.msra.mxu0 0.0
        %1673 = vmatprep.subr.mxu0 0.0
        %1674 = vmatpush1.msra.mxu0 0.0
        %1675 = vmatprep.subr.mxu0 0.0
        %1676 = vmatpush1.msra.mxu0 0.0
        %1677 = vmatprep.subr.mxu0 0.0
        %1678 = vmatpush1.msra.mxu0 0.0
        %1679 = vmatprep.subr.mxu0 0.0
        %1680 = vmatpush1.msra.mxu0 0.0
        %1681 = vmatprep.subr.mxu0 0.0
        %1682 = vmatpush1.msra.mxu0 0.0
        %1683 = vmatprep.subr.mxu0 0.0
        %1684 = vmatpush1.msra.mxu0 0.0
        %1685 = vmatprep.subr.mxu0 0.0
        %1686 = vmatpush1.msra.mxu0 0.0
        %1687 = vmatprep.subr.mxu0 0.0
        %1688 = vmatpush1.msra.mxu0 0.0
        %1689 = vmatprep.subr.mxu0 0.0
        %1690 = vmatpush1.msra.mxu0 0.0
        %1691 = vmatprep.subr.mxu0 0.0
        %1692 = vmatpush1.msra.mxu0 0.0
        %1693 = vmatprep.subr.mxu0 0.0
        %1694 = vmatpush1.msra.mxu0 0.0
        %1695 = vmatprep.subr.mxu0 0.0
        %1696 = vmatpush1.msra.mxu0 0.0
        %1697 = vmatprep.subr.mxu0 0.0
        %1698 = vmatpush1.msra.mxu0 0.0
        %1699 = vmatprep.subr.mxu0 0.0
        %1700 = vmatpush1.msra.mxu0 0.0
        %1701 = vmatprep.subr.mxu0 0.0
        %1702 = vmatpush1.msra.mxu0 0.0
        %1703 = vmatprep.subr.mxu0 0.0
        %1704 = vmatpush1.msra.mxu0 0.0
        %1705 = vmatprep.subr.mxu0 0.0
        %1706 = vmatpush1.msra.mxu0 0.0
        %1707 = vmatprep.subr.mxu0 0.0
        %1708 = vmatpush1.msra.mxu0 0.0
        %1709 = vmatprep.subr.mxu0 0.0
        %1710 = vmatpush1.msra.mxu0 0.0
        %1711 = vmatprep.subr.mxu0 0.0
        %1712 = vmatpush1.msra.mxu0 0.0
        %1713 = vmatprep.subr.mxu0 0.0
        %1714 = vmatpush1.msra.mxu0 0.0
        %1715 = vmatprep.subr.mxu0 0.0
        %1716 = vmatpush1.msra.mxu0 0.0
        %1717 = vmatprep.mubr.f32.mxu0 0.0
        %1718 = vmatmul.mubr.f32.gmra.mrb[0].mxu0 %v1648
        %v1719 = vpop.f32.mrb[0].mxu0
        %v1720 = vadd.f32 %v1558, %v1719
        %v1721 = vpop.f32.mrb[0].mxu0
        %1722 = vmatprep.mubr.f32.mxu0 0.0
        %1723 = vmatmul.mubr.f32.gmra.mrb[0].mxu0 %v1651
        %v1724 = vpop.f32.mrb[0].mxu0
        %v1725 = vadd.f32 %v1563, %v1724
        %v1726 = vpop.f32.mrb[0].mxu0
        %1727 = vdwg.mxu0
        %v1729 = vsel %vm1226, %v1269, 0
        %v1732 = vsel %vm1226, %v1270, 0
        %1734 = vmatprep.subr.mxu0 0.0
        %1735 = vmatpush1.msra.mxu0 %v1273
        %1736 = vmatprep.subr.mxu0 0.0
        %1737 = vmatpush1.msra.mxu0 %v1274
        %1738 = vmatprep.subr.mxu0 0.0
        %1739 = vmatpush1.msra.mxu0 0.0
        %1740 = vmatprep.subr.mxu0 0.0
        %1741 = vmatpush1.msra.mxu0 0.0
        %1742 = vmatprep.subr.mxu0 0.0
        %1743 = vmatpush1.msra.mxu0 0.0
        %1744 = vmatprep.subr.mxu0 0.0
        %1745 = vmatpush1.msra.mxu0 0.0
        %1746 = vmatprep.subr.mxu0 0.0
        %1747 = vmatpush1.msra.mxu0 0.0
        %1748 = vmatprep.subr.mxu0 0.0
        %1749 = vmatpush1.msra.mxu0 0.0
        %1750 = vmatprep.subr.mxu0 0.0
        %1751 = vmatpush1.msra.mxu0 0.0
        %1752 = vmatprep.subr.mxu0 0.0
        %1753 = vmatpush1.msra.mxu0 0.0
        %1754 = vmatprep.subr.mxu0 0.0
        %1755 = vmatpush1.msra.mxu0 0.0
        %1756 = vmatprep.subr.mxu0 0.0
        %1757 = vmatpush1.msra.mxu0 0.0
        %1758 = vmatprep.subr.mxu0 0.0
        %1759 = vmatpush1.msra.mxu0 0.0
        %1760 = vmatprep.subr.mxu0 0.0
        %1761 = vmatpush1.msra.mxu0 0.0
        %1762 = vmatprep.subr.mxu0 0.0
        %1763 = vmatpush1.msra.mxu0 0.0
        %1764 = vmatprep.subr.mxu0 0.0
        %1765 = vmatpush1.msra.mxu0 0.0
        %1766 = vmatprep.subr.mxu0 0.0
        %1767 = vmatpush1.msra.mxu0 0.0
        %1768 = vmatprep.subr.mxu0 0.0
        %1769 = vmatpush1.msra.mxu0 0.0
        %1770 = vmatprep.subr.mxu0 0.0
        %1771 = vmatpush1.msra.mxu0 0.0
        %1772 = vmatprep.subr.mxu0 0.0
        %1773 = vmatpush1.msra.mxu0 0.0
        %1774 = vmatprep.subr.mxu0 0.0
        %1775 = vmatpush1.msra.mxu0 0.0
        %1776 = vmatprep.subr.mxu0 0.0
        %1777 = vmatpush1.msra.mxu0 0.0
        %1778 = vmatprep.subr.mxu0 0.0
        %1779 = vmatpush1.msra.mxu0 0.0
        %1780 = vmatprep.subr.mxu0 0.0
        %1781 = vmatpush1.msra.mxu0 0.0
        %1782 = vmatprep.subr.mxu0 0.0
        %1783 = vmatpush1.msra.mxu0 0.0
        %1784 = vmatprep.subr.mxu0 0.0
        %1785 = vmatpush1.msra.mxu0 0.0
        %1786 = vmatprep.subr.mxu0 0.0
        %1787 = vmatpush1.msra.mxu0 0.0
        %1788 = vmatprep.subr.mxu0 0.0
        %1789 = vmatpush1.msra.mxu0 0.0
        %1790 = vmatprep.subr.mxu0 0.0
        %1791 = vmatpush1.msra.mxu0 0.0
        %1792 = vmatprep.subr.mxu0 0.0
        %1793 = vmatpush1.msra.mxu0 0.0
        %1794 = vmatprep.subr.mxu0 0.0
        %1795 = vmatpush1.msra.mxu0 0.0
        %1796 = vmatprep.subr.mxu0 0.0
        %1797 = vmatpush1.msra.mxu0 0.0
        %1798 = vmatprep.mubr.f32.mxu0 0.0
        %1799 = vmatmul.mubr.f32.gmra.mrb[0].mxu0 %v1729
        %v1800 = vpop.f32.mrb[0].mxu0
        %v1801 = vadd.f32 %v1639, %v1800
        %v1802 = vpop.f32.mrb[0].mxu0
        %1803 = vmatprep.mubr.f32.mxu0 0.0
        %1804 = vmatmul.mubr.f32.gmra.mrb[0].mxu0 %v1732
        %v1805 = vpop.f32.mrb[0].mxu0
        %v1806 = vadd.f32 %v1644, %v1805
        %v1807 = vpop.f32.mrb[0].mxu0
        %1808 = vdwg.mxu0
        %v1809 = vmul.f32 %v961, %v1046
        %v1810 = vmul.f32 %v965, %v1046
        %v1811 = vmul.f32 %v971, %v1046
        %v1812 = vmul.f32 %v975, %v1046
        %1813 = vmatprep.subr.mxu0 0.0
        %1814 = vmatpush1.xpose.msra.mxu0 %v963
        %1815 = vmatprep.subr.mxu0 0.0
        %1816 = vmatpush1.xpose.msra.mxu0 %v967
        %1817 = vmatprep.subr.mxu0 0.0
        %1818 = vmatpush1.xpose.msra.mxu0 0.0
        %1819 = vmatprep.subr.mxu0 0.0
        %1820 = vmatpush1.xpose.msra.mxu0 0.0
        %1821 = vmatprep.subr.mxu0 0.0
        %1822 = vmatpush1.xpose.msra.mxu0 0.0
        %1823 = vmatprep.subr.mxu0 0.0
        %1824 = vmatpush1.xpose.msra.mxu0 0.0
        %1825 = vmatprep.subr.mxu0 0.0
        %1826 = vmatpush1.xpose.msra.mxu0 0.0
        %1827 = vmatprep.subr.mxu0 0.0
        %1828 = vmatpush1.xpose.msra.mxu0 0.0
        %1829 = vmatprep.subr.mxu0 0.0
        %1830 = vmatpush1.xpose.msra.mxu0 0.0
        %1831 = vmatprep.subr.mxu0 0.0
        %1832 = vmatpush1.xpose.msra.mxu0 0.0
        %1833 = vmatprep.subr.mxu0 0.0
        %1834 = vmatpush1.xpose.msra.mxu0 0.0
        %1835 = vmatprep.subr.mxu0 0.0
        %1836 = vmatpush1.xpose.msra.mxu0 0.0
        %1837 = vmatprep.subr.mxu0 0.0
        %1838 = vmatpush1.xpose.msra.mxu0 0.0
        %1839 = vmatprep.subr.mxu0 0.0
        %1840 = vmatpush1.xpose.msra.mxu0 0.0
        %1841 = vmatprep.subr.mxu0 0.0
        %1842 = vmatpush1.xpose.msra.mxu0 0.0
        %1843 = vmatprep.subr.mxu0 0.0
        %1844 = vmatpush1.xpose.msra.mxu0 0.0
        %1845 = vmatprep.subr.mxu0 0.0
        %1846 = vmatpush1.xpose.msra.mxu0 0.0
        %1847 = vmatprep.subr.mxu0 0.0
        %1848 = vmatpush1.xpose.msra.mxu0 0.0
        %1849 = vmatprep.subr.mxu0 0.0
        %1850 = vmatpush1.xpose.msra.mxu0 0.0
        %1851 = vmatprep.subr.mxu0 0.0
        %1852 = vmatpush1.xpose.msra.mxu0 0.0
        %1853 = vmatprep.subr.mxu0 0.0
        %1854 = vmatpush1.xpose.msra.mxu0 0.0
        %1855 = vmatprep.subr.mxu0 0.0
        %1856 = vmatpush1.xpose.msra.mxu0 0.0
        %1857 = vmatprep.subr.mxu0 0.0
        %1858 = vmatpush1.xpose.msra.mxu0 0.0
        %1859 = vmatprep.subr.mxu0 0.0
        %1860 = vmatpush1.xpose.msra.mxu0 0.0
        %1861 = vmatprep.subr.mxu0 0.0
        %1862 = vmatpush1.xpose.msra.mxu0 0.0
        %1863 = vmatprep.subr.mxu0 0.0
        %1864 = vmatpush1.xpose.msra.mxu0 0.0
        %1865 = vmatprep.subr.mxu0 0.0
        %1866 = vmatpush1.xpose.msra.mxu0 0.0
        %1867 = vmatprep.subr.mxu0 0.0
        %1868 = vmatpush1.xpose.msra.mxu0 0.0
        %1869 = vmatprep.subr.mxu0 0.0
        %1870 = vmatpush1.xpose.msra.mxu0 0.0
        %1871 = vmatprep.subr.mxu0 0.0
        %1872 = vmatpush1.xpose.msra.mxu0 0.0
        %1873 = vmatprep.subr.mxu0 0.0
        %1874 = vmatpush1.xpose.msra.mxu0 0.0
        %1875 = vmatprep.subr.mxu0 0.0
        %1876 = vmatpush1.xpose.msra.mxu0 0.0
        %1877 = vmatprep.mubr.f32.mxu0 0.0
        %1878 = vmatmul.mubr.f32.gmra.mrb[0].mxu0 %v1809
        %v1879 = vpop.f32.mrb[0].mxu0
        %v1880 = vadd.f32 0.0, %v1879
        %v1881 = vpop.f32.mrb[0].mxu0
        %1882 = vmatprep.mubr.f32.mxu0 0.0
        %1883 = vmatmul.mubr.f32.gmra.mrb[0].mxu0 %v1810
        %v1884 = vpop.f32.mrb[0].mxu0
        %v1885 = vadd.f32 0.0, %v1884
        %v1886 = vpop.f32.mrb[0].mxu0
        %1887 = vdwg.mxu0
        %1888 = vmatprep.subr.mxu0 0.0
        %1889 = vmatpush1.xpose.msra.mxu0 %v973
        %1890 = vmatprep.subr.mxu0 0.0
        %1891 = vmatpush1.xpose.msra.mxu0 %v977
        %1892 = vmatprep.subr.mxu0 0.0
        %1893 = vmatpush1.xpose.msra.mxu0 0.0
        %1894 = vmatprep.subr.mxu0 0.0
        %1895 = vmatpush1.xpose.msra.mxu0 0.0
        %1896 = vmatprep.subr.mxu0 0.0
        %1897 = vmatpush1.xpose.msra.mxu0 0.0
        %1898 = vmatprep.subr.mxu0 0.0
        %1899 = vmatpush1.xpose.msra.mxu0 0.0
        %1900 = vmatprep.subr.mxu0 0.0
        %1901 = vmatpush1.xpose.msra.mxu0 0.0
        %1902 = vmatprep.subr.mxu0 0.0
        %1903 = vmatpush1.xpose.msra.mxu0 0.0
        %1904 = vmatprep.subr.mxu0 0.0
        %1905 = vmatpush1.xpose.msra.mxu0 0.0
        %1906 = vmatprep.subr.mxu0 0.0
        %1907 = vmatpush1.xpose.msra.mxu0 0.0
        %1908 = vmatprep.subr.mxu0 0.0
        %1909 = vmatpush1.xpose.msra.mxu0 0.0
        %1910 = vmatprep.subr.mxu0 0.0
        %1911 = vmatpush1.xpose.msra.mxu0 0.0
        %1912 = vmatprep.subr.mxu0 0.0
        %1913 = vmatpush1.xpose.msra.mxu0 0.0
        %1914 = vmatprep.subr.mxu0 0.0
        %1915 = vmatpush1.xpose.msra.mxu0 0.0
        %1916 = vmatprep.subr.mxu0 0.0
        %1917 = vmatpush1.xpose.msra.mxu0 0.0
        %1918 = vmatprep.subr.mxu0 0.0
        %1919 = vmatpush1.xpose.msra.mxu0 0.0
        %1920 = vmatprep.subr.mxu0 0.0
        %1921 = vmatpush1.xpose.msra.mxu0 0.0
        %1922 = vmatprep.subr.mxu0 0.0
        %1923 = vmatpush1.xpose.msra.mxu0 0.0
        %1924 = vmatprep.subr.mxu0 0.0
        %1925 = vmatpush1.xpose.msra.mxu0 0.0
        %1926 = vmatprep.subr.mxu0 0.0
        %1927 = vmatpush1.xpose.msra.mxu0 0.0
        %1928 = vmatprep.subr.mxu0 0.0
        %1929 = vmatpush1.xpose.msra.mxu0 0.0
        %1930 = vmatprep.subr.mxu0 0.0
        %1931 = vmatpush1.xpose.msra.mxu0 0.0
        %1932 = vmatprep.subr.mxu0 0.0
        %1933 = vmatpush1.xpose.msra.mxu0 0.0
        %1934 = vmatprep.subr.mxu0 0.0
        %1935 = vmatpush1.xpose.msra.mxu0 0.0
        %1936 = vmatprep.subr.mxu0 0.0
        %1937 = vmatpush1.xpose.msra.mxu0 0.0
        %1938 = vmatprep.subr.mxu0 0.0
        %1939 = vmatpush1.xpose.msra.mxu0 0.0
        %1940 = vmatprep.subr.mxu0 0.0
        %1941 = vmatpush1.xpose.msra.mxu0 0.0
        %1942 = vmatprep.subr.mxu0 0.0
        %1943 = vmatpush1.xpose.msra.mxu0 0.0
        %1944 = vmatprep.subr.mxu0 0.0
        %1945 = vmatpush1.xpose.msra.mxu0 0.0
        %1946 = vmatprep.subr.mxu0 0.0
        %1947 = vmatpush1.xpose.msra.mxu0 0.0
        %1948 = vmatprep.subr.mxu0 0.0
        %1949 = vmatpush1.xpose.msra.mxu0 0.0
        %1950 = vmatprep.subr.mxu0 0.0
        %1951 = vmatpush1.xpose.msra.mxu0 0.0
        %1952 = vmatprep.mubr.f32.mxu0 0.0
        %1953 = vmatmul.mubr.f32.gmra.mrb[0].mxu0 %v1811
        %v1954 = vpop.f32.mrb[0].mxu0
        %v1955 = vadd.f32 0.0, %v1954
        %v1956 = vpop.f32.mrb[0].mxu0
        %1957 = vmatprep.mubr.f32.mxu0 0.0
        %1958 = vmatmul.mubr.f32.gmra.mrb[0].mxu0 %v1812
        %v1959 = vpop.f32.mrb[0].mxu0
        %v1960 = vadd.f32 0.0, %v1959
        %v1961 = vpop.f32.mrb[0].mxu0
        %1962 = vdwg.mxu0
        %v1963 = vmul.f32 %v1880, 0.17677669
        %v1964 = vmul.f32 %v1885, 0.17677669
        %v1965 = vmul.f32 %v1955, 0.17677669
        %v1966 = vmul.f32 %v1960, 0.17677669
        %v1967 = vadd.f32 %v1963, %v1215
        %v1968 = vadd.f32 %v1964, %v1215
        %v1969 = vadd.f32 %v1965, %v1219
        %v1970 = vadd.f32 %v1966, %v1219
        %v1971 = vsel %vm1226, %v1967, -inf
        %1972 = vmax.xlane.f32.xlu0 %v1971
        %v1973 = vpop.xlane.xlu0 %1972
        %v1974 = vsel %vm1226, %v1968, -inf
        %1975 = vmax.xlane.f32.xlu0 %v1974
        %v1976 = vpop.xlane.xlu0 %1975
        %v1977 = vsel %vm1226, %v1969, -inf
        %1978 = vmax.xlane.f32.xlu0 %v1977
        %v1979 = vpop.xlane.xlu0 %1978
        %v1980 = vsel %vm1226, %v1970, -inf
        %1981 = vmax.xlane.f32.xlu0 %v1980
        %v1982 = vpop.xlane.xlu0 %1981
        %v1983 = vsub.f32 %v1967, %v1973
        %v1984 = vsub.f32 %v1968, %v1976
        %v1985 = vsub.f32 %v1969, %v1979
        %v1986 = vsub.f32 %v1970, %v1982
        %v1987 = vmul.f32 %v1983, 1.442695
        %v1988 = vpow.pop %v1987
        %v1989 = vmul.f32 %v1984, 1.442695
        %v1990 = vpow.pop %v1989
        %v1991 = vmul.f32 %v1985, 1.442695
        %v1992 = vpow.pop %v1991
        %v1993 = vmul.f32 %v1986, 1.442695
        %v1994 = vpow.pop %v1993
        %v1995 = vsel %vm1226, %v1988, 0.0
        %1996 = vadd.xlane.f32.xlu0 %v1995
        %v1997 = vpop.xlane.xlu0 %1996
        %v1998 = vsel %vm1226, %v1990, 0.0
        %1999 = vadd.xlane.f32.xlu0 %v1998
        %v2000 = vpop.xlane.xlu0 %1999
        %v2001 = vsel %vm1226, %v1992, 0.0
        %2002 = vadd.xlane.f32.xlu0 %v2001
        %v2003 = vpop.xlane.xlu0 %2002
        %v2004 = vsel %vm1226, %v1994, 0.0
        %2005 = vadd.xlane.f32.xlu0 %v2004
        %v2006 = vpop.xlane.xlu0 %2005
        %v2007 = vrcp.pop %v1997
        %v2008 = vrcp.pop %v2000
        %v2009 = vrcp.pop %v2003
        %v2010 = vrcp.pop %v2006
        %v2011 = vmul.f32 %v1988, %v2007
        %v2012 = vmul.f32 %v1990, %v2008
        %v2013 = vmul.f32 %v1992, %v2009
        %v2014 = vmul.f32 %v1994, %v2010
        %v2015 = vmul.f32 %v1014, %v1046
        %v2016 = vmul.f32 %v1017, %v1046
        %v2017 = vmul.f32 %v1022, %v1046
        %v2018 = vmul.f32 %v1025, %v1046
        %v2020 = vsel %vm1226, %v2011, 0
        %v2023 = vsel %vm1226, %v2012, 0
        %2025 = vmatprep.subr.mxu0 0.0
        %2026 = vmatpush1.msra.mxu0 %v2015
        %2027 = vmatprep.subr.mxu0 0.0
        %2028 = vmatpush1.msra.mxu0 %v2016
        %2029 = vmatprep.subr.mxu0 0.0
        %2030 = vmatpush1.msra.mxu0 0.0
        %2031 = vmatprep.subr.mxu0 0.0
        %2032 = vmatpush1.msra.mxu0 0.0
        %2033 = vmatprep.subr.mxu0 0.0
        %2034 = vmatpush1.msra.mxu0 0.0
        %2035 = vmatprep.subr.mxu0 0.0
        %2036 = vmatpush1.msra.mxu0 0.0
        %2037 = vmatprep.subr.mxu0 0.0
        %2038 = vmatpush1.msra.mxu0 0.0
        %2039 = vmatprep.subr.mxu0 0.0
        %2040 = vmatpush1.msra.mxu0 0.0
        %2041 = vmatprep.subr.mxu0 0.0
        %2042 = vmatpush1.msra.mxu0 0.0
        %2043 = vmatprep.subr.mxu0 0.0
        %2044 = vmatpush1.msra.mxu0 0.0
        %2045 = vmatprep.subr.mxu0 0.0
        %2046 = vmatpush1.msra.mxu0 0.0
        %2047 = vmatprep.subr.mxu0 0.0
        %2048 = vmatpush1.msra.mxu0 0.0
        %2049 = vmatprep.subr.mxu0 0.0
        %2050 = vmatpush1.msra.mxu0 0.0
        %2051 = vmatprep.subr.mxu0 0.0
        %2052 = vmatpush1.msra.mxu0 0.0
        %2053 = vmatprep.subr.mxu0 0.0
        %2054 = vmatpush1.msra.mxu0 0.0
        %2055 = vmatprep.subr.mxu0 0.0
        %2056 = vmatpush1.msra.mxu0 0.0
        %2057 = vmatprep.subr.mxu0 0.0
        %2058 = vmatpush1.msra.mxu0 0.0
        %2059 = vmatprep.subr.mxu0 0.0
        %2060 = vmatpush1.msra.mxu0 0.0
        %2061 = vmatprep.subr.mxu0 0.0
        %2062 = vmatpush1.msra.mxu0 0.0
        %2063 = vmatprep.subr.mxu0 0.0
        %2064 = vmatpush1.msra.mxu0 0.0
        %2065 = vmatprep.subr.mxu0 0.0
        %2066 = vmatpush1.msra.mxu0 0.0
        %2067 = vmatprep.subr.mxu0 0.0
        %2068 = vmatpush1.msra.mxu0 0.0
        %2069 = vmatprep.subr.mxu0 0.0
        %2070 = vmatpush1.msra.mxu0 0.0
        %2071 = vmatprep.subr.mxu0 0.0
        %2072 = vmatpush1.msra.mxu0 0.0
        %2073 = vmatprep.subr.mxu0 0.0
        %2074 = vmatpush1.msra.mxu0 0.0
        %2075 = vmatprep.subr.mxu0 0.0
        %2076 = vmatpush1.msra.mxu0 0.0
        %2077 = vmatprep.subr.mxu0 0.0
        %2078 = vmatpush1.msra.mxu0 0.0
        %2079 = vmatprep.subr.mxu0 0.0
        %2080 = vmatpush1.msra.mxu0 0.0
        %2081 = vmatprep.subr.mxu0 0.0
        %2082 = vmatpush1.msra.mxu0 0.0
        %2083 = vmatprep.subr.mxu0 0.0
        %2084 = vmatpush1.msra.mxu0 0.0
        %2085 = vmatprep.subr.mxu0 0.0
        %2086 = vmatpush1.msra.mxu0 0.0
        %2087 = vmatprep.subr.mxu0 0.0
        %2088 = vmatpush1.msra.mxu0 0.0
        %2089 = vmatprep.mubr.f32.mxu0 0.0
        %2090 = vmatmul.mubr.f32.gmra.mrb[0].mxu0 %v2020
        %v2091 = vpop.f32.mrb[0].mxu0
        %v2092 = vadd.f32 0.0, %v2091
        %v2093 = vpop.f32.mrb[0].mxu0
        %2094 = vmatprep.mubr.f32.mxu0 0.0
        %2095 = vmatmul.mubr.f32.gmra.mrb[0].mxu0 %v2023
        %v2096 = vpop.f32.mrb[0].mxu0
        %v2097 = vadd.f32 0.0, %v2096
        %v2098 = vpop.f32.mrb[0].mxu0
        %2099 = vdwg.mxu0
        %v2101 = vsel %vm1226, %v2013, 0
        %v2104 = vsel %vm1226, %v2014, 0
        %2106 = vmatprep.subr.mxu0 0.0
        %2107 = vmatpush1.msra.mxu0 %v2017
        %2108 = vmatprep.subr.mxu0 0.0
        %2109 = vmatpush1.msra.mxu0 %v2018
        %2110 = vmatprep.subr.mxu0 0.0
        %2111 = vmatpush1.msra.mxu0 0.0
        %2112 = vmatprep.subr.mxu0 0.0
        %2113 = vmatpush1.msra.mxu0 0.0
        %2114 = vmatprep.subr.mxu0 0.0
        %2115 = vmatpush1.msra.mxu0 0.0
        %2116 = vmatprep.subr.mxu0 0.0
        %2117 = vmatpush1.msra.mxu0 0.0
        %2118 = vmatprep.subr.mxu0 0.0
        %2119 = vmatpush1.msra.mxu0 0.0
        %2120 = vmatprep.subr.mxu0 0.0
        %2121 = vmatpush1.msra.mxu0 0.0
        %2122 = vmatprep.subr.mxu0 0.0
        %2123 = vmatpush1.msra.mxu0 0.0
        %2124 = vmatprep.subr.mxu0 0.0
        %2125 = vmatpush1.msra.mxu0 0.0
        %2126 = vmatprep.subr.mxu0 0.0
        %2127 = vmatpush1.msra.mxu0 0.0
        %2128 = vmatprep.subr.mxu0 0.0
        %2129 = vmatpush1.msra.mxu0 0.0
        %2130 = vmatprep.subr.mxu0 0.0
        %2131 = vmatpush1.msra.mxu0 0.0
        %2132 = vmatprep.subr.mxu0 0.0
        %2133 = vmatpush1.msra.mxu0 0.0
        %2134 = vmatprep.subr.mxu0 0.0
        %2135 = vmatpush1.msra.mxu0 0.0
        %2136 = vmatprep.subr.mxu0 0.0
        %2137 = vmatpush1.msra.mxu0 0.0
        %2138 = vmatprep.subr.mxu0 0.0
        %2139 = vmatpush1.msra.mxu0 0.0
        %2140 = vmatprep.subr.mxu0 0.0
        %2141 = vmatpush1.msra.mxu0 0.0
        %2142 = vmatprep.subr.mxu0 0.0
        %2143 = vmatpush1.msra.mxu0 0.0
        %2144 = vmatprep.subr.mxu0 0.0
        %2145 = vmatpush1.msra.mxu0 0.0
        %2146 = vmatprep.subr.mxu0 0.0
        %2147 = vmatpush1.msra.mxu0 0.0
        %2148 = vmatprep.subr.mxu0 0.0
        %2149 = vmatpush1.msra.mxu0 0.0
        %2150 = vmatprep.subr.mxu0 0.0
        %2151 = vmatpush1.msra.mxu0 0.0
        %2152 = vmatprep.subr.mxu0 0.0
        %2153 = vmatpush1.msra.mxu0 0.0
        %2154 = vmatprep.subr.mxu0 0.0
        %2155 = vmatpush1.msra.mxu0 0.0
        %2156 = vmatprep.subr.mxu0 0.0
        %2157 = vmatpush1.msra.mxu0 0.0
        %2158 = vmatprep.subr.mxu0 0.0
        %2159 = vmatpush1.msra.mxu0 0.0
        %2160 = vmatprep.subr.mxu0 0.0
        %2161 = vmatpush1.msra.mxu0 0.0
        %2162 = vmatprep.subr.mxu0 0.0
        %2163 = vmatpush1.msra.mxu0 0.0
        %2164 = vmatprep.subr.mxu0 0.0
        %2165 = vmatpush1.msra.mxu0 0.0
        %2166 = vmatprep.subr.mxu0 0.0
        %2167 = vmatpush1.msra.mxu0 0.0
        %2168 = vmatprep.subr.mxu0 0.0
        %2169 = vmatpush1.msra.mxu0 0.0
        %2170 = vmatprep.mubr.f32.mxu0 0.0
        %2171 = vmatmul.mubr.f32.gmra.mrb[0].mxu0 %v2101
        %v2172 = vpop.f32.mrb[0].mxu0
        %v2173 = vadd.f32 0.0, %v2172
        %v2174 = vpop.f32.mrb[0].mxu0
        %2175 = vmatprep.mubr.f32.mxu0 0.0
        %2176 = vmatmul.mubr.f32.gmra.mrb[0].mxu0 %v2104
        %v2177 = vpop.f32.mrb[0].mxu0
        %v2178 = vadd.f32 0.0, %v2177
        %v2179 = vpop.f32.mrb[0].mxu0
        %2180 = vdwg.mxu0
        %v2181 = vadd.f32 %v1720, %v2092
        %v2182 = vadd.f32 %v1725, %v2097
        %v2183 = vadd.f32 %v1801, %v2173
        %v2184 = vadd.f32 %v1806, %v2178
        %v2185 = vmul.f32 %v961, %v1051
        %v2186 = vmul.f32 %v965, %v1051
        %v2187 = vmul.f32 %v971, %v1051
        %v2188 = vmul.f32 %v975, %v1051
        %2189 = vmatprep.subr.mxu0 0.0
        %2190 = vmatpush1.xpose.msra.mxu0 %v963
        %2191 = vmatprep.subr.mxu0 0.0
        %2192 = vmatpush1.xpose.msra.mxu0 %v967
        %2193 = vmatprep.subr.mxu0 0.0
        %2194 = vmatpush1.xpose.msra.mxu0 0.0
        %2195 = vmatprep.subr.mxu0 0.0
        %2196 = vmatpush1.xpose.msra.mxu0 0.0
        %2197 = vmatprep.subr.mxu0 0.0
        %2198 = vmatpush1.xpose.msra.mxu0 0.0
        %2199 = vmatprep.subr.mxu0 0.0
        %2200 = vmatpush1.xpose.msra.mxu0 0.0
        %2201 = vmatprep.subr.mxu0 0.0
        %2202 = vmatpush1.xpose.msra.mxu0 0.0
        %2203 = vmatprep.subr.mxu0 0.0
        %2204 = vmatpush1.xpose.msra.mxu0 0.0
        %2205 = vmatprep.subr.mxu0 0.0
        %2206 = vmatpush1.xpose.msra.mxu0 0.0
        %2207 = vmatprep.subr.mxu0 0.0
        %2208 = vmatpush1.xpose.msra.mxu0 0.0
        %2209 = vmatprep.subr.mxu0 0.0
        %2210 = vmatpush1.xpose.msra.mxu0 0.0
        %2211 = vmatprep.subr.mxu0 0.0
        %2212 = vmatpush1.xpose.msra.mxu0 0.0
        %2213 = vmatprep.subr.mxu0 0.0
        %2214 = vmatpush1.xpose.msra.mxu0 0.0
        %2215 = vmatprep.subr.mxu0 0.0
        %2216 = vmatpush1.xpose.msra.mxu0 0.0
        %2217 = vmatprep.subr.mxu0 0.0
        %2218 = vmatpush1.xpose.msra.mxu0 0.0
        %2219 = vmatprep.subr.mxu0 0.0
        %2220 = vmatpush1.xpose.msra.mxu0 0.0
        %2221 = vmatprep.subr.mxu0 0.0
        %2222 = vmatpush1.xpose.msra.mxu0 0.0
        %2223 = vmatprep.subr.mxu0 0.0
        %2224 = vmatpush1.xpose.msra.mxu0 0.0
        %2225 = vmatprep.subr.mxu0 0.0
        %2226 = vmatpush1.xpose.msra.mxu0 0.0
        %2227 = vmatprep.subr.mxu0 0.0
        %2228 = vmatpush1.xpose.msra.mxu0 0.0
        %2229 = vmatprep.subr.mxu0 0.0
        %2230 = vmatpush1.xpose.msra.mxu0 0.0
        %2231 = vmatprep.subr.mxu0 0.0
        %2232 = vmatpush1.xpose.msra.mxu0 0.0
        %2233 = vmatprep.subr.mxu0 0.0
        %2234 = vmatpush1.xpose.msra.mxu0 0.0
        %2235 = vmatprep.subr.mxu0 0.0
        %2236 = vmatpush1.xpose.msra.mxu0 0.0
        %2237 = vmatprep.subr.mxu0 0.0
        %2238 = vmatpush1.xpose.msra.mxu0 0.0
        %2239 = vmatprep.subr.mxu0 0.0
        %2240 = vmatpush1.xpose.msra.mxu0 0.0
        %2241 = vmatprep.subr.mxu0 0.0
        %2242 = vmatpush1.xpose.msra.mxu0 0.0
        %2243 = vmatprep.subr.mxu0 0.0
        %2244 = vmatpush1.xpose.msra.mxu0 0.0
        %2245 = vmatprep.subr.mxu0 0.0
        %2246 = vmatpush1.xpose.msra.mxu0 0.0
        %2247 = vmatprep.subr.mxu0 0.0
        %2248 = vmatpush1.xpose.msra.mxu0 0.0
        %2249 = vmatprep.subr.mxu0 0.0
        %2250 = vmatpush1.xpose.msra.mxu0 0.0
        %2251 = vmatprep.subr.mxu0 0.0
        %2252 = vmatpush1.xpose.msra.mxu0 0.0
        %2253 = vmatprep.mubr.f32.mxu0 0.0
        %2254 = vmatmul.mubr.f32.gmra.mrb[0].mxu0 %v2185
        %v2255 = vpop.f32.mrb[0].mxu0
        %v2256 = vadd.f32 0.0, %v2255
        %v2257 = vpop.f32.mrb[0].mxu0
        %2258 = vmatprep.mubr.f32.mxu0 0.0
        %2259 = vmatmul.mubr.f32.gmra.mrb[0].mxu0 %v2186
        %v2260 = vpop.f32.mrb[0].mxu0
        %v2261 = vadd.f32 0.0, %v2260
        %v2262 = vpop.f32.mrb[0].mxu0
        %2263 = vdwg.mxu0
        %2264 = vmatprep.subr.mxu0 0.0
        %2265 = vmatpush1.xpose.msra.mxu0 %v973
        %2266 = vmatprep.subr.mxu0 0.0
        %2267 = vmatpush1.xpose.msra.mxu0 %v977
        %2268 = vmatprep.subr.mxu0 0.0
        %2269 = vmatpush1.xpose.msra.mxu0 0.0
        %2270 = vmatprep.subr.mxu0 0.0
        %2271 = vmatpush1.xpose.msra.mxu0 0.0
        %2272 = vmatprep.subr.mxu0 0.0
        %2273 = vmatpush1.xpose.msra.mxu0 0.0
        %2274 = vmatprep.subr.mxu0 0.0
        %2275 = vmatpush1.xpose.msra.mxu0 0.0
        %2276 = vmatprep.subr.mxu0 0.0
        %2277 = vmatpush1.xpose.msra.mxu0 0.0
        %2278 = vmatprep.subr.mxu0 0.0
        %2279 = vmatpush1.xpose.msra.mxu0 0.0
        %2280 = vmatprep.subr.mxu0 0.0
        %2281 = vmatpush1.xpose.msra.mxu0 0.0
        %2282 = vmatprep.subr.mxu0 0.0
        %2283 = vmatpush1.xpose.msra.mxu0 0.0
        %2284 = vmatprep.subr.mxu0 0.0
        %2285 = vmatpush1.xpose.msra.mxu0 0.0
        %2286 = vmatprep.subr.mxu0 0.0
        %2287 = vmatpush1.xpose.msra.mxu0 0.0
        %2288 = vmatprep.subr.mxu0 0.0
        %2289 = vmatpush1.xpose.msra.mxu0 0.0
        %2290 = vmatprep.subr.mxu0 0.0
        %2291 = vmatpush1.xpose.msra.mxu0 0.0
        %2292 = vmatprep.subr.mxu0 0.0
        %2293 = vmatpush1.xpose.msra.mxu0 0.0
        %2294 = vmatprep.subr.mxu0 0.0
        %2295 = vmatpush1.xpose.msra.mxu0 0.0
        %2296 = vmatprep.subr.mxu0 0.0
        %2297 = vmatpush1.xpose.msra.mxu0 0.0
        %2298 = vmatprep.subr.mxu0 0.0
        %2299 = vmatpush1.xpose.msra.mxu0 0.0
        %2300 = vmatprep.subr.mxu0 0.0
        %2301 = vmatpush1.xpose.msra.mxu0 0.0
        %2302 = vmatprep.subr.mxu0 0.0
        %2303 = vmatpush1.xpose.msra.mxu0 0.0
        %2304 = vmatprep.subr.mxu0 0.0
        %2305 = vmatpush1.xpose.msra.mxu0 0.0
        %2306 = vmatprep.subr.mxu0 0.0
        %2307 = vmatpush1.xpose.msra.mxu0 0.0
        %2308 = vmatprep.subr.mxu0 0.0
        %2309 = vmatpush1.xpose.msra.mxu0 0.0
        %2310 = vmatprep.subr.mxu0 0.0
        %2311 = vmatpush1.xpose.msra.mxu0 0.0
        %2312 = vmatprep.subr.mxu0 0.0
        %2313 = vmatpush1.xpose.msra.mxu0 0.0
        %2314 = vmatprep.subr.mxu0 0.0
        %2315 = vmatpush1.xpose.msra.mxu0 0.0
        %2316 = vmatprep.subr.mxu0 0.0
        %2317 = vmatpush1.xpose.msra.mxu0 0.0
        %2318 = vmatprep.subr.mxu0 0.0
        %2319 = vmatpush1.xpose.msra.mxu0 0.0
        %2320 = vmatprep.subr.mxu0 0.0
        %2321 = vmatpush1.xpose.msra.mxu0 0.0
        %2322 = vmatprep.subr.mxu0 0.0
        %2323 = vmatpush1.xpose.msra.mxu0 0.0
        %2324 = vmatprep.subr.mxu0 0.0
        %2325 = vmatpush1.xpose.msra.mxu0 0.0
        %2326 = vmatprep.subr.mxu0 0.0
        %2327 = vmatpush1.xpose.msra.mxu0 0.0
        %2328 = vmatprep.mubr.f32.mxu0 0.0
        %2329 = vmatmul.mubr.f32.gmra.mrb[0].mxu0 %v2187
        %v2330 = vpop.f32.mrb[0].mxu0
        %v2331 = vadd.f32 0.0, %v2330
        %v2332 = vpop.f32.mrb[0].mxu0
        %2333 = vmatprep.mubr.f32.mxu0 0.0
        %2334 = vmatmul.mubr.f32.gmra.mrb[0].mxu0 %v2188
        %v2335 = vpop.f32.mrb[0].mxu0
        %v2336 = vadd.f32 0.0, %v2335
        %v2337 = vpop.f32.mrb[0].mxu0
        %2338 = vdwg.mxu0
        %v2339 = vmul.f32 %v2256, 0.17677669
        %v2340 = vmul.f32 %v2261, 0.17677669
        %v2341 = vmul.f32 %v2331, 0.17677669
        %v2342 = vmul.f32 %v2336, 0.17677669
        %v2343 = vadd.f32 %v2339, %v1215
        %v2344 = vadd.f32 %v2340, %v1215
        %v2345 = vadd.f32 %v2341, %v1219
        %v2346 = vadd.f32 %v2342, %v1219
        %v2347 = vsel %vm1226, %v2343, -inf
        %2348 = vmax.xlane.f32.xlu0 %v2347
        %v2349 = vpop.xlane.xlu0 %2348
        %v2350 = vsel %vm1226, %v2344, -inf
        %2351 = vmax.xlane.f32.xlu0 %v2350
        %v2352 = vpop.xlane.xlu0 %2351
        %v2353 = vsel %vm1226, %v2345, -inf
        %2354 = vmax.xlane.f32.xlu0 %v2353
        %v2355 = vpop.xlane.xlu0 %2354
        %v2356 = vsel %vm1226, %v2346, -inf
        %2357 = vmax.xlane.f32.xlu0 %v2356
        %v2358 = vpop.xlane.xlu0 %2357
        %v2359 = vsub.f32 %v2343, %v2349
        %v2360 = vsub.f32 %v2344, %v2352
        %v2361 = vsub.f32 %v2345, %v2355
        %v2362 = vsub.f32 %v2346, %v2358
        %v2363 = vmul.f32 %v2359, 1.442695
        %v2364 = vpow.pop %v2363
        %v2365 = vmul.f32 %v2360, 1.442695
        %v2366 = vpow.pop %v2365
        %v2367 = vmul.f32 %v2361, 1.442695
        %v2368 = vpow.pop %v2367
        %v2369 = vmul.f32 %v2362, 1.442695
        %v2370 = vpow.pop %v2369
        %v2371 = vsel %vm1226, %v2364, 0.0
        %2372 = vadd.xlane.f32.xlu0 %v2371
        %v2373 = vpop.xlane.xlu0 %2372
        %v2374 = vsel %vm1226, %v2366, 0.0
        %2375 = vadd.xlane.f32.xlu0 %v2374
        %v2376 = vpop.xlane.xlu0 %2375
        %v2377 = vsel %vm1226, %v2368, 0.0
        %2378 = vadd.xlane.f32.xlu0 %v2377
        %v2379 = vpop.xlane.xlu0 %2378
        %v2380 = vsel %vm1226, %v2370, 0.0
        %2381 = vadd.xlane.f32.xlu0 %v2380
        %v2382 = vpop.xlane.xlu0 %2381
        %v2383 = vrcp.pop %v2373
        %v2384 = vrcp.pop %v2376
        %v2385 = vrcp.pop %v2379
        %v2386 = vrcp.pop %v2382
        %v2387 = vmul.f32 %v2364, %v2383
        %v2388 = vmul.f32 %v2366, %v2384
        %v2389 = vmul.f32 %v2368, %v2385
        %v2390 = vmul.f32 %v2370, %v2386
        %v2391 = vmul.f32 %v1014, %v1051
        %v2392 = vmul.f32 %v1017, %v1051
        %v2393 = vmul.f32 %v1022, %v1051
        %v2394 = vmul.f32 %v1025, %v1051
        %v2396 = vsel %vm1226, %v2387, 0
        %v2399 = vsel %vm1226, %v2388, 0
        %2401 = vmatprep.subr.mxu0 0.0
        %2402 = vmatpush1.msra.mxu0 %v2391
        %2403 = vmatprep.subr.mxu0 0.0
        %2404 = vmatpush1.msra.mxu0 %v2392
        %2405 = vmatprep.subr.mxu0 0.0
        %2406 = vmatpush1.msra.mxu0 0.0
        %2407 = vmatprep.subr.mxu0 0.0
        %2408 = vmatpush1.msra.mxu0 0.0
        %2409 = vmatprep.subr.mxu0 0.0
        %2410 = vmatpush1.msra.mxu0 0.0
        %2411 = vmatprep.subr.mxu0 0.0
        %2412 = vmatpush1.msra.mxu0 0.0
        %2413 = vmatprep.subr.mxu0 0.0
        %2414 = vmatpush1.msra.mxu0 0.0
        %2415 = vmatprep.subr.mxu0 0.0
        %2416 = vmatpush1.msra.mxu0 0.0
        %2417 = vmatprep.subr.mxu0 0.0
        %2418 = vmatpush1.msra.mxu0 0.0
        %2419 = vmatprep.subr.mxu0 0.0
        %2420 = vmatpush1.msra.mxu0 0.0
        %2421 = vmatprep.subr.mxu0 0.0
        %2422 = vmatpush1.msra.mxu0 0.0
        %2423 = vmatprep.subr.mxu0 0.0
        %2424 = vmatpush1.msra.mxu0 0.0
        %2425 = vmatprep.subr.mxu0 0.0
        %2426 = vmatpush1.msra.mxu0 0.0
        %2427 = vmatprep.subr.mxu0 0.0
        %2428 = vmatpush1.msra.mxu0 0.0
        %2429 = vmatprep.subr.mxu0 0.0
        %2430 = vmatpush1.msra.mxu0 0.0
        %2431 = vmatprep.subr.mxu0 0.0
        %2432 = vmatpush1.msra.mxu0 0.0
        %2433 = vmatprep.subr.mxu0 0.0
        %2434 = vmatpush1.msra.mxu0 0.0
        %2435 = vmatprep.subr.mxu0 0.0
        %2436 = vmatpush1.msra.mxu0 0.0
        %2437 = vmatprep.subr.mxu0 0.0
        %2438 = vmatpush1.msra.mxu0 0.0
        %2439 = vmatprep.subr.mxu0 0.0
        %2440 = vmatpush1.msra.mxu0 0.0
        %2441 = vmatprep.subr.mxu0 0.0
        %2442 = vmatpush1.msra.mxu0 0.0
        %2443 = vmatprep.subr.mxu0 0.0
        %2444 = vmatpush1.msra.mxu0 0.0
        %2445 = vmatprep.subr.mxu0 0.0
        %2446 = vmatpush1.msra.mxu0 0.0
        %2447 = vmatprep.subr.mxu0 0.0
        %2448 = vmatpush1.msra.mxu0 0.0
        %2449 = vmatprep.subr.mxu0 0.0
        %2450 = vmatpush1.msra.mxu0 0.0
        %2451 = vmatprep.subr.mxu0 0.0
        %2452 = vmatpush1.msra.mxu0 0.0
        %2453 = vmatprep.subr.mxu0 0.0
        %2454 = vmatpush1.msra.mxu0 0.0
        %2455 = vmatprep.subr.mxu0 0.0
        %2456 = vmatpush1.msra.mxu0 0.0
        %2457 = vmatprep.subr.mxu0 0.0
        %2458 = vmatpush1.msra.mxu0 0.0
        %2459 = vmatprep.subr.mxu0 0.0
        %2460 = vmatpush1.msra.mxu0 0.0
        %2461 = vmatprep.subr.mxu0 0.0
        %2462 = vmatpush1.msra.mxu0 0.0
        %2463 = vmatprep.subr.mxu0 0.0
        %2464 = vmatpush1.msra.mxu0 0.0
        %2465 = vmatprep.mubr.f32.mxu0 0.0
        %2466 = vmatmul.mubr.f32.gmra.mrb[0].mxu0 %v2396
        %v2467 = vpop.f32.mrb[0].mxu0
        %v2468 = vadd.f32 0.0, %v2467
        %v2469 = vpop.f32.mrb[0].mxu0
        %2470 = vmatprep.mubr.f32.mxu0 0.0
        %2471 = vmatmul.mubr.f32.gmra.mrb[0].mxu0 %v2399
        %v2472 = vpop.f32.mrb[0].mxu0
        %v2473 = vadd.f32 0.0, %v2472
        %v2474 = vpop.f32.mrb[0].mxu0
        %2475 = vdwg.mxu0
        %v2477 = vsel %vm1226, %v2389, 0
        %v2480 = vsel %vm1226, %v2390, 0
        %2482 = vmatprep.subr.mxu0 0.0
        %2483 = vmatpush1.msra.mxu0 %v2393
        %2484 = vmatprep.subr.mxu0 0.0
        %2485 = vmatpush1.msra.mxu0 %v2394
        %2486 = vmatprep.subr.mxu0 0.0
        %2487 = vmatpush1.msra.mxu0 0.0
        %2488 = vmatprep.subr.mxu0 0.0
        %2489 = vmatpush1.msra.mxu0 0.0
        %2490 = vmatprep.subr.mxu0 0.0
        %2491 = vmatpush1.msra.mxu0 0.0
        %2492 = vmatprep.subr.mxu0 0.0
        %2493 = vmatpush1.msra.mxu0 0.0
        %2494 = vmatprep.subr.mxu0 0.0
        %2495 = vmatpush1.msra.mxu0 0.0
        %2496 = vmatprep.subr.mxu0 0.0
        %2497 = vmatpush1.msra.mxu0 0.0
        %2498 = vmatprep.subr.mxu0 0.0
        %2499 = vmatpush1.msra.mxu0 0.0
        %2500 = vmatprep.subr.mxu0 0.0
        %2501 = vmatpush1.msra.mxu0 0.0
        %2502 = vmatprep.subr.mxu0 0.0
        %2503 = vmatpush1.msra.mxu0 0.0
        %2504 = vmatprep.subr.mxu0 0.0
        %2505 = vmatpush1.msra.mxu0 0.0
        %2506 = vmatprep.subr.mxu0 0.0
        %2507 = vmatpush1.msra.mxu0 0.0
        %2508 = vmatprep.subr.mxu0 0.0
        %2509 = vmatpush1.msra.mxu0 0.0
        %2510 = vmatprep.subr.mxu0 0.0
        %2511 = vmatpush1.msra.mxu0 0.0
        %2512 = vmatprep.subr.mxu0 0.0
        %2513 = vmatpush1.msra.mxu0 0.0
        %2514 = vmatprep.subr.mxu0 0.0
        %2515 = vmatpush1.msra.mxu0 0.0
        %2516 = vmatprep.subr.mxu0 0.0
        %2517 = vmatpush1.msra.mxu0 0.0
        %2518 = vmatprep.subr.mxu0 0.0
        %2519 = vmatpush1.msra.mxu0 0.0
        %2520 = vmatprep.subr.mxu0 0.0
        %2521 = vmatpush1.msra.mxu0 0.0
        %2522 = vmatprep.subr.mxu0 0.0
        %2523 = vmatpush1.msra.mxu0 0.0
        %2524 = vmatprep.subr.mxu0 0.0
        %2525 = vmatpush1.msra.mxu0 0.0
        %2526 = vmatprep.subr.mxu0 0.0
        %2527 = vmatpush1.msra.mxu0 0.0
        %2528 = vmatprep.subr.mxu0 0.0
        %2529 = vmatpush1.msra.mxu0 0.0
        %2530 = vmatprep.subr.mxu0 0.0
        %2531 = vmatpush1.msra.mxu0 0.0
        %2532 = vmatprep.subr.mxu0 0.0
        %2533 = vmatpush1.msra.mxu0 0.0
        %2534 = vmatprep.subr.mxu0 0.0
        %2535 = vmatpush1.msra.mxu0 0.0
        %2536 = vmatprep.subr.mxu0 0.0
        %2537 = vmatpush1.msra.mxu0 0.0
        %2538 = vmatprep.subr.mxu0 0.0
        %2539 = vmatpush1.msra.mxu0 0.0
        %2540 = vmatprep.subr.mxu0 0.0
        %2541 = vmatpush1.msra.mxu0 0.0
        %2542 = vmatprep.subr.mxu0 0.0
        %2543 = vmatpush1.msra.mxu0 0.0
        %2544 = vmatprep.subr.mxu0 0.0
        %2545 = vmatpush1.msra.mxu0 0.0
        %2546 = vmatprep.mubr.f32.mxu0 0.0
        %2547 = vmatmul.mubr.f32.gmra.mrb[0].mxu0 %v2477
        %v2548 = vpop.f32.mrb[0].mxu0
        %v2549 = vadd.f32 0.0, %v2548
        %v2550 = vpop.f32.mrb[0].mxu0
        %2551 = vmatprep.mubr.f32.mxu0 0.0
        %2552 = vmatmul.mubr.f32.gmra.mrb[0].mxu0 %v2480
        %v2553 = vpop.f32.mrb[0].mxu0
        %v2554 = vadd.f32 0.0, %v2553
        %v2555 = vpop.f32.mrb[0].mxu0
        %2556 = vdwg.mxu0
        %v2557 = vadd.f32 %v2181, %v2468
        %v2558 = vadd.f32 %v2182, %v2473
        %v2559 = vadd.f32 %v2183, %v2549
        %v2560 = vadd.f32 %v2184, %v2554
        %v2561 = vpack.c.bf16 %v2558, %v2557
        %v2562 = vpack.c.bf16 %v2560, %v2559
        %v2563 = vld [vmem:[%s605] sm:$0xf]
        %v2564 = vld [vmem:[%s605 + $0x4] sm:$0xf]
        %v2565 = vld [vmem:[%s605 + $0x8] sm:$0xf]
        %v2566 = vld [vmem:[%s605 + $0xc] sm:$0xf]
        %v2567 = vld [vmem:[%s605 + $0x10] sm:$0xf]
        %v2568 = vld [vmem:[%s605 + $0x14] sm:$0xf]
        %v2569 = vld [vmem:[%s605 + $0x18] sm:$0xf]
        %v2570 = vld [vmem:[%s605 + $0x1c] sm:$0xf]
        %v2571 = vld [vmem:[%s605 + $0x20] sm:$0xf]
        %v2572 = vld [vmem:[%s605 + $0x24] sm:$0xf]
        %v2573 = vld [vmem:[%s605 + $0x28] sm:$0xf]
        %v2574 = vld [vmem:[%s605 + $0x2c] sm:$0xf]
        %v2575 = vld [vmem:[%s605 + $0x30] sm:$0xf]
        %v2576 = vld [vmem:[%s605 + $0x34] sm:$0xf]
        %v2577 = vld [vmem:[%s605 + $0x38] sm:$0xf]
        %v2578 = vld [vmem:[%s605 + $0x3c] sm:$0xf]
        %v2579 = vld [vmem:[%s710] sm:$0x1]
        %v2581 = vlaneseq
        %v2582 = vshrl.u32 %v2581, 7
        %v2583 = vsub.s32 0, %v2582
        %v2584 = vrot.slane %v2579, %v2583
        %v2602 = vunpack.c.l.b16 %v2563
        %v2603 = vunpack.c.l.b16 %v2564
        %v2604 = vunpack.c.l.b16 %v2565
        %v2605 = vunpack.c.l.b16 %v2566
        %v2606 = vunpack.c.l.b16 %v2567
        %v2607 = vunpack.c.l.b16 %v2568
        %v2608 = vunpack.c.l.b16 %v2569
        %v2609 = vunpack.c.l.b16 %v2570
        %v2610 = vunpack.c.l.b16 %v2571
        %v2611 = vunpack.c.l.b16 %v2572
        %v2612 = vunpack.c.l.b16 %v2573
        %v2613 = vunpack.c.l.b16 %v2574
        %v2614 = vunpack.c.l.b16 %v2575
        %v2615 = vunpack.c.l.b16 %v2576
        %v2616 = vunpack.c.l.b16 %v2577
        %v2617 = vunpack.c.l.b16 %v2578
        %v2618 = vpack.c.b16 %v2603, %v2602
        %v2619 = vpack.c.b16 %v2605, %v2604
        %v2620 = vpack.c.b16 %v2607, %v2606
        %v2621 = vpack.c.b16 %v2609, %v2608
        %v2622 = vpack.c.b16 %v2611, %v2610
        %v2623 = vpack.c.b16 %v2613, %v2612
        %v2624 = vpack.c.b16 %v2615, %v2614
        %v2625 = vpack.c.b16 %v2617, %v2616
        %2634 = vmatprep.subr.bf16.mxu0 0
        %2635 = vmatpush1.bf16.msra.mxu0 %v2618
        %2636 = vmatprep.subr.bf16.mxu0 0
        %2637 = vmatpush1.bf16.msra.mxu0 %v2619
        %2638 = vmatprep.subr.bf16.mxu0 0
        %2639 = vmatpush1.bf16.msra.mxu0 %v2620
        %2640 = vmatprep.subr.bf16.mxu0 0
        %2641 = vmatpush1.bf16.msra.mxu0 %v2621
        %2642 = vmatprep.subr.bf16.mxu0 0
        %2643 = vmatpush1.bf16.msra.mxu0 %v2622
        %2644 = vmatprep.subr.bf16.mxu0 0
        %2645 = vmatpush1.bf16.msra.mxu0 %v2623
        %2646 = vmatprep.subr.bf16.mxu0 0
        %2647 = vmatpush1.bf16.msra.mxu0 %v2624
        %2648 = vmatprep.subr.bf16.mxu0 0
        %2649 = vmatpush1.bf16.msra.mxu0 %v2625
        %2650 = vmatprep.subr.bf16.mxu0 0
        %2651 = vmatpush1.bf16.msra.mxu0 0
        %2652 = vmatprep.subr.bf16.mxu0 0
        %2653 = vmatpush1.bf16.msra.mxu0 0
        %2654 = vmatprep.subr.bf16.mxu0 0
        %2655 = vmatpush1.bf16.msra.mxu0 0
        %2656 = vmatprep.subr.bf16.mxu0 0
        %2657 = vmatpush1.bf16.msra.mxu0 0
        %2658 = vmatprep.subr.bf16.mxu0 0
        %2659 = vmatpush1.bf16.msra.mxu0 0
        %2660 = vmatprep.subr.bf16.mxu0 0
        %2661 = vmatpush1.bf16.msra.mxu0 0
        %2662 = vmatprep.subr.bf16.mxu0 0
        %2663 = vmatpush1.bf16.msra.mxu0 0
        %2664 = vmatprep.subr.bf16.mxu0 0
        %2665 = vmatpush1.bf16.msra.mxu0 0
        %2666 = vmatprep.mubr.bf16.mxu0 0
        %2667 = vmatmul.mubr.bf16.gmra.mrb[0].mxu0 %v2561
        %v2668 = vpop.f32.mrb[0].mxu0
        %v2669 = vadd.f32 %v2584, %v2668
        %v2670 = vpop.f32.mrb[0].mxu0
        %v2671 = vpop.f32.mrb[0].mxu0
        %v2672 = vadd.f32 %v2584, %v2671
        %v2673 = vpop.f32.mrb[0].mxu0
        %2674 = vmatprep.mubr.bf16.mxu0 0
        %2675 = vmatmul.mubr.bf16.gmra.mrb[0].mxu0 %v2562
        %v2676 = vpop.f32.mrb[0].mxu0
        %v2677 = vadd.f32 %v2584, %v2676
        %v2678 = vpop.f32.mrb[0].mxu0
        %v2679 = vpop.f32.mrb[0].mxu0
        %v2680 = vadd.f32 %v2584, %v2679
        %v2681 = vpop.f32.mrb[0].mxu0
        %2682 = vdwg.mxu0
        %v2683 = vadd.f32 %v2669, %v743
        %v2684 = vadd.f32 %v2672, %v744
        %v2685 = vadd.f32 %v2677, %v745
        %v2686 = vadd.f32 %v2680, %v746
        %v2687 = vld [vmem:[%s713] sm:$0x1]
        %v2688 = vld [vmem:[%s716] sm:$0x1]
        %2689 = vadd.xlane.f32.xlu0 %v2683
        %v2690 = vpop.xlane.xlu0 %2689
        %2691 = vadd.xlane.f32.xlu0 %v2684
        %v2692 = vpop.xlane.xlu0 %2691
        %2693 = vadd.xlane.f32.xlu0 %v2685
        %v2694 = vpop.xlane.xlu0 %2693
        %2695 = vadd.xlane.f32.xlu0 %v2686
        %v2696 = vpop.xlane.xlu0 %2695
        %v2697 = vrcp.pop 128.0
        %v2698 = vmul.f32 %v2690, %v2697
        %v2699 = vmul.f32 %v2692, %v2697
        %v2700 = vmul.f32 %v2694, %v2697
        %v2701 = vmul.f32 %v2696, %v2697
        %v2702 = vsub.f32 %v2683, %v2698
        %v2703 = vsub.f32 %v2684, %v2699
        %v2704 = vsub.f32 %v2685, %v2700
        %v2705 = vsub.f32 %v2686, %v2701
        %v2706 = vmul.f32 %v2702, %v2702
        %v2707 = vmul.f32 %v2703, %v2703
        %v2708 = vmul.f32 %v2704, %v2704
        %v2709 = vmul.f32 %v2705, %v2705
        %2710 = vadd.xlane.f32.xlu0 %v2706
        %v2711 = vpop.xlane.xlu0 %2710
        %2712 = vadd.xlane.f32.xlu0 %v2707
        %v2713 = vpop.xlane.xlu0 %2712
        %2714 = vadd.xlane.f32.xlu0 %v2708
        %v2715 = vpop.xlane.xlu0 %2714
        %2716 = vadd.xlane.f32.xlu0 %v2709
        %v2717 = vpop.xlane.xlu0 %2716
        %v2718 = vmul.f32 %v2711, 0.007874016
        %v2719 = vmul.f32 %v2713, 0.007874016
        %v2720 = vmul.f32 %v2715, 0.007874016
        %v2721 = vmul.f32 %v2717, 0.007874016
        %v2723 = vlaneseq
        %v2724 = vshrl.u32 %v2723, 7
        %v2725 = vsub.s32 0, %v2724
        %v2726 = vrot.slane %v2687, %v2725
        %v2728 = vmul.f32 %v2726, %v2702
        %v2729 = vmul.f32 %v2726, %v2703
        %v2730 = vmul.f32 %v2726, %v2704
        %v2731 = vmul.f32 %v2726, %v2705
        %v2732 = vrsqrt.pop %v2718
        %v2733 = vmul.f32 %v2718, %v2732
        %vm2734 = vcmp.eq.f32.partialorder %v2718, inf
        %v2735 = vsel %vm2734, %v2718, %v2733
        %vm2736 = vcmp.eq.f32.partialorder %v2718, 0.0
        %v2737 = vand.u32 %v2718, 2147483648
        %v2738 = vsel %vm2736, %v2737, %v2735
        %v2739 = vrsqrt.pop %v2719
        %v2740 = vmul.f32 %v2719, %v2739
        %vm2741 = vcmp.eq.f32.partialorder %v2719, inf
        %v2742 = vsel %vm2741, %v2719, %v2740
        %vm2743 = vcmp.eq.f32.partialorder %v2719, 0.0
        %v2744 = vand.u32 %v2719, 2147483648
        %v2745 = vsel %vm2743, %v2744, %v2742
        %v2746 = vrsqrt.pop %v2720
        %v2747 = vmul.f32 %v2720, %v2746
        %vm2748 = vcmp.eq.f32.partialorder %v2720, inf
        %v2749 = vsel %vm2748, %v2720, %v2747
        %vm2750 = vcmp.eq.f32.partialorder %v2720, 0.0
        %v2751 = vand.u32 %v2720, 2147483648
        %v2752 = vsel %vm2750, %v2751, %v2749
        %v2753 = vrsqrt.pop %v2721
        %v2754 = vmul.f32 %v2721, %v2753
        %vm2755 = vcmp.eq.f32.partialorder %v2721, inf
        %v2756 = vsel %vm2755, %v2721, %v2754
        %vm2757 = vcmp.eq.f32.partialorder %v2721, 0.0
        %v2758 = vand.u32 %v2721, 2147483648
        %v2759 = vsel %vm2757, %v2758, %v2756
        %v2760 = vadd.f32 %v2738, 1e-06
        %v2761 = vadd.f32 %v2745, 1e-06
        %v2762 = vadd.f32 %v2752, 1e-06
        %v2763 = vadd.f32 %v2759, 1e-06
        %v2764 = vrcp.pop %v2760
        %v2765 = vmul.f32 %v2728, %v2764
        %v2766 = vrcp.pop %v2761
        %v2767 = vmul.f32 %v2729, %v2766
        %v2768 = vrcp.pop %v2762
        %v2769 = vmul.f32 %v2730, %v2768
        %v2770 = vrcp.pop %v2763
        %v2771 = vmul.f32 %v2731, %v2770
        %v2773 = vlaneseq
        %v2774 = vshrl.u32 %v2773, 7
        %v2775 = vsub.s32 0, %v2774
        %v2776 = vrot.slane %v2688, %v2775
        %v2778 = vadd.f32 %v2765, %v2776
        %v2779 = vadd.f32 %v2767, %v2776
        %v2780 = vadd.f32 %v2769, %v2776
        %v2781 = vadd.f32 %v2771, %v2776
        %v2782 = vpack.c.bf16 %v2779, %v2778
        %v2783 = vpack.c.bf16 %v2781, %v2780
        %v2784 = vld [vmem:[%s614] sm:$0xff]
        %v2785 = vld [vmem:[%s614 + $0x8] sm:$0xff]
        %v2786 = vld [vmem:[%s614 + $0x10] sm:$0xff]
        %v2787 = vld [vmem:[%s614 + $0x18] sm:$0xff]
        %v2788 = vld [vmem:[%s614 + $0x20] sm:$0xff]
        %v2789 = vld [vmem:[%s614 + $0x28] sm:$0xff]
        %v2790 = vld [vmem:[%s614 + $0x30] sm:$0xff]
        %v2791 = vld [vmem:[%s614 + $0x38] sm:$0xff]
        %v2792 = vld [vmem:[%s614 + $0x40] sm:$0xff]
        %v2793 = vld [vmem:[%s614 + $0x48] sm:$0xff]
        %v2794 = vld [vmem:[%s614 + $0x50] sm:$0xff]
        %v2795 = vld [vmem:[%s614 + $0x58] sm:$0xff]
        %v2796 = vld [vmem:[%s614 + $0x60] sm:$0xff]
        %v2797 = vld [vmem:[%s614 + $0x68] sm:$0xff]
        %v2798 = vld [vmem:[%s614 + $0x70] sm:$0xff]
        %v2799 = vld [vmem:[%s614 + $0x78] sm:$0xff]
        %v2800 = vld [vmem:[%s614 + $0x80] sm:$0xff]
        %v2801 = vld [vmem:[%s614 + $0x88] sm:$0xff]
        %v2802 = vld [vmem:[%s614 + $0x90] sm:$0xff]
        %v2803 = vld [vmem:[%s614 + $0x98] sm:$0xff]
        %v2804 = vld [vmem:[%s614 + $0xa0] sm:$0xff]
        %v2805 = vld [vmem:[%s614 + $0xa8] sm:$0xff]
        %v2806 = vld [vmem:[%s614 + $0xb0] sm:$0xff]
        %v2807 = vld [vmem:[%s614 + $0xb8] sm:$0xff]
        %v2808 = vld [vmem:[%s614 + $0xc0] sm:$0xff]
        %v2809 = vld [vmem:[%s614 + $0xc8] sm:$0xff]
        %v2810 = vld [vmem:[%s614 + $0xd0] sm:$0xff]
        %v2811 = vld [vmem:[%s614 + $0xd8] sm:$0xff]
        %v2812 = vld [vmem:[%s614 + $0xe0] sm:$0xff]
        %v2813 = vld [vmem:[%s614 + $0xe8] sm:$0xff]
        %v2814 = vld [vmem:[%s614 + $0xf0] sm:$0xff]
        %v2815 = vld [vmem:[%s614 + $0xf8] sm:$0xff]
        %v2816 = vld [vmem:[%s720] sm:$0xf]
        %v2818 = vlaneseq
        %v2819 = vshrl.u32 %v2818, 7
        %v2820 = vsub.s32 0, %v2819
        %v2821 = vrot.slane %v2816, %v2820
        %v2822 = vlaneseq
        %v2823 = vshrl.u32 %v2822, 7
        %v2824 = vsub.s32 1, %v2823
        %v2825 = vrot.slane %v2816, %v2824
        %v2826 = vlaneseq
        %v2827 = vshrl.u32 %v2826, 7
        %v2828 = vsub.s32 2, %v2827
        %v2829 = vrot.slane %v2816, %v2828
        %v2830 = vlaneseq
        %v2831 = vshrl.u32 %v2830, 7
        %v2832 = vsub.s32 3, %v2831
        %v2833 = vrot.slane %v2816, %v2832
        %v2870 = vunpack.c.l.b16 %v2784
        %v2871 = vunpack.c.h.b16 %v2784
        %v2872 = vunpack.c.l.b16 %v2785
        %v2873 = vunpack.c.h.b16 %v2785
        %v2874 = vunpack.c.l.b16 %v2786
        %v2875 = vunpack.c.h.b16 %v2786
        %v2876 = vunpack.c.l.b16 %v2787
        %v2877 = vunpack.c.h.b16 %v2787
        %v2878 = vunpack.c.l.b16 %v2788
        %v2879 = vunpack.c.h.b16 %v2788
        %v2880 = vunpack.c.l.b16 %v2789
        %v2881 = vunpack.c.h.b16 %v2789
        %v2882 = vunpack.c.l.b16 %v2790
        %v2883 = vunpack.c.h.b16 %v2790
        %v2884 = vunpack.c.l.b16 %v2791
        %v2885 = vunpack.c.h.b16 %v2791
        %v2886 = vunpack.c.l.b16 %v2792
        %v2887 = vunpack.c.h.b16 %v2792
        %v2888 = vunpack.c.l.b16 %v2793
        %v2889 = vunpack.c.h.b16 %v2793
        %v2890 = vunpack.c.l.b16 %v2794
        %v2891 = vunpack.c.h.b16 %v2794
        %v2892 = vunpack.c.l.b16 %v2795
        %v2893 = vunpack.c.h.b16 %v2795
        %v2894 = vunpack.c.l.b16 %v2796
        %v2895 = vunpack.c.h.b16 %v2796
        %v2896 = vunpack.c.l.b16 %v2797
        %v2897 = vunpack.c.h.b16 %v2797
        %v2898 = vunpack.c.l.b16 %v2798
        %v2899 = vunpack.c.h.b16 %v2798
        %v2900 = vunpack.c.l.b16 %v2799
        %v2901 = vunpack.c.h.b16 %v2799
        %v2902 = vunpack.c.l.b16 %v2800
        %v2903 = vunpack.c.h.b16 %v2800
        %v2904 = vunpack.c.l.b16 %v2801
        %v2905 = vunpack.c.h.b16 %v2801
        %v2906 = vunpack.c.l.b16 %v2802
        %v2907 = vunpack.c.h.b16 %v2802
        %v2908 = vunpack.c.l.b16 %v2803
        %v2909 = vunpack.c.h.b16 %v2803
        %v2910 = vunpack.c.l.b16 %v2804
        %v2911 = vunpack.c.h.b16 %v2804
        %v2912 = vunpack.c.l.b16 %v2805
        %v2913 = vunpack.c.h.b16 %v2805
        %v2914 = vunpack.c.l.b16 %v2806
        %v2915 = vunpack.c.h.b16 %v2806
        %v2916 = vunpack.c.l.b16 %v2807
        %v2917 = vunpack.c.h.b16 %v2807
        %v2918 = vunpack.c.l.b16 %v2808
        %v2919 = vunpack.c.h.b16 %v2808
        %v2920 = vunpack.c.l.b16 %v2809
        %v2921 = vunpack.c.h.b16 %v2809
        %v2922 = vunpack.c.l.b16 %v2810
        %v2923 = vunpack.c.h.b16 %v2810
        %v2924 = vunpack.c.l.b16 %v2811
        %v2925 = vunpack.c.h.b16 %v2811
        %v2926 = vunpack.c.l.b16 %v2812
        %v2927 = vunpack.c.h.b16 %v2812
        %v2928 = vunpack.c.l.b16 %v2813
        %v2929 = vunpack.c.h.b16 %v2813
        %v2930 = vunpack.c.l.b16 %v2814
        %v2931 = vunpack.c.h.b16 %v2814
        %v2932 = vunpack.c.l.b16 %v2815
        %v2933 = vunpack.c.h.b16 %v2815
        %v2934 = vpack.c.b16 %v2874, %v2870
        %v2935 = vpack.c.b16 %v2875, %v2871
        %v2936 = vpack.c.b16 %v2876, %v2872
        %v2937 = vpack.c.b16 %v2877, %v2873
        %v2938 = vpack.c.b16 %v2882, %v2878
        %v2939 = vpack.c.b16 %v2883, %v2879
        %v2940 = vpack.c.b16 %v2884, %v2880
        %v2941 = vpack.c.b16 %v2885, %v2881
        %v2942 = vpack.c.b16 %v2890, %v2886
        %v2943 = vpack.c.b16 %v2891, %v2887
        %v2944 = vpack.c.b16 %v2892, %v2888
        %v2945 = vpack.c.b16 %v2893, %v2889
        %v2946 = vpack.c.b16 %v2898, %v2894
        %v2947 = vpack.c.b16 %v2899, %v2895
        %v2948 = vpack.c.b16 %v2900, %v2896
        %v2949 = vpack.c.b16 %v2901, %v2897
        %v2950 = vpack.c.b16 %v2906, %v2902
        %v2951 = vpack.c.b16 %v2907, %v2903
        %v2952 = vpack.c.b16 %v2908, %v2904
        %v2953 = vpack.c.b16 %v2909, %v2905
        %v2954 = vpack.c.b16 %v2914, %v2910
        %v2955 = vpack.c.b16 %v2915, %v2911
        %v2956 = vpack.c.b16 %v2916, %v2912
        %v2957 = vpack.c.b16 %v2917, %v2913
        %v2958 = vpack.c.b16 %v2922, %v2918
        %v2959 = vpack.c.b16 %v2923, %v2919
        %v2960 = vpack.c.b16 %v2924, %v2920
        %v2961 = vpack.c.b16 %v2925, %v2921
        %v2962 = vpack.c.b16 %v2930, %v2926
        %v2963 = vpack.c.b16 %v2931, %v2927
        %v2964 = vpack.c.b16 %v2932, %v2928
        %v2965 = vpack.c.b16 %v2933, %v2929
        %2998 = vmatprep.subr.bf16.mxu0 %v2935
        %2999 = vmatpush1.bf16.msra.mxu0 %v2934
        %3000 = vmatprep.subr.bf16.mxu0 %v2939
        %3001 = vmatpush1.bf16.msra.mxu0 %v2938
        %3002 = vmatprep.subr.bf16.mxu0 %v2943
        %3003 = vmatpush1.bf16.msra.mxu0 %v2942
        %3004 = vmatprep.subr.bf16.mxu0 %v2947
        %3005 = vmatpush1.bf16.msra.mxu0 %v2946
        %3006 = vmatprep.subr.bf16.mxu0 %v2951
        %3007 = vmatpush1.bf16.msra.mxu0 %v2950
        %3008 = vmatprep.subr.bf16.mxu0 %v2955
        %3009 = vmatpush1.bf16.msra.mxu0 %v2954
        %3010 = vmatprep.subr.bf16.mxu0 %v2959
        %3011 = vmatpush1.bf16.msra.mxu0 %v2958
        %3012 = vmatprep.subr.bf16.mxu0 %v2963
        %3013 = vmatpush1.bf16.msra.mxu0 %v2962
        %3014 = vmatprep.subr.bf16.mxu0 0
        %3015 = vmatpush1.bf16.msra.mxu0 0
        %3016 = vmatprep.subr.bf16.mxu0 0
        %3017 = vmatpush1.bf16.msra.mxu0 0
        %3018 = vmatprep.subr.bf16.mxu0 0
        %3019 = vmatpush1.bf16.msra.mxu0 0
        %3020 = vmatprep.subr.bf16.mxu0 0
        %3021 = vmatpush1.bf16.msra.mxu0 0
        %3022 = vmatprep.subr.bf16.mxu0 0
        %3023 = vmatpush1.bf16.msra.mxu0 0
        %3024 = vmatprep.subr.bf16.mxu0 0
        %3025 = vmatpush1.bf16.msra.mxu0 0
        %3026 = vmatprep.subr.bf16.mxu0 0
        %3027 = vmatpush1.bf16.msra.mxu0 0
        %3028 = vmatprep.subr.bf16.mxu0 0
        %3029 = vmatpush1.bf16.msra.mxu0 0
        %3030 = vmatprep.mubr.bf16.mxu0 0
        %3031 = vmatmul.mubr.bf16.gmra.mrb[0].mxu0 %v2782
        %v3032 = vpop.f32.mrb[0].mxu0
        %v3033 = vadd.f32 %v2821, %v3032
        %v3034 = vpop.f32.mrb[0].mxu0
        %v3035 = vadd.f32 %v2825, %v3034
        %v3036 = vpop.f32.mrb[0].mxu0
        %v3037 = vadd.f32 %v2821, %v3036
        %v3038 = vpop.f32.mrb[0].mxu0
        %v3039 = vadd.f32 %v2825, %v3038
        %3040 = vmatprep.mubr.bf16.mxu0 0
        %3041 = vmatmul.mubr.bf16.gmra.mrb[0].mxu0 %v2783
        %v3042 = vpop.f32.mrb[0].mxu0
        %v3043 = vadd.f32 %v2821, %v3042
        %v3044 = vpop.f32.mrb[0].mxu0
        %v3045 = vadd.f32 %v2825, %v3044
        %v3046 = vpop.f32.mrb[0].mxu0
        %v3047 = vadd.f32 %v2821, %v3046
        %v3048 = vpop.f32.mrb[0].mxu0
        %v3049 = vadd.f32 %v2825, %v3048
        %3050 = vdwg.mxu0
        %3051 = vmatprep.subr.bf16.mxu0 %v2937
        %3052 = vmatpush1.bf16.msra.mxu0 %v2936
        %3053 = vmatprep.subr.bf16.mxu0 %v2941
        %3054 = vmatpush1.bf16.msra.mxu0 %v2940
        %3055 = vmatprep.subr.bf16.mxu0 %v2945
        %3056 = vmatpush1.bf16.msra.mxu0 %v2944
        %3057 = vmatprep.subr.bf16.mxu0 %v2949
        %3058 = vmatpush1.bf16.msra.mxu0 %v2948
        %3059 = vmatprep.subr.bf16.mxu0 %v2953
        %3060 = vmatpush1.bf16.msra.mxu0 %v2952
        %3061 = vmatprep.subr.bf16.mxu0 %v2957
        %3062 = vmatpush1.bf16.msra.mxu0 %v2956
        %3063 = vmatprep.subr.bf16.mxu0 %v2961
        %3064 = vmatpush1.bf16.msra.mxu0 %v2960
        %3065 = vmatprep.subr.bf16.mxu0 %v2965
        %3066 = vmatpush1.bf16.msra.mxu0 %v2964
        %3067 = vmatprep.subr.bf16.mxu0 0
        %3068 = vmatpush1.bf16.msra.mxu0 0
        %3069 = vmatprep.subr.bf16.mxu0 0
        %3070 = vmatpush1.bf16.msra.mxu0 0
        %3071 = vmatprep.subr.bf16.mxu0 0
        %3072 = vmatpush1.bf16.msra.mxu0 0
        %3073 = vmatprep.subr.bf16.mxu0 0
        %3074 = vmatpush1.bf16.msra.mxu0 0
        %3075 = vmatprep.subr.bf16.mxu0 0
        %3076 = vmatpush1.bf16.msra.mxu0 0
        %3077 = vmatprep.subr.bf16.mxu0 0
        %3078 = vmatpush1.bf16.msra.mxu0 0
        %3079 = vmatprep.subr.bf16.mxu0 0
        %3080 = vmatpush1.bf16.msra.mxu0 0
        %3081 = vmatprep.subr.bf16.mxu0 0
        %3082 = vmatpush1.bf16.msra.mxu0 0
        %3083 = vmatprep.mubr.bf16.mxu0 0
        %3084 = vmatmul.mubr.bf16.gmra.mrb[0].mxu0 %v2782
        %v3085 = vpop.f32.mrb[0].mxu0
        %v3086 = vadd.f32 %v2829, %v3085
        %v3087 = vpop.f32.mrb[0].mxu0
        %v3088 = vadd.f32 %v2833, %v3087
        %v3089 = vpop.f32.mrb[0].mxu0
        %v3090 = vadd.f32 %v2829, %v3089
        %v3091 = vpop.f32.mrb[0].mxu0
        %v3092 = vadd.f32 %v2833, %v3091
        %3093 = vmatprep.mubr.bf16.mxu0 0
        %3094 = vmatmul.mubr.bf16.gmra.mrb[0].mxu0 %v2783
        %v3095 = vpop.f32.mrb[0].mxu0
        %v3096 = vadd.f32 %v2829, %v3095
        %v3097 = vpop.f32.mrb[0].mxu0
        %v3098 = vadd.f32 %v2833, %v3097
        %v3099 = vpop.f32.mrb[0].mxu0
        %v3100 = vadd.f32 %v2829, %v3099
        %v3101 = vpop.f32.mrb[0].mxu0
        %v3102 = vadd.f32 %v2833, %v3101
        %3103 = vdwg.mxu0
        %v3104 = vmul.f32 %v3033, 0.5
        %v3105 = vmul.f32 %v3035, 0.5
        %v3106 = vmul.f32 %v3086, 0.5
        %v3107 = vmul.f32 %v3088, 0.5
        %v3108 = vmul.f32 %v3037, 0.5
        %v3109 = vmul.f32 %v3039, 0.5
        %v3110 = vmul.f32 %v3090, 0.5
        %v3111 = vmul.f32 %v3092, 0.5
        %v3112 = vmul.f32 %v3043, 0.5
        %v3113 = vmul.f32 %v3045, 0.5
        %v3114 = vmul.f32 %v3096, 0.5
        %v3115 = vmul.f32 %v3098, 0.5
        %v3116 = vmul.f32 %v3047, 0.5
        %v3117 = vmul.f32 %v3049, 0.5
        %v3118 = vmul.f32 %v3100, 0.5
        %v3119 = vmul.f32 %v3102, 0.5
        %v3120 = vmul.f32 %v3033, 0.70710677
        %v3121 = vmul.f32 %v3035, 0.70710677
        %v3122 = vmul.f32 %v3086, 0.70710677
        %v3123 = vmul.f32 %v3088, 0.70710677
        %v3124 = vmul.f32 %v3037, 0.70710677
        %v3125 = vmul.f32 %v3039, 0.70710677
        %v3126 = vmul.f32 %v3090, 0.70710677
        %v3127 = vmul.f32 %v3092, 0.70710677
        %v3128 = vmul.f32 %v3043, 0.70710677
        %v3129 = vmul.f32 %v3045, 0.70710677
        %v3130 = vmul.f32 %v3096, 0.70710677
        %v3131 = vmul.f32 %v3098, 0.70710677
        %v3132 = vmul.f32 %v3047, 0.70710677
        %v3133 = vmul.f32 %v3049, 0.70710677
        %v3134 = vmul.f32 %v3100, 0.70710677
        %v3135 = vmul.f32 %v3102, 0.70710677
        %v3136 = verf.f32.pop %v3120
        %v3137 = verf.f32.pop %v3121
        %v3138 = verf.f32.pop %v3122
        %v3139 = verf.f32.pop %v3123
        %v3140 = verf.f32.pop %v3124
        %v3141 = verf.f32.pop %v3125
        %v3142 = verf.f32.pop %v3126
        %v3143 = verf.f32.pop %v3127
        %v3144 = verf.f32.pop %v3128
        %v3145 = verf.f32.pop %v3129
        %v3146 = verf.f32.pop %v3130
        %v3147 = verf.f32.pop %v3131
        %v3148 = verf.f32.pop %v3132
        %v3149 = verf.f32.pop %v3133
        %v3150 = verf.f32.pop %v3134
        %v3151 = verf.f32.pop %v3135
        %v3152 = vadd.f32 %v3136, 1.0
        %v3153 = vadd.f32 %v3137, 1.0
        %v3154 = vadd.f32 %v3138, 1.0
        %v3155 = vadd.f32 %v3139, 1.0
        %v3156 = vadd.f32 %v3140, 1.0
        %v3157 = vadd.f32 %v3141, 1.0
        %v3158 = vadd.f32 %v3142, 1.0
        %v3159 = vadd.f32 %v3143, 1.0
        %v3160 = vadd.f32 %v3144, 1.0
        %v3161 = vadd.f32 %v3145, 1.0
        %v3162 = vadd.f32 %v3146, 1.0
        %v3163 = vadd.f32 %v3147, 1.0
        %v3164 = vadd.f32 %v3148, 1.0
        %v3165 = vadd.f32 %v3149, 1.0
        %v3166 = vadd.f32 %v3150, 1.0
        %v3167 = vadd.f32 %v3151, 1.0
        %v3168 = vmul.f32 %v3104, %v3152
        %v3169 = vmul.f32 %v3105, %v3153
        %v3170 = vmul.f32 %v3106, %v3154
        %v3171 = vmul.f32 %v3107, %v3155
        %v3172 = vmul.f32 %v3108, %v3156
        %v3173 = vmul.f32 %v3109, %v3157
        %v3174 = vmul.f32 %v3110, %v3158
        %v3175 = vmul.f32 %v3111, %v3159
        %v3176 = vmul.f32 %v3112, %v3160
        %v3177 = vmul.f32 %v3113, %v3161
        %v3178 = vmul.f32 %v3114, %v3162
        %v3179 = vmul.f32 %v3115, %v3163
        %v3180 = vmul.f32 %v3116, %v3164
        %v3181 = vmul.f32 %v3117, %v3165
        %v3182 = vmul.f32 %v3118, %v3166
        %v3183 = vmul.f32 %v3119, %v3167
        %v3184 = vpack.c.bf16 %v3172, %v3168
        %v3185 = vpack.c.bf16 %v3173, %v3169
        %v3186 = vpack.c.bf16 %v3174, %v3170
        %v3187 = vpack.c.bf16 %v3175, %v3171
        %v3188 = vpack.c.bf16 %v3180, %v3176
        %v3189 = vpack.c.bf16 %v3181, %v3177
        %v3190 = vpack.c.bf16 %v3182, %v3178
        %v3191 = vpack.c.bf16 %v3183, %v3179
        %v3192 = vld [vmem:[%s623] sm:$0xf]
        %v3193 = vld [vmem:[%s623 + $0x4] sm:$0xf]
        %v3194 = vld [vmem:[%s623 + $0x8] sm:$0xf]
        %v3195 = vld [vmem:[%s623 + $0xc] sm:$0xf]
        %v3196 = vld [vmem:[%s623 + $0x10] sm:$0xf]
        %v3197 = vld [vmem:[%s623 + $0x14] sm:$0xf]
        %v3198 = vld [vmem:[%s623 + $0x18] sm:$0xf]
        %v3199 = vld [vmem:[%s623 + $0x1c] sm:$0xf]
        %v3200 = vld [vmem:[%s623 + $0x20] sm:$0xf]
        %v3201 = vld [vmem:[%s623 + $0x24] sm:$0xf]
        %v3202 = vld [vmem:[%s623 + $0x28] sm:$0xf]
        %v3203 = vld [vmem:[%s623 + $0x2c] sm:$0xf]
        %v3204 = vld [vmem:[%s623 + $0x30] sm:$0xf]
        %v3205 = vld [vmem:[%s623 + $0x34] sm:$0xf]
        %v3206 = vld [vmem:[%s623 + $0x38] sm:$0xf]
        %v3207 = vld [vmem:[%s623 + $0x3c] sm:$0xf]
        %v3208 = vld [vmem:[%s623 + $0x40] sm:$0xf]
        %v3209 = vld [vmem:[%s623 + $0x44] sm:$0xf]
        %v3210 = vld [vmem:[%s623 + $0x48] sm:$0xf]
        %v3211 = vld [vmem:[%s623 + $0x4c] sm:$0xf]
        %v3212 = vld [vmem:[%s623 + $0x50] sm:$0xf]
        %v3213 = vld [vmem:[%s623 + $0x54] sm:$0xf]
        %v3214 = vld [vmem:[%s623 + $0x58] sm:$0xf]
        %v3215 = vld [vmem:[%s623 + $0x5c] sm:$0xf]
        %v3216 = vld [vmem:[%s623 + $0x60] sm:$0xf]
        %v3217 = vld [vmem:[%s623 + $0x64] sm:$0xf]
        %v3218 = vld [vmem:[%s623 + $0x68] sm:$0xf]
        %v3219 = vld [vmem:[%s623 + $0x6c] sm:$0xf]
        %v3220 = vld [vmem:[%s623 + $0x70] sm:$0xf]
        %v3221 = vld [vmem:[%s623 + $0x74] sm:$0xf]
        %v3222 = vld [vmem:[%s623 + $0x78] sm:$0xf]
        %v3223 = vld [vmem:[%s623 + $0x7c] sm:$0xf]
        %v3224 = vld [vmem:[%s623 + $0x80] sm:$0xf]
        %v3225 = vld [vmem:[%s623 + $0x84] sm:$0xf]
        %v3226 = vld [vmem:[%s623 + $0x88] sm:$0xf]
        %v3227 = vld [vmem:[%s623 + $0x8c] sm:$0xf]
        %v3228 = vld [vmem:[%s623 + $0x90] sm:$0xf]
        %v3229 = vld [vmem:[%s623 + $0x94] sm:$0xf]
        %v3230 = vld [vmem:[%s623 + $0x98] sm:$0xf]
        %v3231 = vld [vmem:[%s623 + $0x9c] sm:$0xf]
        %v3232 = vld [vmem:[%s623 + $0xa0] sm:$0xf]
        %v3233 = vld [vmem:[%s623 + $0xa4] sm:$0xf]
        %v3234 = vld [vmem:[%s623 + $0xa8] sm:$0xf]
        %v3235 = vld [vmem:[%s623 + $0xac] sm:$0xf]
        %v3236 = vld [vmem:[%s623 + $0xb0] sm:$0xf]
        %v3237 = vld [vmem:[%s623 + $0xb4] sm:$0xf]
        %v3238 = vld [vmem:[%s623 + $0xb8] sm:$0xf]
        %v3239 = vld [vmem:[%s623 + $0xbc] sm:$0xf]
        %v3240 = vld [vmem:[%s623 + $0xc0] sm:$0xf]
        %v3241 = vld [vmem:[%s623 + $0xc4] sm:$0xf]
        %v3242 = vld [vmem:[%s623 + $0xc8] sm:$0xf]
        %v3243 = vld [vmem:[%s623 + $0xcc] sm:$0xf]
        %v3244 = vld [vmem:[%s623 + $0xd0] sm:$0xf]
        %v3245 = vld [vmem:[%s623 + $0xd4] sm:$0xf]
        %v3246 = vld [vmem:[%s623 + $0xd8] sm:$0xf]
        %v3247 = vld [vmem:[%s623 + $0xdc] sm:$0xf]
        %v3248 = vld [vmem:[%s623 + $0xe0] sm:$0xf]
        %v3249 = vld [vmem:[%s623 + $0xe4] sm:$0xf]
        %v3250 = vld [vmem:[%s623 + $0xe8] sm:$0xf]
        %v3251 = vld [vmem:[%s623 + $0xec] sm:$0xf]
        %v3252 = vld [vmem:[%s623 + $0xf0] sm:$0xf]
        %v3253 = vld [vmem:[%s623 + $0xf4] sm:$0xf]
        %v3254 = vld [vmem:[%s623 + $0xf8] sm:$0xf]
        %v3255 = vld [vmem:[%s623 + $0xfc] sm:$0xf]
        %v3256 = vld [vmem:[%s723] sm:$0x1]
        %v3258 = vlaneseq
        %v3259 = vshrl.u32 %v3258, 7
        %v3260 = vsub.s32 0, %v3259
        %v3261 = vrot.slane %v3256, %v3260
        %v3327 = vunpack.c.l.b16 %v3192
        %v3328 = vunpack.c.l.b16 %v3193
        %v3329 = vunpack.c.l.b16 %v3194
        %v3330 = vunpack.c.l.b16 %v3195
        %v3331 = vunpack.c.l.b16 %v3196
        %v3332 = vunpack.c.l.b16 %v3197
        %v3333 = vunpack.c.l.b16 %v3198
        %v3334 = vunpack.c.l.b16 %v3199
        %v3335 = vunpack.c.l.b16 %v3200
        %v3336 = vunpack.c.l.b16 %v3201
        %v3337 = vunpack.c.l.b16 %v3202
        %v3338 = vunpack.c.l.b16 %v3203
        %v3339 = vunpack.c.l.b16 %v3204
        %v3340 = vunpack.c.l.b16 %v3205
        %v3341 = vunpack.c.l.b16 %v3206
        %v3342 = vunpack.c.l.b16 %v3207
        %v3343 = vunpack.c.l.b16 %v3208
        %v3344 = vunpack.c.l.b16 %v3209
        %v3345 = vunpack.c.l.b16 %v3210
        %v3346 = vunpack.c.l.b16 %v3211
        %v3347 = vunpack.c.l.b16 %v3212
        %v3348 = vunpack.c.l.b16 %v3213
        %v3349 = vunpack.c.l.b16 %v3214
        %v3350 = vunpack.c.l.b16 %v3215
        %v3351 = vunpack.c.l.b16 %v3216
        %v3352 = vunpack.c.l.b16 %v3217
        %v3353 = vunpack.c.l.b16 %v3218
        %v3354 = vunpack.c.l.b16 %v3219
        %v3355 = vunpack.c.l.b16 %v3220
        %v3356 = vunpack.c.l.b16 %v3221
        %v3357 = vunpack.c.l.b16 %v3222
        %v3358 = vunpack.c.l.b16 %v3223
        %v3359 = vunpack.c.l.b16 %v3224
        %v3360 = vunpack.c.l.b16 %v3225
        %v3361 = vunpack.c.l.b16 %v3226
        %v3362 = vunpack.c.l.b16 %v3227
        %v3363 = vunpack.c.l.b16 %v3228
        %v3364 = vunpack.c.l.b16 %v3229
        %v3365 = vunpack.c.l.b16 %v3230
        %v3366 = vunpack.c.l.b16 %v3231
        %v3367 = vunpack.c.l.b16 %v3232
        %v3368 = vunpack.c.l.b16 %v3233
        %v3369 = vunpack.c.l.b16 %v3234
        %v3370 = vunpack.c.l.b16 %v3235
        %v3371 = vunpack.c.l.b16 %v3236
        %v3372 = vunpack.c.l.b16 %v3237
        %v3373 = vunpack.c.l.b16 %v3238
        %v3374 = vunpack.c.l.b16 %v3239
        %v3375 = vunpack.c.l.b16 %v3240
        %v3376 = vunpack.c.l.b16 %v3241
        %v3377 = vunpack.c.l.b16 %v3242
        %v3378 = vunpack.c.l.b16 %v3243
        %v3379 = vunpack.c.l.b16 %v3244
        %v3380 = vunpack.c.l.b16 %v3245
        %v3381 = vunpack.c.l.b16 %v3246
        %v3382 = vunpack.c.l.b16 %v3247
        %v3383 = vunpack.c.l.b16 %v3248
        %v3384 = vunpack.c.l.b16 %v3249
        %v3385 = vunpack.c.l.b16 %v3250
        %v3386 = vunpack.c.l.b16 %v3251
        %v3387 = vunpack.c.l.b16 %v3252
        %v3388 = vunpack.c.l.b16 %v3253
        %v3389 = vunpack.c.l.b16 %v3254
        %v3390 = vunpack.c.l.b16 %v3255
        %v3391 = vpack.c.b16 %v3328, %v3327
        %v3392 = vpack.c.b16 %v3330, %v3329
        %v3393 = vpack.c.b16 %v3332, %v3331
        %v3394 = vpack.c.b16 %v3334, %v3333
        %v3395 = vpack.c.b16 %v3336, %v3335
        %v3396 = vpack.c.b16 %v3338, %v3337
        %v3397 = vpack.c.b16 %v3340, %v3339
        %v3398 = vpack.c.b16 %v3342, %v3341
        %v3399 = vpack.c.b16 %v3344, %v3343
        %v3400 = vpack.c.b16 %v3346, %v3345
        %v3401 = vpack.c.b16 %v3348, %v3347
        %v3402 = vpack.c.b16 %v3350, %v3349
        %v3403 = vpack.c.b16 %v3352, %v3351
        %v3404 = vpack.c.b16 %v3354, %v3353
        %v3405 = vpack.c.b16 %v3356, %v3355
        %v3406 = vpack.c.b16 %v3358, %v3357
        %v3407 = vpack.c.b16 %v3360, %v3359
        %v3408 = vpack.c.b16 %v3362, %v3361
        %v3409 = vpack.c.b16 %v3364, %v3363
        %v3410 = vpack.c.b16 %v3366, %v3365
        %v3411 = vpack.c.b16 %v3368, %v3367
        %v3412 = vpack.c.b16 %v3370, %v3369
        %v3413 = vpack.c.b16 %v3372, %v3371
        %v3414 = vpack.c.b16 %v3374, %v3373
        %v3415 = vpack.c.b16 %v3376, %v3375
        %v3416 = vpack.c.b16 %v3378, %v3377
        %v3417 = vpack.c.b16 %v3380, %v3379
        %v3418 = vpack.c.b16 %v3382, %v3381
        %v3419 = vpack.c.b16 %v3384, %v3383
        %v3420 = vpack.c.b16 %v3386, %v3385
        %v3421 = vpack.c.b16 %v3388, %v3387
        %v3422 = vpack.c.b16 %v3390, %v3389
        %3455 = vmatprep.subr.bf16.mxu0 0
        %3456 = vmatpush1.bf16.msra.mxu0 %v3391
        %3457 = vmatprep.subr.bf16.mxu0 0
        %3458 = vmatpush1.bf16.msra.mxu0 %v3392
        %3459 = vmatprep.subr.bf16.mxu0 0
        %3460 = vmatpush1.bf16.msra.mxu0 %v3393
        %3461 = vmatprep.subr.bf16.mxu0 0
        %3462 = vmatpush1.bf16.msra.mxu0 %v3394
        %3463 = vmatprep.subr.bf16.mxu0 0
        %3464 = vmatpush1.bf16.msra.mxu0 %v3395
        %3465 = vmatprep.subr.bf16.mxu0 0
        %3466 = vmatpush1.bf16.msra.mxu0 %v3396
        %3467 = vmatprep.subr.bf16.mxu0 0
        %3468 = vmatpush1.bf16.msra.mxu0 %v3397
        %3469 = vmatprep.subr.bf16.mxu0 0
        %3470 = vmatpush1.bf16.msra.mxu0 %v3398
        %3471 = vmatprep.subr.bf16.mxu0 0
        %3472 = vmatpush1.bf16.msra.mxu0 %v3399
        %3473 = vmatprep.subr.bf16.mxu0 0
        %3474 = vmatpush1.bf16.msra.mxu0 %v3400
        %3475 = vmatprep.subr.bf16.mxu0 0
        %3476 = vmatpush1.bf16.msra.mxu0 %v3401
        %3477 = vmatprep.subr.bf16.mxu0 0
        %3478 = vmatpush1.bf16.msra.mxu0 %v3402
        %3479 = vmatprep.subr.bf16.mxu0 0
        %3480 = vmatpush1.bf16.msra.mxu0 %v3403
        %3481 = vmatprep.subr.bf16.mxu0 0
        %3482 = vmatpush1.bf16.msra.mxu0 %v3404
        %3483 = vmatprep.subr.bf16.mxu0 0
        %3484 = vmatpush1.bf16.msra.mxu0 %v3405
        %3485 = vmatprep.subr.bf16.mxu0 0
        %3486 = vmatpush1.bf16.msra.mxu0 %v3406
        %3487 = vmatprep.mubr.bf16.mxu0 %v3185
        %3488 = vmatmul.mubr.bf16.gmra.mrb[0].mxu0 %v3184
        %v3489 = vpop.f32.mrb[0].mxu0
        %v3490 = vadd.f32 %v3261, %v3489
        %v3491 = vpop.f32.mrb[0].mxu0
        %v3492 = vpop.f32.mrb[0].mxu0
        %v3493 = vadd.f32 %v3261, %v3492
        %v3494 = vpop.f32.mrb[0].mxu0
        %3495 = vmatprep.mubr.bf16.mxu0 %v3189
        %3496 = vmatmul.mubr.bf16.gmra.mrb[0].mxu0 %v3188
        %v3497 = vpop.f32.mrb[0].mxu0
        %v3498 = vadd.f32 %v3261, %v3497
        %v3499 = vpop.f32.mrb[0].mxu0
        %v3500 = vpop.f32.mrb[0].mxu0
        %v3501 = vadd.f32 %v3261, %v3500
        %v3502 = vpop.f32.mrb[0].mxu0
        %3503 = vdwg.mxu0
        %3504 = vmatprep.subr.bf16.mxu0 0
        %3505 = vmatpush1.bf16.msra.mxu0 %v3407
        %3506 = vmatprep.subr.bf16.mxu0 0
        %3507 = vmatpush1.bf16.msra.mxu0 %v3408
        %3508 = vmatprep.subr.bf16.mxu0 0
        %3509 = vmatpush1.bf16.msra.mxu0 %v3409
        %3510 = vmatprep.subr.bf16.mxu0 0
        %3511 = vmatpush1.bf16.msra.mxu0 %v3410
        %3512 = vmatprep.subr.bf16.mxu0 0
        %3513 = vmatpush1.bf16.msra.mxu0 %v3411
        %3514 = vmatprep.subr.bf16.mxu0 0
        %3515 = vmatpush1.bf16.msra.mxu0 %v3412
        %3516 = vmatprep.subr.bf16.mxu0 0
        %3517 = vmatpush1.bf16.msra.mxu0 %v3413
        %3518 = vmatprep.subr.bf16.mxu0 0
        %3519 = vmatpush1.bf16.msra.mxu0 %v3414
        %3520 = vmatprep.subr.bf16.mxu0 0
        %3521 = vmatpush1.bf16.msra.mxu0 %v3415
        %3522 = vmatprep.subr.bf16.mxu0 0
        %3523 = vmatpush1.bf16.msra.mxu0 %v3416
        %3524 = vmatprep.subr.bf16.mxu0 0
        %3525 = vmatpush1.bf16.msra.mxu0 %v3417
        %3526 = vmatprep.subr.bf16.mxu0 0
        %3527 = vmatpush1.bf16.msra.mxu0 %v3418
        %3528 = vmatprep.subr.bf16.mxu0 0
        %3529 = vmatpush1.bf16.msra.mxu0 %v3419
        %3530 = vmatprep.subr.bf16.mxu0 0
        %3531 = vmatpush1.bf16.msra.mxu0 %v3420
        %3532 = vmatprep.subr.bf16.mxu0 0
        %3533 = vmatpush1.bf16.msra.mxu0 %v3421
        %3534 = vmatprep.subr.bf16.mxu0 0
        %3535 = vmatpush1.bf16.msra.mxu0 %v3422
        %3536 = vmatprep.mubr.bf16.mxu0 %v3187
        %3537 = vmatmul.mubr.bf16.gmra.mrb[0].mxu0 %v3186
        %v3538 = vpop.f32.mrb[0].mxu0
        %v3539 = vadd.f32 %v3490, %v3538
        %v3540 = vpop.f32.mrb[0].mxu0
        %v3541 = vpop.f32.mrb[0].mxu0
        %v3542 = vadd.f32 %v3493, %v3541
        %v3543 = vpop.f32.mrb[0].mxu0
        %3544 = vmatprep.mubr.bf16.mxu0 %v3191
        %3545 = vmatmul.mubr.bf16.gmra.mrb[0].mxu0 %v3190
        %v3546 = vpop.f32.mrb[0].mxu0
        %v3547 = vadd.f32 %v3498, %v3546
        %v3548 = vpop.f32.mrb[0].mxu0
        %v3549 = vpop.f32.mrb[0].mxu0
        %v3550 = vadd.f32 %v3501, %v3549
        %v3551 = vpop.f32.mrb[0].mxu0
        %3552 = vdwg.mxu0
        %v3553 = vadd.f32 %v3539, %v2778
        %v3554 = vadd.f32 %v3542, %v2779
        %v3555 = vadd.f32 %v3547, %v2780
        %v3556 = vadd.f32 %v3550, %v2781
        %v3557 = vld [vmem:[%s726] sm:$0x1]
        %v3558 = vld [vmem:[%s729] sm:$0x1]
        %3559 = vadd.xlane.f32.xlu0 %v3553
        %v3560 = vpop.xlane.xlu0 %3559
        %3561 = vadd.xlane.f32.xlu0 %v3554
        %v3562 = vpop.xlane.xlu0 %3561
        %3563 = vadd.xlane.f32.xlu0 %v3555
        %v3564 = vpop.xlane.xlu0 %3563
        %3565 = vadd.xlane.f32.xlu0 %v3556
        %v3566 = vpop.xlane.xlu0 %3565
        %v3567 = vmul.f32 %v3560, %v2697
        %v3568 = vmul.f32 %v3562, %v2697
        %v3569 = vmul.f32 %v3564, %v2697
        %v3570 = vmul.f32 %v3566, %v2697
        %v3571 = vsub.f32 %v3553, %v3567
        %v3572 = vsub.f32 %v3554, %v3568
        %v3573 = vsub.f32 %v3555, %v3569
        %v3574 = vsub.f32 %v3556, %v3570
        %v3575 = vmul.f32 %v3571, %v3571
        %v3576 = vmul.f32 %v3572, %v3572
        %v3577 = vmul.f32 %v3573, %v3573
        %v3578 = vmul.f32 %v3574, %v3574
        %3579 = vadd.xlane.f32.xlu0 %v3575
        %v3580 = vpop.xlane.xlu0 %3579
        %3581 = vadd.xlane.f32.xlu0 %v3576
        %v3582 = vpop.xlane.xlu0 %3581
        %3583 = vadd.xlane.f32.xlu0 %v3577
        %v3584 = vpop.xlane.xlu0 %3583
        %3585 = vadd.xlane.f32.xlu0 %v3578
        %v3586 = vpop.xlane.xlu0 %3585
        %v3587 = vmul.f32 %v3580, 0.007874016
        %v3588 = vmul.f32 %v3582, 0.007874016
        %v3589 = vmul.f32 %v3584, 0.007874016
        %v3590 = vmul.f32 %v3586, 0.007874016
        %v3592 = vlaneseq
        %v3593 = vshrl.u32 %v3592, 7
        %v3594 = vsub.s32 0, %v3593
        %v3595 = vrot.slane %v3557, %v3594
        %v3597 = vmul.f32 %v3595, %v3571
        %v3598 = vmul.f32 %v3595, %v3572
        %v3599 = vmul.f32 %v3595, %v3573
        %v3600 = vmul.f32 %v3595, %v3574
        %v3601 = vrsqrt.pop %v3587
        %v3602 = vmul.f32 %v3587, %v3601
        %vm3603 = vcmp.eq.f32.partialorder %v3587, inf
        %v3604 = vsel %vm3603, %v3587, %v3602
        %vm3605 = vcmp.eq.f32.partialorder %v3587, 0.0
        %v3606 = vand.u32 %v3587, 2147483648
        %v3607 = vsel %vm3605, %v3606, %v3604
        %v3608 = vrsqrt.pop %v3588
        %v3609 = vmul.f32 %v3588, %v3608
        %vm3610 = vcmp.eq.f32.partialorder %v3588, inf
        %v3611 = vsel %vm3610, %v3588, %v3609
        %vm3612 = vcmp.eq.f32.partialorder %v3588, 0.0
        %v3613 = vand.u32 %v3588, 2147483648
        %v3614 = vsel %vm3612, %v3613, %v3611
        %v3615 = vrsqrt.pop %v3589
        %v3616 = vmul.f32 %v3589, %v3615
        %vm3617 = vcmp.eq.f32.partialorder %v3589, inf
        %v3618 = vsel %vm3617, %v3589, %v3616
        %vm3619 = vcmp.eq.f32.partialorder %v3589, 0.0
        %v3620 = vand.u32 %v3589, 2147483648
        %v3621 = vsel %vm3619, %v3620, %v3618
        %v3622 = vrsqrt.pop %v3590
        %v3623 = vmul.f32 %v3590, %v3622
        %vm3624 = vcmp.eq.f32.partialorder %v3590, inf
        %v3625 = vsel %vm3624, %v3590, %v3623
        %vm3626 = vcmp.eq.f32.partialorder %v3590, 0.0
        %v3627 = vand.u32 %v3590, 2147483648
        %v3628 = vsel %vm3626, %v3627, %v3625
        %v3629 = vadd.f32 %v3607, 1e-06
        %v3630 = vadd.f32 %v3614, 1e-06
        %v3631 = vadd.f32 %v3621, 1e-06
        %v3632 = vadd.f32 %v3628, 1e-06
        %v3633 = vrcp.pop %v3629
        %v3634 = vmul.f32 %v3597, %v3633
        %v3635 = vrcp.pop %v3630
        %v3636 = vmul.f32 %v3598, %v3635
        %v3637 = vrcp.pop %v3631
        %v3638 = vmul.f32 %v3599, %v3637
        %v3639 = vrcp.pop %v3632
        %v3640 = vmul.f32 %v3600, %v3639
        %v3642 = vlaneseq
        %v3643 = vshrl.u32 %v3642, 7
        %v3644 = vsub.s32 0, %v3643
        %v3645 = vrot.slane %v3558, %v3644
        %v3647 = vadd.f32 %v3634, %v3645
        %v3648 = vadd.f32 %v3636, %v3645
        %v3649 = vadd.f32 %v3638, %v3645
        %v3650 = vadd.f32 %v3640, %v3645
        %3651 = vst [vmem:[#allocation11] sm:$0xff] %v3647
        %3652 = vst [vmem:[#allocation11 + $0x8] sm:$0xff] %v3648
        %3653 = vst [vmem:[#allocation11 + $0x10] sm:$0xff] %v3649
        %3654 = vst [vmem:[#allocation11 + $0x18] sm:$0xff] %v3650
        // Predicated region
        $region105: #{tpu_custom_call.1} parent=75 // pred_check
          %p3655 = pneg %p395
        $region106: #{tpu_custom_call.1} parent=75 // pred_check_branch
          %3657 = sbr.rel (%p3655) target = $region108
        $region107: #{tpu_custom_call.1} parent=75 // pred_region
          %s3659 = ssub.s32 512, 512
          %3660 = vsyncadd [#allocation4], %s3659
          %s3661 = sshll.u32 [#allocation11], 4
          %s3662 = int_to_ptr.vmem [resolvable:$true] %s3661
          %3667 = dma.vmem_to_hbm [thread:$0]  %s3662, 512, %s14, [#allocation4], 128, 128, 8
        $region108: #{tpu_custom_call.1} parent=75 // pred_fallthru
          _
        // Predicated region
        $region109: #{tpu_custom_call.1} parent=75 // pred_check
          %p3668 = pneg %p395
        $region110: #{tpu_custom_call.1} parent=75 // pred_check_branch
          %3670 = sbr.rel (%p3668) target = $region112
        $region111: #{tpu_custom_call.1} parent=75 // pred_region
          %3671 = dma.done [#allocation4], 512
        $region112: #{tpu_custom_call.1} parent=75 // pred_fallthru
          _
      $region76: #{tpu_custom_call.1} parent=5 // pred_fallthru
        _
      %p3672 = scmp.le.s32.totalorder 2, %s23
      // Predicated region
      $region113: #{tpu_custom_call.1} parent=5 // pred_check
        %p3673 = pneg %p3672
      $region114: #{tpu_custom_call.1} parent=5 // pred_check_branch
        %3675 = sbr.rel (%p3673) target = $region116
      $region115: #{tpu_custom_call.1} parent=5 // pred_region
        %s3676 = ssub.s32 %s23, 2
      $region116: #{tpu_custom_call.1} parent=5 // pred_fallthru
        _
    $region6: #{tpu_custom_call.1} parent=1 // loop_footer
      %s27 = sadd.s32 1, %s23
    $region7: #{tpu_custom_call.1} parent=1 // loop_footer_branch
      %22 = sbr.rel target = $region3
    $region8: #{tpu_custom_call.1} parent=1 // loop_exit
      _
    %3677 = vsyncpa [#allocation3], 1
    %s3678 = scalar_lea.sflag [#allocation3], 1
    %3679 = vsyncpa %s3678, 1
    %3680 = vsyncpa [#allocation6], 1
    %3681 = vsyncpa [#allocation4], 1
    %s3682 = scalar_lea.sflag [#allocation4], 1
    %3683 = vsyncpa %s3682, 1

</llo_original>
